<compile_context>
chip_gen: v5e
topology: v5e:2x2
jax: 0.10.0
libtpu: 0.0.40
codegen_flags: <defaults>
</compile_context>

<pallas_src>
import functools

import jax
import jax.numpy as jnp
from jax import lax
from jax.experimental import pallas as pl
from jax.experimental.pallas import tpu as pltpu

LANE = 128                      # channel padding target (TPU lane width)
SUBLANE_BF16 = 16               # bf16 sublane tile: flat-M row width padded to this
TAIL_ROWS = 16                  # extra zero rows so every tap window stays in bounds
COMPUTE_DTYPE = jnp.bfloat16    # MXU operand / inter-conv activation dtype
BN_EPS = 1e-5                   # PyTorch BatchNorm2d default


def _round_up(n, m):
    return ((n + m - 1) // m) * m


# ------------------------------ Pallas kernel ------------------------------ #
def _conv_kernel(x_ref, w_ref, b_ref, *rest, col_groups, has_shortcut,
                 add_residual, apply_relu):
    """One batch element: out = maybe_relu(conv(x) + bn_bias [+ residual]).

    x_ref  : (M_in, Cin_pad)        flat polyphase-packed padded input (bf16)
    w_ref  : (T, Cin_pad, Cout_pad) BN-scale-folded per-tap weights (bf16)
    b_ref  : (1|2, Cout_pad)        folded BN bias (row 1 = shortcut bias), f32
    r_ref  : (M_out, Cout_pad)      optional residual, flat layout (bf16)
    o_ref  : (M_out, Cout_pad)      main output
    s_ref  : (M_out, Cout_pad)      optional fused 1x1-shortcut output (bf16)
    acc    : (M_out, Cout_pad)      f32 VMEM accumulator scratch
    xshift : (R*Wp, Cin_pad)        column-shifted slab scratch (one per b > 0)
    """
    idx = 0
    r_ref = None
    if add_residual:
        r_ref = rest[idx]; idx += 1
    o_ref = rest[idx]; idx += 1
    s_ref = None
    if has_shortcut:
        s_ref = rest[idx]; idx += 1
    acc_ref, xshift_ref = rest[idx], rest[idx + 1]

    m_out = acc_ref.shape[0]
    shift_len = xshift_ref.shape[0]

    first = True
    for b, taps in col_groups:              # outer: distinct W (sublane) shifts
        if b == 0:
            slab = x_ref                    # aligned -> tap slices are views
        else:
            # hoisted column shift: ONE materialized copy per distinct b
            xshift_ref[...] = x_ref[b:b + shift_len, :]
            slab = xshift_ref
        for w_idx, base, is_short in taps:  # inner: tile-aligned row offsets
            y = jnp.dot(slab[base:base + m_out, :], w_ref[w_idx],
                        preferred_element_type=jnp.float32)
            if is_short:                    # fused 1x1 projection (conv+BN, no ReLU)
                s_ref[...] = (y + b_ref[1:2, :]).astype(s_ref.dtype)
            elif first:                     # init accumulator from first tap
                acc_ref[...] = y
                first = False
            else:
                acc_ref[...] += y

    y = acc_ref[...] + b_ref[0:1, :]
    if add_residual:
        y = y + r_ref[...].astype(jnp.float32)
    if apply_relu:
        y = jnp.maximum(y, 0.0)
    o_ref[...] = y.astype(o_ref.dtype)


# ----------------------------- helpers / wrapper ---------------------------- #
def _fold_bn(w, bn, eps=BN_EPS):
    gamma, beta, mean, var = bn
    scale = gamma / jnp.sqrt(var + eps)
    return w * scale[:, None, None, None], beta - mean * scale


def _pack_weights(w, bn, cin_pad, cout_pad):
    """OIHW f32 weights + BN -> ((KH*KW, cin_pad, cout_pad) bf16, (cout_pad,) f32)."""
    w_f, bias = _fold_bn(w, bn)
    Cout, Cin, KH, KW = w.shape
    wt = jnp.transpose(w_f, (2, 3, 1, 0)).reshape(KH * KW, Cin, Cout)
    wt = jnp.pad(wt, ((0, 0), (0, cin_pad - Cin), (0, cout_pad - Cout)))
    bias_p = jnp.pad(bias, (0, cout_pad - Cout)).astype(jnp.float32)
    return wt.astype(COMPUTE_DTYPE), bias_p


def _pack_input(x_nhwc, stride, pad, Hq, Wp):
    """Zero-pad, polyphase-pack and flatten to (N, s*s*Hq*Wp + TAIL_ROWS, C)."""
    N, H, W, C = x_nhwc.shape
    xp = jnp.pad(x_nhwc, ((0, 0),
                          (pad, Hq * stride - H - pad),
                          (pad, Wp * stride - W - pad),
                          (0, 0)))
    if stride > 1:
        xp = xp.reshape(N, Hq, stride, Wp, stride, C).transpose(0, 2, 4, 1, 3, 5)
    xp = xp.reshape(N, stride * stride * Hq * Wp, C)
    return jnp.pad(xp, ((0, 0), (0, TAIL_ROWS), (0, 0)))


def _const_block_spec(shape):
    """Single-buffered BlockSpec for grid-invariant operands (weights / bias)."""
    index_map = lambda n, _r=len(shape): (0,) * _r
    try:
        return pl.BlockSpec(shape, index_map, pipeline_mode=pl.Buffered(1))
    except (AttributeError, TypeError):   # older Pallas: fall back to default
        return pl.BlockSpec(shape, index_map)


def _conv_pallas(x_flat, wt, bias, *, stride, Hq, Ho, Wp, KH, KW,
                 shortcut_tap=None, residual=None, apply_relu, out_dtype):
    N, M_in, cin_pad = x_flat.shape
    cout_pad = wt.shape[-1]
    M_out = Ho * Wp
    shift_len = stride * stride * Hq * Wp
    has_shortcut = shortcut_tap is not None
    add_residual = residual is not None

    # Static tap schedule grouped by column shift b = j // stride.
    groups = {}

    def _add(i, j, w_idx, is_short):
        ph = (i % stride) * stride + (j % stride)
        base = (ph * Hq + i // stride) * Wp
        groups.setdefault(j // stride, []).append((w_idx, base, is_short))

    for i in range(KH):
        for j in range(KW):
            _add(i, j, i * KW + j, False)
    if has_shortcut:                      # 1x1/stride tap == 3x3 tap (pad, pad)
        _add(shortcut_tap, shortcut_tap, KH * KW, True)
    col_groups = tuple(sorted((b, tuple(t)) for b, t in groups.items()))

    kernel = functools.partial(_conv_kernel, col_groups=col_groups,
                               has_shortcut=has_shortcut,
                               add_residual=add_residual, apply_relu=apply_relu)

    in_specs = [pl.BlockSpec((None, M_in, cin_pad), lambda n: (n, 0, 0)),
                _const_block_spec(tuple(wt.shape)),
                _const_block_spec(tuple(bias.shape))]
    args = [x_flat, wt, bias]
    if add_residual:
        in_specs.append(pl.BlockSpec((None, M_out, cout_pad), lambda n: (n, 0, 0)))
        args.append(residual)

    main_out = jax.ShapeDtypeStruct((N, M_out, cout_pad), out_dtype)
    if has_shortcut:
        out_shape = (main_out,
                     jax.ShapeDtypeStruct((N, M_out, cout_pad), COMPUTE_DTYPE))
        out_specs = (pl.BlockSpec((None, M_out, cout_pad), lambda n: (n, 0, 0)),
                     pl.BlockSpec((None, M_out, cout_pad), lambda n: (n, 0, 0)))
    else:
        out_shape = main_out
        out_specs = pl.BlockSpec((None, M_out, cout_pad), lambda n: (n, 0, 0))

    # Explicit VMEM budget (instead of a flat 32 MiB), capped for v7x's 64 MiB.
    out_bytes = M_out * cout_pad * jnp.dtype(out_dtype).itemsize
    need = (2 * M_in * cin_pad * 2                            # dbl-buffered x slab
            + wt.size * 2 + bias.size * 4                     # single-buffered consts
            + 2 * out_bytes
            + 2 * M_out * cout_pad * 2 * (int(has_shortcut) + int(add_residual))
            + M_out * cout_pad * 4                            # f32 accumulator
            + shift_len * cin_pad * 2)                        # column-shift scratch
    vmem_limit = int(min(max(need * 5 // 4 + (4 << 20), 16 << 20), 64 << 20))

    return pl.pallas_call(
        kernel,
        out_shape=out_shape,
        grid=(N,),
        in_specs=in_specs,
        out_specs=out_specs,
        scratch_shapes=[pltpu.VMEM((M_out, cout_pad), jnp.float32),
                        pltpu.VMEM((shift_len, cin_pad), COMPUTE_DTYPE)],
        compiler_params=pltpu.CompilerParams(
            dimension_semantics=("parallel",),
            vmem_limit_bytes=vmem_limit),
    )(*args)


# --------------------------- BasicBlock forward ---------------------------- #
def basic_block_forward(x_nchw, params, stride, downsample):
    N, Cin, H, W = x_nchw.shape
    Cout = params["w1"].shape[0]
    cin_pad = _round_up(Cin, LANE)
    cout_pad = _round_up(Cout, LANE)
    if not downsample:
        assert stride == 1 and Cin == Cout, (
            "identity shortcut requires stride == 1 and in_channel == out_channel")

    KH = KW = 3
    pad = 1
    Ho = (H + 2 * pad - KH) // stride + 1
    Wo = (W + 2 * pad - KW) // stride + 1
    Hq1 = -(-(H + 2 * pad) // stride)
    Wq1 = -(-(W + 2 * pad) // stride)
    Hq2, Wq2 = Ho + 2, Wo + 2
    Wp = _round_up(max(Wq1, Wq2), SUBLANE_BF16)   # shared flat row width

    # Entry: single NCHW -> NHWC transpose, lane-dense channel pad, bf16 cast.
    x = jnp.transpose(x_nchw, (0, 2, 3, 1))
    x = jnp.pad(x, ((0, 0), (0, 0), (0, 0), (0, cin_pad - Cin))).astype(COMPUTE_DTYPE)

    # conv3x3(stride)+BN+ReLU, with the 1x1 shortcut conv+BN fused in.
    w1, b1 = _pack_weights(params["w1"], params["bn1"], cin_pad, cout_pad)
    x1 = _pack_input(x, stride, pad, Hq1, Wp)
    if downsample:
        ws, bs = _pack_weights(params["ws"], params["bns"], cin_pad, cout_pad)
        wt = jnp.concatenate([w1, ws], axis=0)          # (10, cin_pad, cout_pad)
        bias = jnp.stack([b1, bs], axis=0)              # (2, cout_pad)
        out1, residual = _conv_pallas(
            x1, wt, bias, stride=stride, Hq=Hq1, Ho=Ho, Wp=Wp, KH=KH, KW=KW,
            shortcut_tap=pad, apply_relu=True, out_dtype=COMPUTE_DTYPE)
    else:
        out1 = _conv_pallas(
            x1, w1, b1[None, :], stride=stride, Hq=Hq1, Ho=Ho, Wp=Wp,
            KH=KH, KW=KW, apply_relu=True, out_dtype=COMPUTE_DTYPE)
        # Identity shortcut, re-laid-out to conv2's flat (Ho*Wp, C) layout.
        residual = jnp.pad(x, ((0, 0), (0, 0), (0, Wp - W), (0, 0)))
        residual = residual.reshape(N, H * Wp, cin_pad)

    # conv3x3(1)+BN, fused residual add + final ReLU, f32 output.
    a1 = out1.reshape(N, Ho, Wp, cout_pad)[:, :, :Wo, :]
    x2 = _pack_input(a1, 1, pad, Hq2, Wp)
    w2, b2 = _pack_weights(params["w2"], params["bn2"], cout_pad, cout_pad)
    out2 = _conv_pallas(
        x2, w2, b2[None, :], stride=1, Hq=Hq2, Ho=Ho, Wp=Wp, KH=KH, KW=KW,
        residual=residual, apply_relu=True, out_dtype=jnp.float32)

    # Exit: strip W/channel padding, single NHWC -> NCHW transpose.
    y = out2.reshape(N, Ho, Wp, cout_pad)[:, :, :Wo, :Cout]
    return jnp.transpose(y, (0, 3, 1, 2))


# --------------------------- reference (pure JAX) --------------------------- #
def _ref_conv_bn(x, w, bn, stride, pad, compute_dtype):
    w_f, bias = _fold_bn(w, bn)
    if compute_dtype is not None:
        x = x.astype(compute_dtype).astype(jnp.float32)
        w_f = w_f.astype(compute_dtype).astype(jnp.float32)
    y = lax.conv_general_dilated(x, w_f, (stride, stride),
                                 [(pad, pad), (pad, pad)],
                                 dimension_numbers=("NCHW", "OIHW", "NCHW"))
    return y + bias[None, :, None, None]


def basic_block_reference(x, params, stride, downsample, compute_dtype=None):
    def rnd(t):
        return t if compute_dtype is None else t.astype(compute_dtype).astype(jnp.float32)
    out = jnp.maximum(_ref_conv_bn(x, params["w1"], params["bn1"], stride, 1,
                                   compute_dtype), 0.0)
    out = rnd(out)
    out = _ref_conv_bn(out, params["w2"], params["bn2"], 1, 1, compute_dtype)
    if downsample:
        residual = rnd(_ref_conv_bn(x, params["ws"], params["bns"], stride, 0,
                                    compute_dtype))
    else:
        residual = rnd(x)
    return jnp.maximum(out + residual, 0.0)


# ---------------------------------- main ------------------------------------ #
def _init_params(key, in_ch, out_ch):
    ks = jax.random.split(key, 16)

    def bn(k0, k1, k2, k3, c):
        gamma = 0.5 + jax.random.uniform(k0, (c,), jnp.float32)
        beta = 0.1 * jax.random.normal(k1, (c,), jnp.float32)
        mean = 0.1 * jax.random.normal(k2, (c,), jnp.float32)
        var = 0.5 + jax.random.uniform(k3, (c,), jnp.float32)
        return (gamma, beta, mean, var)

    return {
        "w1": 0.1 * jax.random.normal(ks[0], (out_ch, in_ch, 3, 3), jnp.float32),
        "bn1": bn(ks[1], ks[2], ks[3], ks[4], out_ch),
        "w2": 0.1 * jax.random.normal(ks[5], (out_ch, out_ch, 3, 3), jnp.float32),
        "bn2": bn(ks[6], ks[7], ks[8], ks[9], out_ch),
        "ws": 0.1 * jax.random.normal(ks[10], (out_ch, in_ch, 1, 1), jnp.float32),
        "bns": bn(ks[11], ks[12], ks[13], ks[14], out_ch),
    }


if __name__ == "__main__":
    key = jax.random.PRNGKey(0)
    k1, k2, k3, k4 = jax.random.split(key, 4)

    # TODO(synk): BatchNorm is implemented in eval mode only (running stats are
    # folded into the conv); training-mode batch statistics are not computed.

    # Case 1: projection-shortcut block (stride 2, channel expansion; fused 1x1).
    N, C_in, H, W = 2, 4, 16, 16
    C_out, stride, downsample = 8, 2, True
    x = jax.random.normal(k1, (N, C_in, H, W), jnp.float32)
    params = _init_params(k2, C_in, C_out)

    fwd = jax.jit(lambda xx, pp: basic_block_forward(xx, pp, stride, downsample))
    out = jax.block_until_ready(fwd(x, params))
    assert out.shape == (N, C_out, H // stride, W // stride)

    ref_matched = basic_block_reference(x, params, stride, downsample,
                                        compute_dtype=COMPUTE_DTYPE)
    assert jnp.allclose(out, ref_matched, atol=1e-2, rtol=1e-2)
    ref_f32 = basic_block_reference(x, params, stride, downsample)
    assert jnp.allclose(out, ref_f32, atol=5e-2, rtol=5e-2)

    # Case 2: identity-shortcut block (stride 1, same channel count).
    N2, C2, H2 = 2, 8, 8
    x2 = jax.random.normal(k3, (N2, C2, H2, H2), jnp.float32)
    params2 = _init_params(k4, C2, C2)
    fwd2 = jax.jit(lambda xx, pp: basic_block_forward(xx, pp, 1, False))
    out2 = jax.block_until_ready(fwd2(x2, params2))
    assert out2.shape == (N2, C2, H2, H2)
    ref2 = basic_block_reference(x2, params2, 1, False, compute_dtype=COMPUTE_DTYPE)
    assert jnp.allclose(out2, ref2, atol=1e-2, rtol=1e-2)

    print("KERNEL_OK")
</pallas_src>

<mosaic_0001>
module attributes {stable_mosaic.version = 11 : i64} {
  func.func @_conv_kernel(%arg0: i32, %arg1: memref<1x592x128xbf16, #tpu.memory_space<vmem>>, %arg2: memref<10x128x128xbf16, #tpu.memory_space<vmem>>, %arg3: memref<2x128xf32, #tpu.memory_space<vmem>>, %arg4: memref<1x128x128xbf16, #tpu.memory_space<vmem>>, %arg5: memref<1x128x128xbf16, #tpu.memory_space<vmem>>, %arg6: memref<128x128xf32, #tpu.memory_space<vmem>>, %arg7: memref<576x128xbf16, #tpu.memory_space<vmem>>) attributes {dimension_semantics = [#tpu.dimension_semantics<parallel>], iteration_bounds = array<i64: 2>, scalar_prefetch = 0 : i64, scratch_operands = 2 : i64, tpu.core_type = #tpu.core_type<tc>, window_params = [{transform_indices = @transform_0, window_bounds = array<i64: 1, 592, 128>}, {pipeline_mode = #tpu.pipeline_mode<synchronous>, transform_indices = @transform_1, window_bounds = array<i64: 10, 128, 128>}, {pipeline_mode = #tpu.pipeline_mode<synchronous>, transform_indices = @transform_2, window_bounds = array<i64: 2, 128>}, {transform_indices = @transform_3, window_bounds = array<i64: 1, 128, 128>}, {transform_indices = @transform_4, window_bounds = array<i64: 1, 128, 128>}]} {
    %c0 = arith.constant 0 : index
    %c0_0 = arith.constant 0 : index
    %c0_1 = arith.constant 0 : index
    %0 = vector.load %arg1[%c0, %c0_0, %c0_1] : memref<1x592x128xbf16, #tpu.memory_space<vmem>>, vector<1x128x128xbf16>
    %1 = vector.shape_cast %0 : vector<1x128x128xbf16> to vector<128x128xbf16>
    %c0_2 = arith.constant 0 : index
    %c0_3 = arith.constant 0 : index
    %c0_4 = arith.constant 0 : index
    %2 = vector.load %arg2[%c0_2, %c0_3, %c0_4] : memref<10x128x128xbf16, #tpu.memory_space<vmem>>, vector<1x128x128xbf16>
    %3 = vector.shape_cast %2 : vector<1x128x128xbf16> to vector<128x128xbf16>
    %cst = arith.constant dense<0.000000e+00> : vector<128x128xf32>
    %4 = tpu.matmul %1, %3, %cst {dimension_numbers = #tpu.dot_dimension_numbers<[1], [0], [0], [1], [0, 0, 1, 1], [], []>} : vector<128x128xbf16>, vector<128x128xbf16>, vector<128x128xf32> -> vector<128x128xf32>
    %c0_5 = arith.constant 0 : index
    %c0_6 = arith.constant 0 : index
    %5 = vector.load %arg6[%c0_5, %c0_6] : memref<128x128xf32, #tpu.memory_space<vmem>>, vector<128x128xf32>
    tpu.vector_store %arg6[%c0_5, %c0_6], %4 {strides = array<i32>} : memref<128x128xf32, #tpu.memory_space<vmem>>, vector<128x128xf32>,
    %c0_7 = arith.constant 0 : index
    %c144 = arith.constant 144 : index
    %c0_8 = arith.constant 0 : index
    %6 = vector.load %arg1[%c0_7, %c144, %c0_8] : memref<1x592x128xbf16, #tpu.memory_space<vmem>>, vector<1x128x128xbf16>
    %7 = vector.shape_cast %6 : vector<1x128x128xbf16> to vector<128x128xbf16>
    %c1 = arith.constant 1 : index
    %c0_9 = arith.constant 0 : index
    %c0_10 = arith.constant 0 : index
    %8 = vector.load %arg2[%c1, %c0_9, %c0_10] : memref<10x128x128xbf16, #tpu.memory_space<vmem>>, vector<1x128x128xbf16>
    %9 = vector.shape_cast %8 : vector<1x128x128xbf16> to vector<128x128xbf16>
    %cst_11 = arith.constant dense<0.000000e+00> : vector<128x128xf32>
    %10 = tpu.matmul %7, %9, %cst_11 {dimension_numbers = #tpu.dot_dimension_numbers<[1], [0], [0], [1], [0, 0, 1, 1], [], []>} : vector<128x128xbf16>, vector<128x128xbf16>, vector<128x128xf32> -> vector<128x128xf32>
    %c0_12 = arith.constant 0 : index
    %c0_13 = arith.constant 0 : index
    %11 = vector.load %arg6[%c0_12, %c0_13] : memref<128x128xf32, #tpu.memory_space<vmem>>, vector<128x128xf32>
    %12 = arith.addf %11, %10 : vector<128x128xf32>
    %c0_14 = arith.constant 0 : index
    %c0_15 = arith.constant 0 : index
    %13 = vector.load %arg6[%c0_14, %c0_15] : memref<128x128xf32, #tpu.memory_space<vmem>>, vector<128x128xf32>
    tpu.vector_store %arg6[%c0_14, %c0_15], %12 {strides = array<i32>} : memref<128x128xf32, #tpu.memory_space<vmem>>, vector<128x128xf32>,
    %c0_16 = arith.constant 0 : index
    %c288 = arith.constant 288 : index
    %c0_17 = arith.constant 0 : index
    %14 = vector.load %arg1[%c0_16, %c288, %c0_17] : memref<1x592x128xbf16, #tpu.memory_space<vmem>>, vector<1x128x128xbf16>
    %15 = vector.shape_cast %14 : vector<1x128x128xbf16> to vector<128x128xbf16>
    %c3 = arith.constant 3 : index
    %c0_18 = arith.constant 0 : index
    %c0_19 = arith.constant 0 : index
    %16 = vector.load %arg2[%c3, %c0_18, %c0_19] : memref<10x128x128xbf16, #tpu.memory_space<vmem>>, vector<1x128x128xbf16>
    %17 = vector.shape_cast %16 : vector<1x128x128xbf16> to vector<128x128xbf16>
    %cst_20 = arith.constant dense<0.000000e+00> : vector<128x128xf32>
    %18 = tpu.matmul %15, %17, %cst_20 {dimension_numbers = #tpu.dot_dimension_numbers<[1], [0], [0], [1], [0, 0, 1, 1], [], []>} : vector<128x128xbf16>, vector<128x128xbf16>, vector<128x128xf32> -> vector<128x128xf32>
    %c0_21 = arith.constant 0 : index
    %c0_22 = arith.constant 0 : index
    %19 = vector.load %arg6[%c0_21, %c0_22] : memref<128x128xf32, #tpu.memory_space<vmem>>, vector<128x128xf32>
    %20 = arith.addf %19, %18 : vector<128x128xf32>
    %c0_23 = arith.constant 0 : index
    %c0_24 = arith.constant 0 : index
    %21 = vector.load %arg6[%c0_23, %c0_24] : memref<128x128xf32, #tpu.memory_space<vmem>>, vector<128x128xf32>
    tpu.vector_store %arg6[%c0_23, %c0_24], %20 {strides = array<i32>} : memref<128x128xf32, #tpu.memory_space<vmem>>, vector<128x128xf32>,
    %c0_25 = arith.constant 0 : index
    %c432 = arith.constant 432 : index
    %c0_26 = arith.constant 0 : index
    %22 = vector.load %arg1[%c0_25, %c432, %c0_26] : memref<1x592x128xbf16, #tpu.memory_space<vmem>>, vector<1x128x128xbf16>
    %23 = vector.shape_cast %22 : vector<1x128x128xbf16> to vector<128x128xbf16>
    %c4 = arith.constant 4 : index
    %c0_27 = arith.constant 0 : index
    %c0_28 = arith.constant 0 : index
    %24 = vector.load %arg2[%c4, %c0_27, %c0_28] : memref<10x128x128xbf16, #tpu.memory_space<vmem>>, vector<1x128x128xbf16>
    %25 = vector.shape_cast %24 : vector<1x128x128xbf16> to vector<128x128xbf16>
    %cst_29 = arith.constant dense<0.000000e+00> : vector<128x128xf32>
    %26 = tpu.matmul %23, %25, %cst_29 {dimension_numbers = #tpu.dot_dimension_numbers<[1], [0], [0], [1], [0, 0, 1, 1], [], []>} : vector<128x128xbf16>, vector<128x128xbf16>, vector<128x128xf32> -> vector<128x128xf32>
    %c0_30 = arith.constant 0 : index
    %c0_31 = arith.constant 0 : index
    %27 = vector.load %arg6[%c0_30, %c0_31] : memref<128x128xf32, #tpu.memory_space<vmem>>, vector<128x128xf32>
    %28 = arith.addf %27, %26 : vector<128x128xf32>
    %c0_32 = arith.constant 0 : index
    %c0_33 = arith.constant 0 : index
    %29 = vector.load %arg6[%c0_32, %c0_33] : memref<128x128xf32, #tpu.memory_space<vmem>>, vector<128x128xf32>
    tpu.vector_store %arg6[%c0_32, %c0_33], %28 {strides = array<i32>} : memref<128x128xf32, #tpu.memory_space<vmem>>, vector<128x128xf32>,
    %c0_34 = arith.constant 0 : index
    %c16 = arith.constant 16 : index
    %c0_35 = arith.constant 0 : index
    %30 = vector.load %arg1[%c0_34, %c16, %c0_35] : memref<1x592x128xbf16, #tpu.memory_space<vmem>>, vector<1x128x128xbf16>
    %31 = vector.shape_cast %30 : vector<1x128x128xbf16> to vector<128x128xbf16>
    %c6 = arith.constant 6 : index
    %c0_36 = arith.constant 0 : index
    %c0_37 = arith.constant 0 : index
    %32 = vector.load %arg2[%c6, %c0_36, %c0_37] : memref<10x128x128xbf16, #tpu.memory_space<vmem>>, vector<1x128x128xbf16>
    %33 = vector.shape_cast %32 : vector<1x128x128xbf16> to vector<128x128xbf16>
    %cst_38 = arith.constant dense<0.000000e+00> : vector<128x128xf32>
    %34 = tpu.matmul %31, %33, %cst_38 {dimension_numbers = #tpu.dot_dimension_numbers<[1], [0], [0], [1], [0, 0, 1, 1], [], []>} : vector<128x128xbf16>, vector<128x128xbf16>, vector<128x128xf32> -> vector<128x128xf32>
    %c0_39 = arith.constant 0 : index
    %c0_40 = arith.constant 0 : index
    %35 = vector.load %arg6[%c0_39, %c0_40] : memref<128x128xf32, #tpu.memory_space<vmem>>, vector<128x128xf32>
    %36 = arith.addf %35, %34 : vector<128x128xf32>
    %c0_41 = arith.constant 0 : index
    %c0_42 = arith.constant 0 : index
    %37 = vector.load %arg6[%c0_41, %c0_42] : memref<128x128xf32, #tpu.memory_space<vmem>>, vector<128x128xf32>
    tpu.vector_store %arg6[%c0_41, %c0_42], %36 {strides = array<i32>} : memref<128x128xf32, #tpu.memory_space<vmem>>, vector<128x128xf32>,
    %c0_43 = arith.constant 0 : index
    %c160 = arith.constant 160 : index
    %c0_44 = arith.constant 0 : index
    %38 = vector.load %arg1[%c0_43, %c160, %c0_44] : memref<1x592x128xbf16, #tpu.memory_space<vmem>>, vector<1x128x128xbf16>
    %39 = vector.shape_cast %38 : vector<1x128x128xbf16> to vector<128x128xbf16>
    %c7 = arith.constant 7 : index
    %c0_45 = arith.constant 0 : index
    %c0_46 = arith.constant 0 : index
    %40 = vector.load %arg2[%c7, %c0_45, %c0_46] : memref<10x128x128xbf16, #tpu.memory_space<vmem>>, vector<1x128x128xbf16>
    %41 = vector.shape_cast %40 : vector<1x128x128xbf16> to vector<128x128xbf16>
    %cst_47 = arith.constant dense<0.000000e+00> : vector<128x128xf32>
    %42 = tpu.matmul %39, %41, %cst_47 {dimension_numbers = #tpu.dot_dimension_numbers<[1], [0], [0], [1], [0, 0, 1, 1], [], []>} : vector<128x128xbf16>, vector<128x128xbf16>, vector<128x128xf32> -> vector<128x128xf32>
    %c0_48 = arith.constant 0 : index
    %c0_49 = arith.constant 0 : index
    %43 = vector.load %arg6[%c0_48, %c0_49] : memref<128x128xf32, #tpu.memory_space<vmem>>, vector<128x128xf32>
    %44 = arith.addf %43, %42 : vector<128x128xf32>
    %c0_50 = arith.constant 0 : index
    %c0_51 = arith.constant 0 : index
    %45 = vector.load %arg6[%c0_50, %c0_51] : memref<128x128xf32, #tpu.memory_space<vmem>>, vector<128x128xf32>
    tpu.vector_store %arg6[%c0_50, %c0_51], %44 {strides = array<i32>} : memref<128x128xf32, #tpu.memory_space<vmem>>, vector<128x128xf32>,
    %c0_52 = arith.constant 0 : index
    %c432_53 = arith.constant 432 : index
    %c0_54 = arith.constant 0 : index
    %46 = vector.load %arg1[%c0_52, %c432_53, %c0_54] : memref<1x592x128xbf16, #tpu.memory_space<vmem>>, vector<1x128x128xbf16>
    %47 = vector.shape_cast %46 : vector<1x128x128xbf16> to vector<128x128xbf16>
    %c9 = arith.constant 9 : index
    %c0_55 = arith.constant 0 : index
    %c0_56 = arith.constant 0 : index
    %48 = vector.load %arg2[%c9, %c0_55, %c0_56] : memref<10x128x128xbf16, #tpu.memory_space<vmem>>, vector<1x128x128xbf16>
    %49 = vector.shape_cast %48 : vector<1x128x128xbf16> to vector<128x128xbf16>
    %cst_57 = arith.constant dense<0.000000e+00> : vector<128x128xf32>
    %50 = tpu.matmul %47, %49, %cst_57 {dimension_numbers = #tpu.dot_dimension_numbers<[1], [0], [0], [1], [0, 0, 1, 1], [], []>} : vector<128x128xbf16>, vector<128x128xbf16>, vector<128x128xf32> -> vector<128x128xf32>
    %c1_58 = arith.constant 1 : index
    %c0_59 = arith.constant 0 : index
    %51 = vector.load %arg3[%c1_58, %c0_59] : memref<2x128xf32, #tpu.memory_space<vmem>>, vector<1x128xf32>
    %52 = vector.broadcast %51 : vector<1x128xf32> to vector<128x128xf32>
    %53 = arith.addf %50, %52 : vector<128x128xf32>
    %54 = arith.truncf %53 : vector<128x128xf32> to vector<128x128xbf16>
    %c0_60 = arith.constant 0 : index
    %c0_61 = arith.constant 0 : index
    %c0_62 = arith.constant 0 : index
    %55 = vector.load %arg5[%c0_60, %c0_61, %c0_62] : memref<1x128x128xbf16, #tpu.memory_space<vmem>>, vector<1x128x128xbf16>
    %56 = vector.shape_cast %55 : vector<1x128x128xbf16> to vector<128x128xbf16>
    %57 = vector.shape_cast %54 : vector<128x128xbf16> to vector<1x128x128xbf16>
    tpu.vector_store %arg5[%c0_60, %c0_61, %c0_62], %57 {strides = array<i32>} : memref<1x128x128xbf16, #tpu.memory_space<vmem>>, vector<1x128x128xbf16>,
    %c0_63 = arith.constant 0 : index
    %c1_64 = arith.constant 1 : index
    %c0_65 = arith.constant 0 : index
    %58 = vector.load %arg1[%c0_63, %c1_64, %c0_65] : memref<1x592x128xbf16, #tpu.memory_space<vmem>>, vector<1x576x128xbf16>
    %59 = vector.shape_cast %58 : vector<1x576x128xbf16> to vector<576x128xbf16>
    %c0_66 = arith.constant 0 : index
    %c0_67 = arith.constant 0 : index
    %60 = vector.load %arg7[%c0_66, %c0_67] : memref<576x128xbf16, #tpu.memory_space<vmem>>, vector<576x128xbf16>
    tpu.vector_store %arg7[%c0_66, %c0_67], %59 {strides = array<i32>} : memref<576x128xbf16, #tpu.memory_space<vmem>>, vector<576x128xbf16>,
    %c0_68 = arith.constant 0 : index
    %c0_69 = arith.constant 0 : index
    %61 = vector.load %arg7[%c0_68, %c0_69] : memref<576x128xbf16, #tpu.memory_space<vmem>>, vector<128x128xbf16>
    %c2 = arith.constant 2 : index
    %c0_70 = arith.constant 0 : index
    %c0_71 = arith.constant 0 : index
    %62 = vector.load %arg2[%c2, %c0_70, %c0_71] : memref<10x128x128xbf16, #tpu.memory_space<vmem>>, vector<1x128x128xbf16>
    %63 = vector.shape_cast %62 : vector<1x128x128xbf16> to vector<128x128xbf16>
    %cst_72 = arith.constant dense<0.000000e+00> : vector<128x128xf32>
    %64 = tpu.matmul %61, %63, %cst_72 {dimension_numbers = #tpu.dot_dimension_numbers<[1], [0], [0], [1], [0, 0, 1, 1], [], []>} : vector<128x128xbf16>, vector<128x128xbf16>, vector<128x128xf32> -> vector<128x128xf32>
    %c0_73 = arith.constant 0 : index
    %c0_74 = arith.constant 0 : index
    %65 = vector.load %arg6[%c0_73, %c0_74] : memref<128x128xf32, #tpu.memory_space<vmem>>, vector<128x128xf32>
    %66 = arith.addf %65, %64 : vector<128x128xf32>
    %c0_75 = arith.constant 0 : index
    %c0_76 = arith.constant 0 : index
    %67 = vector.load %arg6[%c0_75, %c0_76] : memref<128x128xf32, #tpu.memory_space<vmem>>, vector<128x128xf32>
    tpu.vector_store %arg6[%c0_75, %c0_76], %66 {strides = array<i32>} : memref<128x128xf32, #tpu.memory_space<vmem>>, vector<128x128xf32>,
    %c288_77 = arith.constant 288 : index
    %c0_78 = arith.constant 0 : index
    %68 = vector.load %arg7[%c288_77, %c0_78] : memref<576x128xbf16, #tpu.memory_space<vmem>>, vector<128x128xbf16>
    %c5 = arith.constant 5 : index
    %c0_79 = arith.constant 0 : index
    %c0_80 = arith.constant 0 : index
    %69 = vector.load %arg2[%c5, %c0_79, %c0_80] : memref<10x128x128xbf16, #tpu.memory_space<vmem>>, vector<1x128x128xbf16>
    %70 = vector.shape_cast %69 : vector<1x128x128xbf16> to vector<128x128xbf16>
    %cst_81 = arith.constant dense<0.000000e+00> : vector<128x128xf32>
    %71 = tpu.matmul %68, %70, %cst_81 {dimension_numbers = #tpu.dot_dimension_numbers<[1], [0], [0], [1], [0, 0, 1, 1], [], []>} : vector<128x128xbf16>, vector<128x128xbf16>, vector<128x128xf32> -> vector<128x128xf32>
    %c0_82 = arith.constant 0 : index
    %c0_83 = arith.constant 0 : index
    %72 = vector.load %arg6[%c0_82, %c0_83] : memref<128x128xf32, #tpu.memory_space<vmem>>, vector<128x128xf32>
    %73 = arith.addf %72, %71 : vector<128x128xf32>
    %c0_84 = arith.constant 0 : index
    %c0_85 = arith.constant 0 : index
    %74 = vector.load %arg6[%c0_84, %c0_85] : memref<128x128xf32, #tpu.memory_space<vmem>>, vector<128x128xf32>
    tpu.vector_store %arg6[%c0_84, %c0_85], %73 {strides = array<i32>} : memref<128x128xf32, #tpu.memory_space<vmem>>, vector<128x128xf32>,
    %c16_86 = arith.constant 16 : index
    %c0_87 = arith.constant 0 : index
    %75 = vector.load %arg7[%c16_86, %c0_87] : memref<576x128xbf16, #tpu.memory_space<vmem>>, vector<128x128xbf16>
    %c8 = arith.constant 8 : index
    %c0_88 = arith.constant 0 : index
    %c0_89 = arith.constant 0 : index
    %76 = vector.load %arg2[%c8, %c0_88, %c0_89] : memref<10x128x128xbf16, #tpu.memory_space<vmem>>, vector<1x128x128xbf16>
    %77 = vector.shape_cast %76 : vector<1x128x128xbf16> to vector<128x128xbf16>
    %cst_90 = arith.constant dense<0.000000e+00> : vector<128x128xf32>
    %78 = tpu.matmul %75, %77, %cst_90 {dimension_numbers = #tpu.dot_dimension_numbers<[1], [0], [0], [1], [0, 0, 1, 1], [], []>} : vector<128x128xbf16>, vector<128x128xbf16>, vector<128x128xf32> -> vector<128x128xf32>
    %c0_91 = arith.constant 0 : index
    %c0_92 = arith.constant 0 : index
    %79 = vector.load %arg6[%c0_91, %c0_92] : memref<128x128xf32, #tpu.memory_space<vmem>>, vector<128x128xf32>
    %80 = arith.addf %79, %78 : vector<128x128xf32>
    %c0_93 = arith.constant 0 : index
    %c0_94 = arith.constant 0 : index
    %81 = vector.load %arg6[%c0_93, %c0_94] : memref<128x128xf32, #tpu.memory_space<vmem>>, vector<128x128xf32>
    tpu.vector_store %arg6[%c0_93, %c0_94], %80 {strides = array<i32>} : memref<128x128xf32, #tpu.memory_space<vmem>>, vector<128x128xf32>,
    %c0_95 = arith.constant 0 : index
    %c0_96 = arith.constant 0 : index
    %82 = vector.load %arg6[%c0_95, %c0_96] : memref<128x128xf32, #tpu.memory_space<vmem>>, vector<128x128xf32>
    %c0_97 = arith.constant 0 : index
    %c0_98 = arith.constant 0 : index
    %83 = vector.load %arg3[%c0_97, %c0_98] : memref<2x128xf32, #tpu.memory_space<vmem>>, vector<1x128xf32>
    %84 = vector.broadcast %83 : vector<1x128xf32> to vector<128x128xf32>
    %85 = arith.addf %82, %84 : vector<128x128xf32>
    %cst_99 = arith.constant 0.000000e+00 : f32
    %86 = vector.broadcast %cst_99 : f32 to vector<128x128xf32>
    %87 = arith.maximumf %85, %86 : vector<128x128xf32>
    %88 = arith.truncf %87 : vector<128x128xf32> to vector<128x128xbf16>
    %c0_100 = arith.constant 0 : index
    %c0_101 = arith.constant 0 : index
    %c0_102 = arith.constant 0 : index
    %89 = vector.load %arg4[%c0_100, %c0_101, %c0_102] : memref<1x128x128xbf16, #tpu.memory_space<vmem>>, vector<1x128x128xbf16>
    %90 = vector.shape_cast %89 : vector<1x128x128xbf16> to vector<128x128xbf16>
    %91 = vector.shape_cast %88 : vector<128x128xbf16> to vector<1x128x128xbf16>
    tpu.vector_store %arg4[%c0_100, %c0_101, %c0_102], %91 {strides = array<i32>} : memref<1x128x128xbf16, #tpu.memory_space<vmem>>, vector<1x128x128xbf16>,
    return
  }
  func.func @transform_0(%arg0: i32) -> (i32, i32, i32) {
    %c0_i32 = arith.constant 0 : i32
    %c0_i32_0 = arith.constant 0 : i32
    %c0_i32_1 = arith.constant 0 : i32
    return %arg0, %c0_i32, %c0_i32_0 : i32, i32, i32
  }
  func.func @transform_1(%arg0: i32) -> (i32, i32, i32) {
    %c0_i32 = arith.constant 0 : i32
    %c0_i32_0 = arith.constant 0 : i32
    %c0_i32_1 = arith.constant 0 : i32
    %c0_i32_2 = arith.constant 0 : i32
    return %c0_i32, %c0_i32_0, %c0_i32_1 : i32, i32, i32
  }
  func.func @transform_2(%arg0: i32) -> (i32, i32) {
    %c0_i32 = arith.constant 0 : i32
    %c0_i32_0 = arith.constant 0 : i32
    %c0_i32_1 = arith.constant 0 : i32
    return %c0_i32, %c0_i32_0 : i32, i32
  }
  func.func @transform_3(%arg0: i32) -> (i32, i32, i32) {
    %c0_i32 = arith.constant 0 : i32
    %c0_i32_0 = arith.constant 0 : i32
    %c0_i32_1 = arith.constant 0 : i32
    return %arg0, %c0_i32, %c0_i32_0 : i32, i32, i32
  }
  func.func @transform_4(%arg0: i32) -> (i32, i32, i32) {
    %c0_i32 = arith.constant 0 : i32
    %c0_i32_0 = arith.constant 0 : i32
    %c0_i32_1 = arith.constant 0 : i32
    return %arg0, %c0_i32, %c0_i32_0 : i32, i32, i32
  }
}

module attributes {stable_mosaic.version = 11 : i64} {
  func.func @_conv_kernel(%arg0: i32, %arg1: memref<1x176x128xbf16, #tpu.memory_space<vmem>>, %arg2: memref<9x128x128xbf16, #tpu.memory_space<vmem>>, %arg3: memref<1x128xf32, #tpu.memory_space<vmem>>, %arg4: memref<1x128x128xbf16, #tpu.memory_space<vmem>>, %arg5: memref<1x128x128xf32, #tpu.memory_space<vmem>>, %arg6: memref<128x128xf32, #tpu.memory_space<vmem>>, %arg7: memref<160x128xbf16, #tpu.memory_space<vmem>>) attributes {dimension_semantics = [#tpu.dimension_semantics<parallel>], iteration_bounds = array<i64: 2>, scalar_prefetch = 0 : i64, scratch_operands = 2 : i64, tpu.core_type = #tpu.core_type<tc>, window_params = [{transform_indices = @transform_0, window_bounds = array<i64: 1, 176, 128>}, {pipeline_mode = #tpu.pipeline_mode<synchronous>, transform_indices = @transform_1, window_bounds = array<i64: 9, 128, 128>}, {pipeline_mode = #tpu.pipeline_mode<synchronous>, transform_indices = @transform_2, window_bounds = array<i64: 1, 128>}, {transform_indices = @transform_3, window_bounds = array<i64: 1, 128, 128>}, {transform_indices = @transform_4, window_bounds = array<i64: 1, 128, 128>}]} {
    %c0 = arith.constant 0 : index
    %c0_0 = arith.constant 0 : index
    %c0_1 = arith.constant 0 : index
    %0 = vector.load %arg1[%c0, %c0_0, %c0_1] : memref<1x176x128xbf16, #tpu.memory_space<vmem>>, vector<1x128x128xbf16>
    %1 = vector.shape_cast %0 : vector<1x128x128xbf16> to vector<128x128xbf16>
    %c0_2 = arith.constant 0 : index
    %c0_3 = arith.constant 0 : index
    %c0_4 = arith.constant 0 : index
    %2 = vector.load %arg2[%c0_2, %c0_3, %c0_4] : memref<9x128x128xbf16, #tpu.memory_space<vmem>>, vector<1x128x128xbf16>
    %3 = vector.shape_cast %2 : vector<1x128x128xbf16> to vector<128x128xbf16>
    %cst = arith.constant dense<0.000000e+00> : vector<128x128xf32>
    %4 = tpu.matmul %1, %3, %cst {dimension_numbers = #tpu.dot_dimension_numbers<[1], [0], [0], [1], [0, 0, 1, 1], [], []>} : vector<128x128xbf16>, vector<128x128xbf16>, vector<128x128xf32> -> vector<128x128xf32>
    %c0_5 = arith.constant 0 : index
    %c0_6 = arith.constant 0 : index
    %5 = vector.load %arg6[%c0_5, %c0_6] : memref<128x128xf32, #tpu.memory_space<vmem>>, vector<128x128xf32>
    tpu.vector_store %arg6[%c0_5, %c0_6], %4 {strides = array<i32>} : memref<128x128xf32, #tpu.memory_space<vmem>>, vector<128x128xf32>,
    %c0_7 = arith.constant 0 : index
    %c16 = arith.constant 16 : index
    %c0_8 = arith.constant 0 : index
    %6 = vector.load %arg1[%c0_7, %c16, %c0_8] : memref<1x176x128xbf16, #tpu.memory_space<vmem>>, vector<1x128x128xbf16>
    %7 = vector.shape_cast %6 : vector<1x128x128xbf16> to vector<128x128xbf16>
    %c3 = arith.constant 3 : index
    %c0_9 = arith.constant 0 : index
    %c0_10 = arith.constant 0 : index
    %8 = vector.load %arg2[%c3, %c0_9, %c0_10] : memref<9x128x128xbf16, #tpu.memory_space<vmem>>, vector<1x128x128xbf16>
    %9 = vector.shape_cast %8 : vector<1x128x128xbf16> to vector<128x128xbf16>
    %cst_11 = arith.constant dense<0.000000e+00> : vector<128x128xf32>
    %10 = tpu.matmul %7, %9, %cst_11 {dimension_numbers = #tpu.dot_dimension_numbers<[1], [0], [0], [1], [0, 0, 1, 1], [], []>} : vector<128x128xbf16>, vector<128x128xbf16>, vector<128x128xf32> -> vector<128x128xf32>
    %c0_12 = arith.constant 0 : index
    %c0_13 = arith.constant 0 : index
    %11 = vector.load %arg6[%c0_12, %c0_13] : memref<128x128xf32, #tpu.memory_space<vmem>>, vector<128x128xf32>
    %12 = arith.addf %11, %10 : vector<128x128xf32>
    %c0_14 = arith.constant 0 : index
    %c0_15 = arith.constant 0 : index
    %13 = vector.load %arg6[%c0_14, %c0_15] : memref<128x128xf32, #tpu.memory_space<vmem>>, vector<128x128xf32>
    tpu.vector_store %arg6[%c0_14, %c0_15], %12 {strides = array<i32>} : memref<128x128xf32, #tpu.memory_space<vmem>>, vector<128x128xf32>,
    %c0_16 = arith.constant 0 : index
    %c32 = arith.constant 32 : index
    %c0_17 = arith.constant 0 : index
    %14 = vector.load %arg1[%c0_16, %c32, %c0_17] : memref<1x176x128xbf16, #tpu.memory_space<vmem>>, vector<1x128x128xbf16>
    %15 = vector.shape_cast %14 : vector<1x128x128xbf16> to vector<128x128xbf16>
    %c6 = arith.constant 6 : index
    %c0_18 = arith.constant 0 : index
    %c0_19 = arith.constant 0 : index
    %16 = vector.load %arg2[%c6, %c0_18, %c0_19] : memref<9x128x128xbf16, #tpu.memory_space<vmem>>, vector<1x128x128xbf16>
    %17 = vector.shape_cast %16 : vector<1x128x128xbf16> to vector<128x128xbf16>
    %cst_20 = arith.constant dense<0.000000e+00> : vector<128x128xf32>
    %18 = tpu.matmul %15, %17, %cst_20 {dimension_numbers = #tpu.dot_dimension_numbers<[1], [0], [0], [1], [0, 0, 1, 1], [], []>} : vector<128x128xbf16>, vector<128x128xbf16>, vector<128x128xf32> -> vector<128x128xf32>
    %c0_21 = arith.constant 0 : index
    %c0_22 = arith.constant 0 : index
    %19 = vector.load %arg6[%c0_21, %c0_22] : memref<128x128xf32, #tpu.memory_space<vmem>>, vector<128x128xf32>
    %20 = arith.addf %19, %18 : vector<128x128xf32>
    %c0_23 = arith.constant 0 : index
    %c0_24 = arith.constant 0 : index
    %21 = vector.load %arg6[%c0_23, %c0_24] : memref<128x128xf32, #tpu.memory_space<vmem>>, vector<128x128xf32>
    tpu.vector_store %arg6[%c0_23, %c0_24], %20 {strides = array<i32>} : memref<128x128xf32, #tpu.memory_space<vmem>>, vector<128x128xf32>,
    %c0_25 = arith.constant 0 : index
    %c1 = arith.constant 1 : index
    %c0_26 = arith.constant 0 : index
    %22 = vector.load %arg1[%c0_25, %c1, %c0_26] : memref<1x176x128xbf16, #tpu.memory_space<vmem>>, vector<1x160x128xbf16>
    %23 = vector.shape_cast %22 : vector<1x160x128xbf16> to vector<160x128xbf16>
    %c0_27 = arith.constant 0 : index
    %c0_28 = arith.constant 0 : index
    %24 = vector.load %arg7[%c0_27, %c0_28] : memref<160x128xbf16, #tpu.memory_space<vmem>>, vector<160x128xbf16>
    tpu.vector_store %arg7[%c0_27, %c0_28], %23 {strides = array<i32>} : memref<160x128xbf16, #tpu.memory_space<vmem>>, vector<160x128xbf16>,
    %c0_29 = arith.constant 0 : index
    %c0_30 = arith.constant 0 : index
    %25 = vector.load %arg7[%c0_29, %c0_30] : memref<160x128xbf16, #tpu.memory_space<vmem>>, vector<128x128xbf16>
    %c1_31 = arith.constant 1 : index
    %c0_32 = arith.constant 0 : index
    %c0_33 = arith.constant 0 : index
    %26 = vector.load %arg2[%c1_31, %c0_32, %c0_33] : memref<9x128x128xbf16, #tpu.memory_space<vmem>>, vector<1x128x128xbf16>
    %27 = vector.shape_cast %26 : vector<1x128x128xbf16> to vector<128x128xbf16>
    %cst_34 = arith.constant dense<0.000000e+00> : vector<128x128xf32>
    %28 = tpu.matmul %25, %27, %cst_34 {dimension_numbers = #tpu.dot_dimension_numbers<[1], [0], [0], [1], [0, 0, 1, 1], [], []>} : vector<128x128xbf16>, vector<128x128xbf16>, vector<128x128xf32> -> vector<128x128xf32>
    %c0_35 = arith.constant 0 : index
    %c0_36 = arith.constant 0 : index
    %29 = vector.load %arg6[%c0_35, %c0_36] : memref<128x128xf32, #tpu.memory_space<vmem>>, vector<128x128xf32>
    %30 = arith.addf %29, %28 : vector<128x128xf32>
    %c0_37 = arith.constant 0 : index
    %c0_38 = arith.constant 0 : index
    %31 = vector.load %arg6[%c0_37, %c0_38] : memref<128x128xf32, #tpu.memory_space<vmem>>, vector<128x128xf32>
    tpu.vector_store %arg6[%c0_37, %c0_38], %30 {strides = array<i32>} : memref<128x128xf32, #tpu.memory_space<vmem>>, vector<128x128xf32>,
    %c16_39 = arith.constant 16 : index
    %c0_40 = arith.constant 0 : index
    %32 = vector.load %arg7[%c16_39, %c0_40] : memref<160x128xbf16, #tpu.memory_space<vmem>>, vector<128x128xbf16>
    %c4 = arith.constant 4 : index
    %c0_41 = arith.constant 0 : index
    %c0_42 = arith.constant 0 : index
    %33 = vector.load %arg2[%c4, %c0_41, %c0_42] : memref<9x128x128xbf16, #tpu.memory_space<vmem>>, vector<1x128x128xbf16>
    %34 = vector.shape_cast %33 : vector<1x128x128xbf16> to vector<128x128xbf16>
    %cst_43 = arith.constant dense<0.000000e+00> : vector<128x128xf32>
    %35 = tpu.matmul %32, %34, %cst_43 {dimension_numbers = #tpu.dot_dimension_numbers<[1], [0], [0], [1], [0, 0, 1, 1], [], []>} : vector<128x128xbf16>, vector<128x128xbf16>, vector<128x128xf32> -> vector<128x128xf32>
    %c0_44 = arith.constant 0 : index
    %c0_45 = arith.constant 0 : index
    %36 = vector.load %arg6[%c0_44, %c0_45] : memref<128x128xf32, #tpu.memory_space<vmem>>, vector<128x128xf32>
    %37 = arith.addf %36, %35 : vector<128x128xf32>
    %c0_46 = arith.constant 0 : index
    %c0_47 = arith.constant 0 : index
    %38 = vector.load %arg6[%c0_46, %c0_47] : memref<128x128xf32, #tpu.memory_space<vmem>>, vector<128x128xf32>
    tpu.vector_store %arg6[%c0_46, %c0_47], %37 {strides = array<i32>} : memref<128x128xf32, #tpu.memory_space<vmem>>, vector<128x128xf32>,
    %c32_48 = arith.constant 32 : index
    %c0_49 = arith.constant 0 : index
    %39 = vector.load %arg7[%c32_48, %c0_49] : memref<160x128xbf16, #tpu.memory_space<vmem>>, vector<128x128xbf16>
    %c7 = arith.constant 7 : index
    %c0_50 = arith.constant 0 : index
    %c0_51 = arith.constant 0 : index
    %40 = vector.load %arg2[%c7, %c0_50, %c0_51] : memref<9x128x128xbf16, #tpu.memory_space<vmem>>, vector<1x128x128xbf16>
    %41 = vector.shape_cast %40 : vector<1x128x128xbf16> to vector<128x128xbf16>
    %cst_52 = arith.constant dense<0.000000e+00> : vector<128x128xf32>
    %42 = tpu.matmul %39, %41, %cst_52 {dimension_numbers = #tpu.dot_dimension_numbers<[1], [0], [0], [1], [0, 0, 1, 1], [], []>} : vector<128x128xbf16>, vector<128x128xbf16>, vector<128x128xf32> -> vector<128x128xf32>
    %c0_53 = arith.constant 0 : index
    %c0_54 = arith.constant 0 : index
    %43 = vector.load %arg6[%c0_53, %c0_54] : memref<128x128xf32, #tpu.memory_space<vmem>>, vector<128x128xf32>
    %44 = arith.addf %43, %42 : vector<128x128xf32>
    %c0_55 = arith.constant 0 : index
    %c0_56 = arith.constant 0 : index
    %45 = vector.load %arg6[%c0_55, %c0_56] : memref<128x128xf32, #tpu.memory_space<vmem>>, vector<128x128xf32>
    tpu.vector_store %arg6[%c0_55, %c0_56], %44 {strides = array<i32>} : memref<128x128xf32, #tpu.memory_space<vmem>>, vector<128x128xf32>,
    %c0_57 = arith.constant 0 : index
    %c2 = arith.constant 2 : index
    %c0_58 = arith.constant 0 : index
    %46 = vector.load %arg1[%c0_57, %c2, %c0_58] : memref<1x176x128xbf16, #tpu.memory_space<vmem>>, vector<1x160x128xbf16>
    %47 = vector.shape_cast %46 : vector<1x160x128xbf16> to vector<160x128xbf16>
    %c0_59 = arith.constant 0 : index
    %c0_60 = arith.constant 0 : index
    %48 = vector.load %arg7[%c0_59, %c0_60] : memref<160x128xbf16, #tpu.memory_space<vmem>>, vector<160x128xbf16>
    tpu.vector_store %arg7[%c0_59, %c0_60], %47 {strides = array<i32>} : memref<160x128xbf16, #tpu.memory_space<vmem>>, vector<160x128xbf16>,
    %c0_61 = arith.constant 0 : index
    %c0_62 = arith.constant 0 : index
    %49 = vector.load %arg7[%c0_61, %c0_62] : memref<160x128xbf16, #tpu.memory_space<vmem>>, vector<128x128xbf16>
    %c2_63 = arith.constant 2 : index
    %c0_64 = arith.constant 0 : index
    %c0_65 = arith.constant 0 : index
    %50 = vector.load %arg2[%c2_63, %c0_64, %c0_65] : memref<9x128x128xbf16, #tpu.memory_space<vmem>>, vector<1x128x128xbf16>
    %51 = vector.shape_cast %50 : vector<1x128x128xbf16> to vector<128x128xbf16>
    %cst_66 = arith.constant dense<0.000000e+00> : vector<128x128xf32>
    %52 = tpu.matmul %49, %51, %cst_66 {dimension_numbers = #tpu.dot_dimension_numbers<[1], [0], [0], [1], [0, 0, 1, 1], [], []>} : vector<128x128xbf16>, vector<128x128xbf16>, vector<128x128xf32> -> vector<128x128xf32>
    %c0_67 = arith.constant 0 : index
    %c0_68 = arith.constant 0 : index
    %53 = vector.load %arg6[%c0_67, %c0_68] : memref<128x128xf32, #tpu.memory_space<vmem>>, vector<128x128xf32>
    %54 = arith.addf %53, %52 : vector<128x128xf32>
    %c0_69 = arith.constant 0 : index
    %c0_70 = arith.constant 0 : index
    %55 = vector.load %arg6[%c0_69, %c0_70] : memref<128x128xf32, #tpu.memory_space<vmem>>, vector<128x128xf32>
    tpu.vector_store %arg6[%c0_69, %c0_70], %54 {strides = array<i32>} : memref<128x128xf32, #tpu.memory_space<vmem>>, vector<128x128xf32>,
    %c16_71 = arith.constant 16 : index
    %c0_72 = arith.constant 0 : index
    %56 = vector.load %arg7[%c16_71, %c0_72] : memref<160x128xbf16, #tpu.memory_space<vmem>>, vector<128x128xbf16>
    %c5 = arith.constant 5 : index
    %c0_73 = arith.constant 0 : index
    %c0_74 = arith.constant 0 : index
    %57 = vector.load %arg2[%c5, %c0_73, %c0_74] : memref<9x128x128xbf16, #tpu.memory_space<vmem>>, vector<1x128x128xbf16>
    %58 = vector.shape_cast %57 : vector<1x128x128xbf16> to vector<128x128xbf16>
    %cst_75 = arith.constant dense<0.000000e+00> : vector<128x128xf32>
    %59 = tpu.matmul %56, %58, %cst_75 {dimension_numbers = #tpu.dot_dimension_numbers<[1], [0], [0], [1], [0, 0, 1, 1], [], []>} : vector<128x128xbf16>, vector<128x128xbf16>, vector<128x128xf32> -> vector<128x128xf32>
    %c0_76 = arith.constant 0 : index
    %c0_77 = arith.constant 0 : index
    %60 = vector.load %arg6[%c0_76, %c0_77] : memref<128x128xf32, #tpu.memory_space<vmem>>, vector<128x128xf32>
    %61 = arith.addf %60, %59 : vector<128x128xf32>
    %c0_78 = arith.constant 0 : index
    %c0_79 = arith.constant 0 : index
    %62 = vector.load %arg6[%c0_78, %c0_79] : memref<128x128xf32, #tpu.memory_space<vmem>>, vector<128x128xf32>
    tpu.vector_store %arg6[%c0_78, %c0_79], %61 {strides = array<i32>} : memref<128x128xf32, #tpu.memory_space<vmem>>, vector<128x128xf32>,
    %c32_80 = arith.constant 32 : index
    %c0_81 = arith.constant 0 : index
    %63 = vector.load %arg7[%c32_80, %c0_81] : memref<160x128xbf16, #tpu.memory_space<vmem>>, vector<128x128xbf16>
    %c8 = arith.constant 8 : index
    %c0_82 = arith.constant 0 : index
    %c0_83 = arith.constant 0 : index
    %64 = vector.load %arg2[%c8, %c0_82, %c0_83] : memref<9x128x128xbf16, #tpu.memory_space<vmem>>, vector<1x128x128xbf16>
    %65 = vector.shape_cast %64 : vector<1x128x128xbf16> to vector<128x128xbf16>
    %cst_84 = arith.constant dense<0.000000e+00> : vector<128x128xf32>
    %66 = tpu.matmul %63, %65, %cst_84 {dimension_numbers = #tpu.dot_dimension_numbers<[1], [0], [0], [1], [0, 0, 1, 1], [], []>} : vector<128x128xbf16>, vector<128x128xbf16>, vector<128x128xf32> -> vector<128x128xf32>
    %c0_85 = arith.constant 0 : index
    %c0_86 = arith.constant 0 : index
    %67 = vector.load %arg6[%c0_85, %c0_86] : memref<128x128xf32, #tpu.memory_space<vmem>>, vector<128x128xf32>
    %68 = arith.addf %67, %66 : vector<128x128xf32>
    %c0_87 = arith.constant 0 : index
    %c0_88 = arith.constant 0 : index
    %69 = vector.load %arg6[%c0_87, %c0_88] : memref<128x128xf32, #tpu.memory_space<vmem>>, vector<128x128xf32>
    tpu.vector_store %arg6[%c0_87, %c0_88], %68 {strides = array<i32>} : memref<128x128xf32, #tpu.memory_space<vmem>>, vector<128x128xf32>,
    %c0_89 = arith.constant 0 : index
    %c0_90 = arith.constant 0 : index
    %70 = vector.load %arg6[%c0_89, %c0_90] : memref<128x128xf32, #tpu.memory_space<vmem>>, vector<128x128xf32>
    %c0_91 = arith.constant 0 : index
    %c0_92 = arith.constant 0 : index
    %71 = vector.load %arg3[%c0_91, %c0_92] : memref<1x128xf32, #tpu.memory_space<vmem>>, vector<1x128xf32>
    %72 = vector.broadcast %71 : vector<1x128xf32> to vector<128x128xf32>
    %73 = arith.addf %70, %72 : vector<128x128xf32>
    %c0_93 = arith.constant 0 : index
    %c0_94 = arith.constant 0 : index
    %c0_95 = arith.constant 0 : index
    %74 = vector.load %arg4[%c0_93, %c0_94, %c0_95] : memref<1x128x128xbf16, #tpu.memory_space<vmem>>, vector<1x128x128xbf16>
    %75 = vector.shape_cast %74 : vector<1x128x128xbf16> to vector<128x128xbf16>
    %76 = arith.extf %75 : vector<128x128xbf16> to vector<128x128xf32>
    %77 = arith.addf %73, %76 : vector<128x128xf32>
    %cst_96 = arith.constant 0.000000e+00 : f32
    %78 = vector.broadcast %cst_96 : f32 to vector<128x128xf32>
    %79 = arith.maximumf %77, %78 : vector<128x128xf32>
    %c0_97 = arith.constant 0 : index
    %c0_98 = arith.constant 0 : index
    %c0_99 = arith.constant 0 : index
    %80 = vector.load %arg5[%c0_97, %c0_98, %c0_99] : memref<1x128x128xf32, #tpu.memory_space<vmem>>, vector<1x128x128xf32>
    %81 = vector.shape_cast %80 : vector<1x128x128xf32> to vector<128x128xf32>
    %82 = vector.shape_cast %79 : vector<128x128xf32> to vector<1x128x128xf32>
    tpu.vector_store %arg5[%c0_97, %c0_98, %c0_99], %82 {strides = array<i32>} : memref<1x128x128xf32, #tpu.memory_space<vmem>>, vector<1x128x128xf32>,
    return
  }
  func.func @transform_0(%arg0: i32) -> (i32, i32, i32) {
    %c0_i32 = arith.constant 0 : i32
    %c0_i32_0 = arith.constant 0 : i32
    %c0_i32_1 = arith.constant 0 : i32
    return %arg0, %c0_i32, %c0_i32_0 : i32, i32, i32
  }
  func.func @transform_1(%arg0: i32) -> (i32, i32, i32) {
    %c0_i32 = arith.constant 0 : i32
    %c0_i32_0 = arith.constant 0 : i32
    %c0_i32_1 = arith.constant 0 : i32
    %c0_i32_2 = arith.constant 0 : i32
    return %c0_i32, %c0_i32_0, %c0_i32_1 : i32, i32, i32
  }
  func.func @transform_2(%arg0: i32) -> (i32, i32) {
    %c0_i32 = arith.constant 0 : i32
    %c0_i32_0 = arith.constant 0 : i32
    %c0_i32_1 = arith.constant 0 : i32
    return %c0_i32, %c0_i32_0 : i32, i32
  }
  func.func @transform_3(%arg0: i32) -> (i32, i32, i32) {
    %c0_i32 = arith.constant 0 : i32
    %c0_i32_0 = arith.constant 0 : i32
    %c0_i32_1 = arith.constant 0 : i32
    return %arg0, %c0_i32, %c0_i32_0 : i32, i32, i32
  }
  func.func @transform_4(%arg0: i32) -> (i32, i32, i32) {
    %c0_i32 = arith.constant 0 : i32
    %c0_i32_0 = arith.constant 0 : i32
    %c0_i32_1 = arith.constant 0 : i32
    return %arg0, %c0_i32, %c0_i32_0 : i32, i32, i32
  }
}

</mosaic_0001>

<llo_original>
// kernel: _lambda_.3
$region0: #{_lambda_.3}
  #allocation0 [shape = 'u32[]', space=smem, size = 0x4, offset = 0x4, fixed_abs, tag = 'smem constant byte address 0x4 - core index']
  #allocation1 [shape = 'u32[72,128]{1,0:T(1,128)}', space=vmem, size = 0x9000, scoped, tag = 'internal scratch']
  #allocation2 [shape = 'f32[128,128]{1,0:T(8,128)}', space=vmem, size = 0x10000, scoped, tag = 'scratch operand']
  #allocation3 [shape = 'bf16[160,128]{1,0:T(8,128)(2,1)}', space=vmem, size = 0xa000, scoped, tag = 'scratch operand']
  %s0 = inlined_call_operand.vmem [shape: bf16[2,176,128], index: 0, kind: input, shape index: {}]
  %s1 = inlined_call_operand.vmem [shape: bf16[9,128,128], index: 1, kind: input, shape index: {}]
  %s2 = inlined_call_operand.vmem [shape: f32[1,128], index: 2, kind: input, shape index: {}]
  %s3 = inlined_call_operand.vmem [shape: bf16[2,128,128], index: 3, kind: input, shape index: {}]
  %s4 = inlined_call_operand.vmem [shape: f32[2,128,128], index: 4, kind: output, shape index: {}]
  %s5 = sld [smem:[#allocation0]]
  $region49: #{_lambda_.3} parent=0
    _
  %s7 = ssub.s32 1, %s5
  %s8 = scalar_select 0, %s7, %s5
  loop: start=0, step=1, limit=4
  $region2: #{_lambda_.3} parent=0 // loop_pre_header
    _
  $region3: #{_lambda_.3} parent=0 // loop_header
    %s10 = sphi 0, %s14
    %p11 = scmp.ge.s32.totalorder %s10, 4
    %s20 = sphi 0, %s22
    %s23 = sphi 0, %s20
    %s24 = sphi 0, %s23
    %s40 = sphi 0, %s24
    %s44 = sphi 0, %s44
    %s46 = sphi 0, %s44
    %s47 = sphi 0, %s46
    %s61 = sphi 0, %s47
    %s65 = sphi 0, %s65
    %s67 = sphi 0, %s65
    %s68 = sphi 0, %s67
    %s82 = sphi 0, %s68
    %s88 = sphi 0, %s90
    %s91 = sphi 0, %s88
    %s92 = sphi 0, %s91
    %s108 = sphi 0, %s92
    %s114 = sphi 0, %s116
    %s117 = sphi 0, %s114
    %s118 = sphi 0, %s117
    %s134 = sphi 0, %s118
  $region4: #{_lambda_.3} parent=0 // loop_header_branch
    %13 = sbr.rel (%p11) target = $region8
  $region5: #{_lambda_.3} parent=0 // loop_body
    %s15 = ssub.s32 %s10, 1
    %s16 = ssub.s32 %s10, 2
    %s17 = sadd.s32 %s10, 1
    %s18 = ssub.s32 %s10, %s17
    %p19 = scmp.eq.s32.totalorder %s18, 0
    %s21 = sadd.s32 %s20, 1
    %s22 = scalar_select %p19, %s20, %s21
    %p25 = pneg %p19
    %p26 = scmp.eq.s32.totalorder %s10, 1
    %p27 = por %p25, %p26
    %p28 = scmp.ne.s32.totalorder %s20, %s23
    %p29 = scmp.eq.s32.totalorder %s10, 0
    %p30 = por %p28, %p29
    %p31 = scmp.ne.s32.totalorder %s20, %s23
    %p32 = scmp.eq.s32.totalorder %s15, 1
    %p33 = por %p31, %p32
    %p34 = scmp.ne.s32.totalorder %s23, %s24
    %p35 = scmp.eq.s32.totalorder %s15, 0
    %p36 = por %p34, %p35
    %p37 = scmp.ne.s32.totalorder %s23, %s24
    %p38 = scmp.eq.s32.totalorder %s16, 1
    %p39 = por %p37, %p38
    %p41 = scmp.ne.s32.totalorder %s24, %s40
    %p42 = scmp.eq.s32.totalorder %s16, 0
    %p43 = por %p41, %p42
    %s45 = sadd.s32 %s44, 1
    %p48 = scmp.eq.s32.totalorder %s10, 1
    %p49 = scmp.ne.s32.totalorder %s44, %s46
    %p50 = scmp.eq.s32.totalorder %s10, 0
    %p51 = por %p49, %p50
    %p52 = scmp.ne.s32.totalorder %s44, %s46
    %p53 = scmp.eq.s32.totalorder %s15, 1
    %p54 = por %p52, %p53
    %p55 = scmp.ne.s32.totalorder %s46, %s47
    %p56 = scmp.eq.s32.totalorder %s15, 0
    %p57 = por %p55, %p56
    %p58 = scmp.ne.s32.totalorder %s46, %s47
    %p59 = scmp.eq.s32.totalorder %s16, 1
    %p60 = por %p58, %p59
    %p62 = scmp.ne.s32.totalorder %s47, %s61
    %p63 = scmp.eq.s32.totalorder %s16, 0
    %p64 = por %p62, %p63
    %s66 = sadd.s32 %s65, 1
    %p69 = scmp.eq.s32.totalorder %s10, 1
    %p70 = scmp.ne.s32.totalorder %s65, %s67
    %p71 = scmp.eq.s32.totalorder %s10, 0
    %p72 = por %p70, %p71
    %p73 = scmp.ne.s32.totalorder %s65, %s67
    %p74 = scmp.eq.s32.totalorder %s15, 1
    %p75 = por %p73, %p74
    %p76 = scmp.ne.s32.totalorder %s67, %s68
    %p77 = scmp.eq.s32.totalorder %s15, 0
    %p78 = por %p76, %p77
    %p79 = scmp.ne.s32.totalorder %s67, %s68
    %p80 = scmp.eq.s32.totalorder %s16, 1
    %p81 = por %p79, %p80
    %p83 = scmp.ne.s32.totalorder %s68, %s82
    %p84 = scmp.eq.s32.totalorder %s16, 0
    %p85 = por %p83, %p84
    %s86 = ssub.s32 %s10, %s17
    %p87 = scmp.eq.s32.totalorder %s86, 0
    %s89 = sadd.s32 %s88, 1
    %s90 = scalar_select %p87, %s88, %s89
    %p93 = pneg %p87
    %p94 = scmp.eq.s32.totalorder %s10, 1
    %p95 = por %p93, %p94
    %p96 = scmp.ne.s32.totalorder %s88, %s91
    %p97 = scmp.eq.s32.totalorder %s10, 0
    %p98 = por %p96, %p97
    %p99 = scmp.ne.s32.totalorder %s88, %s91
    %p100 = scmp.eq.s32.totalorder %s15, 1
    %p101 = por %p99, %p100
    %p102 = scmp.ne.s32.totalorder %s91, %s92
    %p103 = scmp.eq.s32.totalorder %s15, 0
    %p104 = por %p102, %p103
    %p105 = scmp.ne.s32.totalorder %s91, %s92
    %p106 = scmp.eq.s32.totalorder %s16, 1
    %p107 = por %p105, %p106
    %p109 = scmp.ne.s32.totalorder %s92, %s108
    %p110 = scmp.eq.s32.totalorder %s16, 0
    %p111 = por %p109, %p110
    %s112 = ssub.s32 %s10, %s17
    %p113 = scmp.eq.s32.totalorder %s112, 0
    %s115 = sadd.s32 %s114, 1
    %s116 = scalar_select %p113, %s114, %s115
    %p119 = pneg %p113
    %p120 = scmp.eq.s32.totalorder %s10, 1
    %p121 = por %p119, %p120
    %p122 = scmp.ne.s32.totalorder %s114, %s117
    %p123 = scmp.eq.s32.totalorder %s10, 0
    %p124 = por %p122, %p123
    %p125 = scmp.ne.s32.totalorder %s114, %s117
    %p126 = scmp.eq.s32.totalorder %s15, 1
    %p127 = por %p125, %p126
    %p128 = scmp.ne.s32.totalorder %s117, %s118
    %p129 = scmp.eq.s32.totalorder %s15, 0
    %p130 = por %p128, %p129
    %p131 = scmp.ne.s32.totalorder %s117, %s118
    %p132 = scmp.eq.s32.totalorder %s16, 1
    %p133 = por %p131, %p132
    %p135 = scmp.ne.s32.totalorder %s118, %s134
    %p136 = scmp.eq.s32.totalorder %s16, 0
    %p137 = por %p135, %p136
    %p138 = scmp.le.s32.totalorder 1, %s10
    %p139 = scmp.lt.s32.totalorder %s10, 3
    %p140 = pnand %p138, %p139
    %p141 = pneg %p140
    // Predicated region
    $region9: #{_lambda_.3} parent=5 // pred_check
      _
    $region10: #{_lambda_.3} parent=5 // pred_check_branch
      %143 = sbr.rel (%p140) target = $region12
    $region11: #{_lambda_.3} parent=5 // pred_region
      %s144 = ssub.s32 %s10, 1
      // Predicated region
      $region13: #{_lambda_.3} parent=11 // pred_check
        %p145 = pneg %p57
      $region14: #{_lambda_.3} parent=11 // pred_check_branch
        %147 = sbr.rel (%p145) target = $region16
      $region15: #{_lambda_.3} parent=11 // pred_region
        _
      $region16: #{_lambda_.3} parent=11 // pred_fallthru
        _
      // Predicated region
      $region17: #{_lambda_.3} parent=11 // pred_check
        %p148 = pneg %p78
      $region18: #{_lambda_.3} parent=11 // pred_check_branch
        %150 = sbr.rel (%p148) target = $region20
      $region19: #{_lambda_.3} parent=11 // pred_region
        _
      $region20: #{_lambda_.3} parent=11 // pred_fallthru
        _
    $region12: #{_lambda_.3} parent=5 // pred_fallthru
      _
    %p151 = scmp.lt.s32.totalorder %s10, 2
    // Predicated region
    $region21: #{_lambda_.3} parent=5 // pred_check
      %p152 = pneg %p151
    $region22: #{_lambda_.3} parent=5 // pred_check_branch
      %154 = sbr.rel (%p152) target = $region24
    $region23: #{_lambda_.3} parent=5 // pred_region
      // Predicated region
      $region25: #{_lambda_.3} parent=23 // pred_check
        %p155 = pneg %p30
      $region26: #{_lambda_.3} parent=23 // pred_check_branch
        %157 = sbr.rel (%p155) target = $region28
      $region27: #{_lambda_.3} parent=23 // pred_region
        %p158 = scmp.lt.s32.totalorder %s10, 1
        %s159 = scalar_select %p158, %s10, 1
        %s160 = smul.addr %s159, 22
        %s161 = smul.addr %s160, 4
        %s162 = scalar_lea.vmem %s0, %s161
      $region28: #{_lambda_.3} parent=23 // pred_fallthru
        _
      // Predicated region
      $region29: #{_lambda_.3} parent=23 // pred_check
        %p163 = pneg %p98
      $region30: #{_lambda_.3} parent=23 // pred_check_branch
        %165 = sbr.rel (%p163) target = $region32
      $region31: #{_lambda_.3} parent=23 // pred_region
        %p166 = scmp.lt.s32.totalorder %s10, 1
        %s167 = scalar_select %p166, %s10, 1
        %s168 = smul.addr %s167, 16
        %s169 = smul.addr %s168, 4
        %s170 = scalar_lea.vmem %s3, %s169
      $region32: #{_lambda_.3} parent=23 // pred_fallthru
        _
    $region24: #{_lambda_.3} parent=5 // pred_fallthru
      _
    %p171 = scmp.le.s32.totalorder 1, %s10
    %p172 = scmp.lt.s32.totalorder %s10, 3
    %p173 = pnand %p171, %p172
    %p174 = pneg %p173
    // Predicated region
    $region33: #{_lambda_.3} parent=5 // pred_check
      _
    $region34: #{_lambda_.3} parent=5 // pred_check_branch
      %176 = sbr.rel (%p173) target = $region36
    $region35: #{_lambda_.3} parent=5 // pred_region
      %s177 = ssub.s32 %s10, 1
      %p178 = scmp.lt.s32.totalorder %s15, 1
      %s179 = scalar_select %p178, %s15, 1
      %s180 = smul.addr %s179, 22
      %s181 = smul.addr %s180, 4
      %s182 = scalar_lea.vmem %s0, %s181
      %p183 = pneg %p36
      %p184 = pneg %p33
      %p185 = pneg %p57
      %p186 = pneg %p54
      %p187 = pneg %p78
      %p188 = pneg %p75
      %p189 = scmp.lt.s32.totalorder %s15, 1
      %s190 = scalar_select %p189, %s15, 1
      %s191 = smul.addr %s190, 16
      %s192 = smul.addr %s191, 4
      %s193 = scalar_lea.vmem %s3, %s192
      %p194 = pneg %p104
      %p195 = pneg %p101
      %p196 = pneg %p130
      %p197 = pneg %p127
      %p198 = scmp.lt.s32.totalorder %s15, 1
      %s199 = scalar_select %p198, %s15, 1
      %s200 = smul.addr %s199, 16
      %s201 = smul.addr %s200, 8
      %s202 = scalar_lea.vmem %s4, %s201
      %p203 = scmp.lt.s32.totalorder %s15, 1
      %s204 = scalar_select %p203, %s15, 1
      %s205 = smul.addr %s204, 22
      %s206 = smul.addr %s205, 4
      %s207 = scalar_lea.vmem %s0, %s206
      %p208 = scmp.lt.s32.totalorder %s15, 1
      %s209 = scalar_select %p208, %s15, 1
      %s210 = smul.addr %s209, 16
      %s211 = smul.addr %s210, 4
      %s212 = scalar_lea.vmem %s3, %s211
      %p213 = scmp.lt.s32.totalorder %s15, 1
      %s214 = scalar_select %p213, %s15, 1
      %s215 = smul.addr %s214, 16
      %s216 = smul.addr %s215, 8
      %s217 = scalar_lea.vmem %s4, %s216
      %v218 = vld [vmem:[%s207] sm:$0xf]
      %v219 = vld [vmem:[%s207 + $0x4] sm:$0xf]
      %v220 = vld [vmem:[%s207 + $0x8] sm:$0xf]
      %v221 = vld [vmem:[%s207 + $0xc] sm:$0xf]
      %v222 = vld [vmem:[%s207 + $0x10] sm:$0xf]
      %v223 = vld [vmem:[%s207 + $0x14] sm:$0xf]
      %v224 = vld [vmem:[%s207 + $0x18] sm:$0xf]
      %v225 = vld [vmem:[%s207 + $0x1c] sm:$0xf]
      %v226 = vld [vmem:[%s207 + $0x20] sm:$0xf]
      %v227 = vld [vmem:[%s207 + $0x24] sm:$0xf]
      %v228 = vld [vmem:[%s207 + $0x28] sm:$0xf]
      %v229 = vld [vmem:[%s207 + $0x2c] sm:$0xf]
      %v230 = vld [vmem:[%s207 + $0x30] sm:$0xf]
      %v231 = vld [vmem:[%s207 + $0x34] sm:$0xf]
      %v232 = vld [vmem:[%s207 + $0x38] sm:$0xf]
      %v233 = vld [vmem:[%s207 + $0x3c] sm:$0xf]
      %v234 = vld [vmem:[%s1] sm:$0xf]
      %v235 = vld [vmem:[%s1 + $0x4] sm:$0xf]
      %v236 = vld [vmem:[%s1 + $0x8] sm:$0xf]
      %v237 = vld [vmem:[%s1 + $0xc] sm:$0xf]
      %v238 = vld [vmem:[%s1 + $0x10] sm:$0xf]
      %v239 = vld [vmem:[%s1 + $0x14] sm:$0xf]
      %v240 = vld [vmem:[%s1 + $0x18] sm:$0xf]
      %v241 = vld [vmem:[%s1 + $0x1c] sm:$0xf]
      %v242 = vld [vmem:[%s1 + $0x20] sm:$0xf]
      %v243 = vld [vmem:[%s1 + $0x24] sm:$0xf]
      %v244 = vld [vmem:[%s1 + $0x28] sm:$0xf]
      %v245 = vld [vmem:[%s1 + $0x2c] sm:$0xf]
      %v246 = vld [vmem:[%s1 + $0x30] sm:$0xf]
      %v247 = vld [vmem:[%s1 + $0x34] sm:$0xf]
      %v248 = vld [vmem:[%s1 + $0x38] sm:$0xf]
      %v249 = vld [vmem:[%s1 + $0x3c] sm:$0xf]
      %v266 = vunpack.c.l.b16 %v218
      %v267 = vunpack.c.l.b16 %v219
      %v268 = vunpack.c.l.b16 %v220
      %v269 = vunpack.c.l.b16 %v221
      %v270 = vunpack.c.l.b16 %v222
      %v271 = vunpack.c.l.b16 %v223
      %v272 = vunpack.c.l.b16 %v224
      %v273 = vunpack.c.l.b16 %v225
      %v274 = vunpack.c.l.b16 %v226
      %v275 = vunpack.c.l.b16 %v227
      %v276 = vunpack.c.l.b16 %v228
      %v277 = vunpack.c.l.b16 %v229
      %v278 = vunpack.c.l.b16 %v230
      %v279 = vunpack.c.l.b16 %v231
      %v280 = vunpack.c.l.b16 %v232
      %v281 = vunpack.c.l.b16 %v233
      %v282 = vpack.c.b16 %v267, %v266
      %v283 = vpack.c.b16 %v269, %v268
      %v284 = vpack.c.b16 %v271, %v270
      %v285 = vpack.c.b16 %v273, %v272
      %v286 = vpack.c.b16 %v275, %v274
      %v287 = vpack.c.b16 %v277, %v276
      %v288 = vpack.c.b16 %v279, %v278
      %v289 = vpack.c.b16 %v281, %v280
      %v314 = vunpack.c.l.b16 %v234
      %v315 = vunpack.c.l.b16 %v235
      %v316 = vunpack.c.l.b16 %v236
      %v317 = vunpack.c.l.b16 %v237
      %v318 = vunpack.c.l.b16 %v238
      %v319 = vunpack.c.l.b16 %v239
      %v320 = vunpack.c.l.b16 %v240
      %v321 = vunpack.c.l.b16 %v241
      %v322 = vunpack.c.l.b16 %v242
      %v323 = vunpack.c.l.b16 %v243
      %v324 = vunpack.c.l.b16 %v244
      %v325 = vunpack.c.l.b16 %v245
      %v326 = vunpack.c.l.b16 %v246
      %v327 = vunpack.c.l.b16 %v247
      %v328 = vunpack.c.l.b16 %v248
      %v329 = vunpack.c.l.b16 %v249
      %v330 = vpack.c.b16 %v315, %v314
      %v331 = vpack.c.b16 %v317, %v316
      %v332 = vpack.c.b16 %v319, %v318
      %v333 = vpack.c.b16 %v321, %v320
      %v334 = vpack.c.b16 %v323, %v322
      %v335 = vpack.c.b16 %v325, %v324
      %v336 = vpack.c.b16 %v327, %v326
      %v337 = vpack.c.b16 %v329, %v328
      %346 = vmatpush.bf16.msra.mxu0 %v337
      %347 = vmatpush.bf16.msra.mxu0 %v336
      %348 = vmatpush.bf16.msra.mxu0 %v335
      %349 = vmatpush.bf16.msra.mxu0 %v334
      %350 = vmatpush.bf16.msra.mxu0 %v333
      %351 = vmatpush.bf16.msra.mxu0 %v332
      %352 = vmatpush.bf16.msra.mxu0 %v331
      %353 = vmatpush.bf16.msra.mxu0 %v330
      %354 = vmatmul.bf16.gmra.mxu0 %v282
      %v355 = vpop.f32.mrf.mxu0
      %v356 = vadd.f32 0.0, %v355
      %v357 = vpop.f32.mrf.mxu0
      %v358 = vadd.f32 0.0, %v357
      %359 = vmatmul.bf16.gmra.mxu0 %v283
      %v360 = vpop.f32.mrf.mxu0
      %v361 = vadd.f32 0.0, %v360
      %v362 = vpop.f32.mrf.mxu0
      %v363 = vadd.f32 0.0, %v362
      %364 = vmatmul.bf16.gmra.mxu0 %v284
      %v365 = vpop.f32.mrf.mxu0
      %v366 = vadd.f32 0.0, %v365
      %v367 = vpop.f32.mrf.mxu0
      %v368 = vadd.f32 0.0, %v367
      %369 = vmatmul.bf16.gmra.mxu0 %v285
      %v370 = vpop.f32.mrf.mxu0
      %v371 = vadd.f32 0.0, %v370
      %v372 = vpop.f32.mrf.mxu0
      %v373 = vadd.f32 0.0, %v372
      %374 = vmatmul.bf16.gmra.mxu0 %v286
      %v375 = vpop.f32.mrf.mxu0
      %v376 = vadd.f32 0.0, %v375
      %v377 = vpop.f32.mrf.mxu0
      %v378 = vadd.f32 0.0, %v377
      %379 = vmatmul.bf16.gmra.mxu0 %v287
      %v380 = vpop.f32.mrf.mxu0
      %v381 = vadd.f32 0.0, %v380
      %v382 = vpop.f32.mrf.mxu0
      %v383 = vadd.f32 0.0, %v382
      %384 = vmatmul.bf16.gmra.mxu0 %v288
      %v385 = vpop.f32.mrf.mxu0
      %v386 = vadd.f32 0.0, %v385
      %v387 = vpop.f32.mrf.mxu0
      %v388 = vadd.f32 0.0, %v387
      %389 = vmatmul.bf16.gmra.mxu0 %v289
      %v390 = vpop.f32.mrf.mxu0
      %v391 = vadd.f32 0.0, %v390
      %v392 = vpop.f32.mrf.mxu0
      %v393 = vadd.f32 0.0, %v392
      %394 = vdwg.mxu0
      %395 = vst [vmem:[#allocation2] sm:$0xff] %v356
      %396 = vst [vmem:[#allocation2 + $0x8] sm:$0xff] %v358
      %397 = vst [vmem:[#allocation2 + $0x10] sm:$0xff] %v361
      %398 = vst [vmem:[#allocation2 + $0x18] sm:$0xff] %v363
      %399 = vst [vmem:[#allocation2 + $0x20] sm:$0xff] %v366
      %400 = vst [vmem:[#allocation2 + $0x28] sm:$0xff] %v368
      %401 = vst [vmem:[#allocation2 + $0x30] sm:$0xff] %v371
      %402 = vst [vmem:[#allocation2 + $0x38] sm:$0xff] %v373
      %403 = vst [vmem:[#allocation2 + $0x40] sm:$0xff] %v376
      %404 = vst [vmem:[#allocation2 + $0x48] sm:$0xff] %v378
      %405 = vst [vmem:[#allocation2 + $0x50] sm:$0xff] %v381
      %406 = vst [vmem:[#allocation2 + $0x58] sm:$0xff] %v383
      %407 = vst [vmem:[#allocation2 + $0x60] sm:$0xff] %v386
      %408 = vst [vmem:[#allocation2 + $0x68] sm:$0xff] %v388
      %409 = vst [vmem:[#allocation2 + $0x70] sm:$0xff] %v391
      %410 = vst [vmem:[#allocation2 + $0x78] sm:$0xff] %v393
      %v411 = vld [vmem:[%s207 + $0x8] sm:$0xf]
      %v412 = vld [vmem:[%s207 + $0xc] sm:$0xf]
      %v413 = vld [vmem:[%s207 + $0x10] sm:$0xf]
      %v414 = vld [vmem:[%s207 + $0x14] sm:$0xf]
      %v415 = vld [vmem:[%s207 + $0x18] sm:$0xf]
      %v416 = vld [vmem:[%s207 + $0x1c] sm:$0xf]
      %v417 = vld [vmem:[%s207 + $0x20] sm:$0xf]
      %v418 = vld [vmem:[%s207 + $0x24] sm:$0xf]
      %v419 = vld [vmem:[%s207 + $0x28] sm:$0xf]
      %v420 = vld [vmem:[%s207 + $0x2c] sm:$0xf]
      %v421 = vld [vmem:[%s207 + $0x30] sm:$0xf]
      %v422 = vld [vmem:[%s207 + $0x34] sm:$0xf]
      %v423 = vld [vmem:[%s207 + $0x38] sm:$0xf]
      %v424 = vld [vmem:[%s207 + $0x3c] sm:$0xf]
      %v425 = vld [vmem:[%s207 + $0x40] sm:$0xf]
      %v426 = vld [vmem:[%s207 + $0x44] sm:$0xf]
      %s427 = scalar_lea.vmem %s1, 192
      %v428 = vld [vmem:[%s427] sm:$0xf]
      %v429 = vld [vmem:[%s427 + $0x4] sm:$0xf]
      %v430 = vld [vmem:[%s427 + $0x8] sm:$0xf]
      %v431 = vld [vmem:[%s427 + $0xc] sm:$0xf]
      %v432 = vld [vmem:[%s427 + $0x10] sm:$0xf]
      %v433 = vld [vmem:[%s427 + $0x14] sm:$0xf]
      %v434 = vld [vmem:[%s427 + $0x18] sm:$0xf]
      %v435 = vld [vmem:[%s427 + $0x1c] sm:$0xf]
      %v436 = vld [vmem:[%s427 + $0x20] sm:$0xf]
      %v437 = vld [vmem:[%s427 + $0x24] sm:$0xf]
      %v438 = vld [vmem:[%s427 + $0x28] sm:$0xf]
      %v439 = vld [vmem:[%s427 + $0x2c] sm:$0xf]
      %v440 = vld [vmem:[%s427 + $0x30] sm:$0xf]
      %v441 = vld [vmem:[%s427 + $0x34] sm:$0xf]
      %v442 = vld [vmem:[%s427 + $0x38] sm:$0xf]
      %v443 = vld [vmem:[%s427 + $0x3c] sm:$0xf]
      %v460 = vunpack.c.l.b16 %v411
      %v461 = vunpack.c.l.b16 %v412
      %v462 = vunpack.c.l.b16 %v413
      %v463 = vunpack.c.l.b16 %v414
      %v464 = vunpack.c.l.b16 %v415
      %v465 = vunpack.c.l.b16 %v416
      %v466 = vunpack.c.l.b16 %v417
      %v467 = vunpack.c.l.b16 %v418
      %v468 = vunpack.c.l.b16 %v419
      %v469 = vunpack.c.l.b16 %v420
      %v470 = vunpack.c.l.b16 %v421
      %v471 = vunpack.c.l.b16 %v422
      %v472 = vunpack.c.l.b16 %v423
      %v473 = vunpack.c.l.b16 %v424
      %v474 = vunpack.c.l.b16 %v425
      %v475 = vunpack.c.l.b16 %v426
      %v476 = vpack.c.b16 %v461, %v460
      %v477 = vpack.c.b16 %v463, %v462
      %v478 = vpack.c.b16 %v465, %v464
      %v479 = vpack.c.b16 %v467, %v466
      %v480 = vpack.c.b16 %v469, %v468
      %v481 = vpack.c.b16 %v471, %v470
      %v482 = vpack.c.b16 %v473, %v472
      %v483 = vpack.c.b16 %v475, %v474
      %v508 = vunpack.c.l.b16 %v428
      %v509 = vunpack.c.l.b16 %v429
      %v510 = vunpack.c.l.b16 %v430
      %v511 = vunpack.c.l.b16 %v431
      %v512 = vunpack.c.l.b16 %v432
      %v513 = vunpack.c.l.b16 %v433
      %v514 = vunpack.c.l.b16 %v434
      %v515 = vunpack.c.l.b16 %v435
      %v516 = vunpack.c.l.b16 %v436
      %v517 = vunpack.c.l.b16 %v437
      %v518 = vunpack.c.l.b16 %v438
      %v519 = vunpack.c.l.b16 %v439
      %v520 = vunpack.c.l.b16 %v440
      %v521 = vunpack.c.l.b16 %v441
      %v522 = vunpack.c.l.b16 %v442
      %v523 = vunpack.c.l.b16 %v443
      %v524 = vpack.c.b16 %v509, %v508
      %v525 = vpack.c.b16 %v511, %v510
      %v526 = vpack.c.b16 %v513, %v512
      %v527 = vpack.c.b16 %v515, %v514
      %v528 = vpack.c.b16 %v517, %v516
      %v529 = vpack.c.b16 %v519, %v518
      %v530 = vpack.c.b16 %v521, %v520
      %v531 = vpack.c.b16 %v523, %v522
      %540 = vmatpush.bf16.msra.mxu0 %v531
      %541 = vmatpush.bf16.msra.mxu0 %v530
      %542 = vmatpush.bf16.msra.mxu0 %v529
      %543 = vmatpush.bf16.msra.mxu0 %v528
      %544 = vmatpush.bf16.msra.mxu0 %v527
      %545 = vmatpush.bf16.msra.mxu0 %v526
      %546 = vmatpush.bf16.msra.mxu0 %v525
      %547 = vmatpush.bf16.msra.mxu0 %v524
      %548 = vmatmul.bf16.gmra.mxu0 %v476
      %v549 = vpop.f32.mrf.mxu0
      %v550 = vadd.f32 0.0, %v549
      %v551 = vpop.f32.mrf.mxu0
      %v552 = vadd.f32 0.0, %v551
      %553 = vmatmul.bf16.gmra.mxu0 %v477
      %v554 = vpop.f32.mrf.mxu0
      %v555 = vadd.f32 0.0, %v554
      %v556 = vpop.f32.mrf.mxu0
      %v557 = vadd.f32 0.0, %v556
      %558 = vmatmul.bf16.gmra.mxu0 %v478
      %v559 = vpop.f32.mrf.mxu0
      %v560 = vadd.f32 0.0, %v559
      %v561 = vpop.f32.mrf.mxu0
      %v562 = vadd.f32 0.0, %v561
      %563 = vmatmul.bf16.gmra.mxu0 %v479
      %v564 = vpop.f32.mrf.mxu0
      %v565 = vadd.f32 0.0, %v564
      %v566 = vpop.f32.mrf.mxu0
      %v567 = vadd.f32 0.0, %v566
      %568 = vmatmul.bf16.gmra.mxu0 %v480
      %v569 = vpop.f32.mrf.mxu0
      %v570 = vadd.f32 0.0, %v569
      %v571 = vpop.f32.mrf.mxu0
      %v572 = vadd.f32 0.0, %v571
      %573 = vmatmul.bf16.gmra.mxu0 %v481
      %v574 = vpop.f32.mrf.mxu0
      %v575 = vadd.f32 0.0, %v574
      %v576 = vpop.f32.mrf.mxu0
      %v577 = vadd.f32 0.0, %v576
      %578 = vmatmul.bf16.gmra.mxu0 %v482
      %v579 = vpop.f32.mrf.mxu0
      %v580 = vadd.f32 0.0, %v579
      %v581 = vpop.f32.mrf.mxu0
      %v582 = vadd.f32 0.0, %v581
      %583 = vmatmul.bf16.gmra.mxu0 %v483
      %v584 = vpop.f32.mrf.mxu0
      %v585 = vadd.f32 0.0, %v584
      %v586 = vpop.f32.mrf.mxu0
      %v587 = vadd.f32 0.0, %v586
      %588 = vdwg.mxu0
      %v589 = vld [vmem:[#allocation2] sm:$0xff]
      %v590 = vld [vmem:[#allocation2 + $0x8] sm:$0xff]
      %v591 = vld [vmem:[#allocation2 + $0x10] sm:$0xff]
      %v592 = vld [vmem:[#allocation2 + $0x18] sm:$0xff]
      %v593 = vld [vmem:[#allocation2 + $0x20] sm:$0xff]
      %v594 = vld [vmem:[#allocation2 + $0x28] sm:$0xff]
      %v595 = vld [vmem:[#allocation2 + $0x30] sm:$0xff]
      %v596 = vld [vmem:[#allocation2 + $0x38] sm:$0xff]
      %v597 = vld [vmem:[#allocation2 + $0x40] sm:$0xff]
      %v598 = vld [vmem:[#allocation2 + $0x48] sm:$0xff]
      %v599 = vld [vmem:[#allocation2 + $0x50] sm:$0xff]
      %v600 = vld [vmem:[#allocation2 + $0x58] sm:$0xff]
      %v601 = vld [vmem:[#allocation2 + $0x60] sm:$0xff]
      %v602 = vld [vmem:[#allocation2 + $0x68] sm:$0xff]
      %v603 = vld [vmem:[#allocation2 + $0x70] sm:$0xff]
      %v604 = vld [vmem:[#allocation2 + $0x78] sm:$0xff]
      %v605 = vadd.f32 %v589, %v550
      %v606 = vadd.f32 %v590, %v552
      %v607 = vadd.f32 %v591, %v555
      %v608 = vadd.f32 %v592, %v557
      %v609 = vadd.f32 %v593, %v560
      %v610 = vadd.f32 %v594, %v562
      %v611 = vadd.f32 %v595, %v565
      %v612 = vadd.f32 %v596, %v567
      %v613 = vadd.f32 %v597, %v570
      %v614 = vadd.f32 %v598, %v572
      %v615 = vadd.f32 %v599, %v575
      %v616 = vadd.f32 %v600, %v577
      %v617 = vadd.f32 %v601, %v580
      %v618 = vadd.f32 %v602, %v582
      %v619 = vadd.f32 %v603, %v585
      %v620 = vadd.f32 %v604, %v587
      %621 = vst [vmem:[#allocation2] sm:$0xff] %v605
      %622 = vst [vmem:[#allocation2 + $0x8] sm:$0xff] %v606
      %623 = vst [vmem:[#allocation2 + $0x10] sm:$0xff] %v607
      %624 = vst [vmem:[#allocation2 + $0x18] sm:$0xff] %v608
      %625 = vst [vmem:[#allocation2 + $0x20] sm:$0xff] %v609
      %626 = vst [vmem:[#allocation2 + $0x28] sm:$0xff] %v610
      %627 = vst [vmem:[#allocation2 + $0x30] sm:$0xff] %v611
      %628 = vst [vmem:[#allocation2 + $0x38] sm:$0xff] %v612
      %629 = vst [vmem:[#allocation2 + $0x40] sm:$0xff] %v613
      %630 = vst [vmem:[#allocation2 + $0x48] sm:$0xff] %v614
      %631 = vst [vmem:[#allocation2 + $0x50] sm:$0xff] %v615
      %632 = vst [vmem:[#allocation2 + $0x58] sm:$0xff] %v616
      %633 = vst [vmem:[#allocation2 + $0x60] sm:$0xff] %v617
      %634 = vst [vmem:[#allocation2 + $0x68] sm:$0xff] %v618
      %635 = vst [vmem:[#allocation2 + $0x70] sm:$0xff] %v619
      %636 = vst [vmem:[#allocation2 + $0x78] sm:$0xff] %v620
      %v637 = vld [vmem:[%s207 + $0x10] sm:$0xf]
      %v638 = vld [vmem:[%s207 + $0x14] sm:$0xf]
      %v639 = vld [vmem:[%s207 + $0x18] sm:$0xf]
      %v640 = vld [vmem:[%s207 + $0x1c] sm:$0xf]
      %v641 = vld [vmem:[%s207 + $0x20] sm:$0xf]
      %v642 = vld [vmem:[%s207 + $0x24] sm:$0xf]
      %v643 = vld [vmem:[%s207 + $0x28] sm:$0xf]
      %v644 = vld [vmem:[%s207 + $0x2c] sm:$0xf]
      %v645 = vld [vmem:[%s207 + $0x30] sm:$0xf]
      %v646 = vld [vmem:[%s207 + $0x34] sm:$0xf]
      %v647 = vld [vmem:[%s207 + $0x38] sm:$0xf]
      %v648 = vld [vmem:[%s207 + $0x3c] sm:$0xf]
      %v649 = vld [vmem:[%s207 + $0x40] sm:$0xf]
      %v650 = vld [vmem:[%s207 + $0x44] sm:$0xf]
      %v651 = vld [vmem:[%s207 + $0x48] sm:$0xf]
      %v652 = vld [vmem:[%s207 + $0x4c] sm:$0xf]
      %s653 = scalar_lea.vmem %s1, 384
      %v654 = vld [vmem:[%s653] sm:$0xf]
      %v655 = vld [vmem:[%s653 + $0x4] sm:$0xf]
      %v656 = vld [vmem:[%s653 + $0x8] sm:$0xf]
      %v657 = vld [vmem:[%s653 + $0xc] sm:$0xf]
      %v658 = vld [vmem:[%s653 + $0x10] sm:$0xf]
      %v659 = vld [vmem:[%s653 + $0x14] sm:$0xf]
      %v660 = vld [vmem:[%s653 + $0x18] sm:$0xf]
      %v661 = vld [vmem:[%s653 + $0x1c] sm:$0xf]
      %v662 = vld [vmem:[%s653 + $0x20] sm:$0xf]
      %v663 = vld [vmem:[%s653 + $0x24] sm:$0xf]
      %v664 = vld [vmem:[%s653 + $0x28] sm:$0xf]
      %v665 = vld [vmem:[%s653 + $0x2c] sm:$0xf]
      %v666 = vld [vmem:[%s653 + $0x30] sm:$0xf]
      %v667 = vld [vmem:[%s653 + $0x34] sm:$0xf]
      %v668 = vld [vmem:[%s653 + $0x38] sm:$0xf]
      %v669 = vld [vmem:[%s653 + $0x3c] sm:$0xf]
      %v686 = vunpack.c.l.b16 %v637
      %v687 = vunpack.c.l.b16 %v638
      %v688 = vunpack.c.l.b16 %v639
      %v689 = vunpack.c.l.b16 %v640
      %v690 = vunpack.c.l.b16 %v641
      %v691 = vunpack.c.l.b16 %v642
      %v692 = vunpack.c.l.b16 %v643
      %v693 = vunpack.c.l.b16 %v644
      %v694 = vunpack.c.l.b16 %v645
      %v695 = vunpack.c.l.b16 %v646
      %v696 = vunpack.c.l.b16 %v647
      %v697 = vunpack.c.l.b16 %v648
      %v698 = vunpack.c.l.b16 %v649
      %v699 = vunpack.c.l.b16 %v650
      %v700 = vunpack.c.l.b16 %v651
      %v701 = vunpack.c.l.b16 %v652
      %v702 = vpack.c.b16 %v687, %v686
      %v703 = vpack.c.b16 %v689, %v688
      %v704 = vpack.c.b16 %v691, %v690
      %v705 = vpack.c.b16 %v693, %v692
      %v706 = vpack.c.b16 %v695, %v694
      %v707 = vpack.c.b16 %v697, %v696
      %v708 = vpack.c.b16 %v699, %v698
      %v709 = vpack.c.b16 %v701, %v700
      %v734 = vunpack.c.l.b16 %v654
      %v735 = vunpack.c.l.b16 %v655
      %v736 = vunpack.c.l.b16 %v656
      %v737 = vunpack.c.l.b16 %v657
      %v738 = vunpack.c.l.b16 %v658
      %v739 = vunpack.c.l.b16 %v659
      %v740 = vunpack.c.l.b16 %v660
      %v741 = vunpack.c.l.b16 %v661
      %v742 = vunpack.c.l.b16 %v662
      %v743 = vunpack.c.l.b16 %v663
      %v744 = vunpack.c.l.b16 %v664
      %v745 = vunpack.c.l.b16 %v665
      %v746 = vunpack.c.l.b16 %v666
      %v747 = vunpack.c.l.b16 %v667
      %v748 = vunpack.c.l.b16 %v668
      %v749 = vunpack.c.l.b16 %v669
      %v750 = vpack.c.b16 %v735, %v734
      %v751 = vpack.c.b16 %v737, %v736
      %v752 = vpack.c.b16 %v739, %v738
      %v753 = vpack.c.b16 %v741, %v740
      %v754 = vpack.c.b16 %v743, %v742
      %v755 = vpack.c.b16 %v745, %v744
      %v756 = vpack.c.b16 %v747, %v746
      %v757 = vpack.c.b16 %v749, %v748
      %766 = vmatpush.bf16.msra.mxu0 %v757
      %767 = vmatpush.bf16.msra.mxu0 %v756
      %768 = vmatpush.bf16.msra.mxu0 %v755
      %769 = vmatpush.bf16.msra.mxu0 %v754
      %770 = vmatpush.bf16.msra.mxu0 %v753
      %771 = vmatpush.bf16.msra.mxu0 %v752
      %772 = vmatpush.bf16.msra.mxu0 %v751
      %773 = vmatpush.bf16.msra.mxu0 %v750
      %774 = vmatmul.bf16.gmra.mxu0 %v702
      %v775 = vpop.f32.mrf.mxu0
      %v776 = vadd.f32 0.0, %v775
      %v777 = vpop.f32.mrf.mxu0
      %v778 = vadd.f32 0.0, %v777
      %779 = vmatmul.bf16.gmra.mxu0 %v703
      %v780 = vpop.f32.mrf.mxu0
      %v781 = vadd.f32 0.0, %v780
      %v782 = vpop.f32.mrf.mxu0
      %v783 = vadd.f32 0.0, %v782
      %784 = vmatmul.bf16.gmra.mxu0 %v704
      %v785 = vpop.f32.mrf.mxu0
      %v786 = vadd.f32 0.0, %v785
      %v787 = vpop.f32.mrf.mxu0
      %v788 = vadd.f32 0.0, %v787
      %789 = vmatmul.bf16.gmra.mxu0 %v705
      %v790 = vpop.f32.mrf.mxu0
      %v791 = vadd.f32 0.0, %v790
      %v792 = vpop.f32.mrf.mxu0
      %v793 = vadd.f32 0.0, %v792
      %794 = vmatmul.bf16.gmra.mxu0 %v706
      %v795 = vpop.f32.mrf.mxu0
      %v796 = vadd.f32 0.0, %v795
      %v797 = vpop.f32.mrf.mxu0
      %v798 = vadd.f32 0.0, %v797
      %799 = vmatmul.bf16.gmra.mxu0 %v707
      %v800 = vpop.f32.mrf.mxu0
      %v801 = vadd.f32 0.0, %v800
      %v802 = vpop.f32.mrf.mxu0
      %v803 = vadd.f32 0.0, %v802
      %804 = vmatmul.bf16.gmra.mxu0 %v708
      %v805 = vpop.f32.mrf.mxu0
      %v806 = vadd.f32 0.0, %v805
      %v807 = vpop.f32.mrf.mxu0
      %v808 = vadd.f32 0.0, %v807
      %809 = vmatmul.bf16.gmra.mxu0 %v709
      %v810 = vpop.f32.mrf.mxu0
      %v811 = vadd.f32 0.0, %v810
      %v812 = vpop.f32.mrf.mxu0
      %v813 = vadd.f32 0.0, %v812
      %814 = vdwg.mxu0
      %v815 = vld [vmem:[#allocation2] sm:$0xff]
      %v816 = vld [vmem:[#allocation2 + $0x8] sm:$0xff]
      %v817 = vld [vmem:[#allocation2 + $0x10] sm:$0xff]
      %v818 = vld [vmem:[#allocation2 + $0x18] sm:$0xff]
      %v819 = vld [vmem:[#allocation2 + $0x20] sm:$0xff]
      %v820 = vld [vmem:[#allocation2 + $0x28] sm:$0xff]
      %v821 = vld [vmem:[#allocation2 + $0x30] sm:$0xff]
      %v822 = vld [vmem:[#allocation2 + $0x38] sm:$0xff]
      %v823 = vld [vmem:[#allocation2 + $0x40] sm:$0xff]
      %v824 = vld [vmem:[#allocation2 + $0x48] sm:$0xff]
      %v825 = vld [vmem:[#allocation2 + $0x50] sm:$0xff]
      %v826 = vld [vmem:[#allocation2 + $0x58] sm:$0xff]
      %v827 = vld [vmem:[#allocation2 + $0x60] sm:$0xff]
      %v828 = vld [vmem:[#allocation2 + $0x68] sm:$0xff]
      %v829 = vld [vmem:[#allocation2 + $0x70] sm:$0xff]
      %v830 = vld [vmem:[#allocation2 + $0x78] sm:$0xff]
      %v831 = vadd.f32 %v815, %v776
      %v832 = vadd.f32 %v816, %v778
      %v833 = vadd.f32 %v817, %v781
      %v834 = vadd.f32 %v818, %v783
      %v835 = vadd.f32 %v819, %v786
      %v836 = vadd.f32 %v820, %v788
      %v837 = vadd.f32 %v821, %v791
      %v838 = vadd.f32 %v822, %v793
      %v839 = vadd.f32 %v823, %v796
      %v840 = vadd.f32 %v824, %v798
      %v841 = vadd.f32 %v825, %v801
      %v842 = vadd.f32 %v826, %v803
      %v843 = vadd.f32 %v827, %v806
      %v844 = vadd.f32 %v828, %v808
      %v845 = vadd.f32 %v829, %v811
      %v846 = vadd.f32 %v830, %v813
      %847 = vst [vmem:[#allocation2] sm:$0xff] %v831
      %848 = vst [vmem:[#allocation2 + $0x8] sm:$0xff] %v832
      %849 = vst [vmem:[#allocation2 + $0x10] sm:$0xff] %v833
      %850 = vst [vmem:[#allocation2 + $0x18] sm:$0xff] %v834
      %851 = vst [vmem:[#allocation2 + $0x20] sm:$0xff] %v835
      %852 = vst [vmem:[#allocation2 + $0x28] sm:$0xff] %v836
      %853 = vst [vmem:[#allocation2 + $0x30] sm:$0xff] %v837
      %854 = vst [vmem:[#allocation2 + $0x38] sm:$0xff] %v838
      %855 = vst [vmem:[#allocation2 + $0x40] sm:$0xff] %v839
      %856 = vst [vmem:[#allocation2 + $0x48] sm:$0xff] %v840
      %857 = vst [vmem:[#allocation2 + $0x50] sm:$0xff] %v841
      %858 = vst [vmem:[#allocation2 + $0x58] sm:$0xff] %v842
      %859 = vst [vmem:[#allocation2 + $0x60] sm:$0xff] %v843
      %860 = vst [vmem:[#allocation2 + $0x68] sm:$0xff] %v844
      %861 = vst [vmem:[#allocation2 + $0x70] sm:$0xff] %v845
      %862 = vst [vmem:[#allocation2 + $0x78] sm:$0xff] %v846
      %v863 = vld [vmem:[%s207] sm:$0xf]
      %v864 = vld [vmem:[%s207 + $0x4] sm:$0xf]
      %v865 = vld [vmem:[%s207 + $0x8] sm:$0xf]
      %v866 = vld [vmem:[%s207 + $0xc] sm:$0xf]
      %v867 = vld [vmem:[%s207 + $0x10] sm:$0xf]
      %v868 = vld [vmem:[%s207 + $0x14] sm:$0xf]
      %v869 = vld [vmem:[%s207 + $0x18] sm:$0xf]
      %v870 = vld [vmem:[%s207 + $0x1c] sm:$0xf]
      %v871 = vld [vmem:[%s207 + $0x20] sm:$0xf]
      %v872 = vld [vmem:[%s207 + $0x24] sm:$0xf]
      %v873 = vld [vmem:[%s207 + $0x28] sm:$0xf]
      %v874 = vld [vmem:[%s207 + $0x2c] sm:$0xf]
      %v875 = vld [vmem:[%s207 + $0x30] sm:$0xf]
      %v876 = vld [vmem:[%s207 + $0x34] sm:$0xf]
      %v877 = vld [vmem:[%s207 + $0x38] sm:$0xf]
      %v878 = vld [vmem:[%s207 + $0x3c] sm:$0xf]
      %v879 = vld [vmem:[%s207 + $0x40] sm:$0xf]
      %v880 = vld [vmem:[%s207 + $0x44] sm:$0xf]
      %v881 = vld [vmem:[%s207 + $0x48] sm:$0xf]
      %v882 = vld [vmem:[%s207 + $0x4c] sm:$0xf]
      %v883 = vld [vmem:[%s207 + $0x50] sm:$0x1]
      %vm884 = vsmask.f32 3328
      %vm885 = vsmask.f32 7440
      %vm886 = vmor %vm884, %vm885
      %v888 = vshrl.u32 %v863, 16
      %v890 = vrot.slane %v888, 4
      %v891 = vshll.u32 %v863, 16
      %v893 = vrot.slane %v891, 5
      %v894 = vor.u32 %v890, %v893
      %v895 = vrot.slane %v894, 4
      %v897 = vshll.u32 %v864, 16
      %v899 = vrot.slane %v897, 5
      %v900 = vsel %vm886, %v895, %v899
      %v901 = vshrl.u32 %v864, 16
      %v903 = vrot.slane %v901, 4
      %v904 = vor.u32 %v903, %v899
      %v905 = vrot.slane %v904, 4
      %v907 = vshll.u32 %v865, 16
      %v909 = vrot.slane %v907, 5
      %v910 = vsel %vm886, %v905, %v909
      %v911 = vshrl.u32 %v865, 16
      %v913 = vrot.slane %v911, 4
      %v914 = vor.u32 %v913, %v909
      %v915 = vrot.slane %v914, 4
      %v917 = vshll.u32 %v866, 16
      %v919 = vrot.slane %v917, 5
      %v920 = vsel %vm886, %v915, %v919
      %v921 = vshrl.u32 %v866, 16
      %v923 = vrot.slane %v921, 4
      %v924 = vor.u32 %v923, %v919
      %v925 = vrot.slane %v924, 4
      %v927 = vshll.u32 %v867, 16
      %v929 = vrot.slane %v927, 5
      %v930 = vsel %vm886, %v925, %v929
      %v931 = vshrl.u32 %v867, 16
      %v933 = vrot.slane %v931, 4
      %v934 = vor.u32 %v933, %v929
      %v935 = vrot.slane %v934, 4
      %v937 = vshll.u32 %v868, 16
      %v939 = vrot.slane %v937, 5
      %v940 = vsel %vm886, %v935, %v939
      %v941 = vshrl.u32 %v868, 16
      %v943 = vrot.slane %v941, 4
      %v944 = vor.u32 %v943, %v939
      %v945 = vrot.slane %v944, 4
      %v947 = vshll.u32 %v869, 16
      %v949 = vrot.slane %v947, 5
      %v950 = vsel %vm886, %v945, %v949
      %v951 = vshrl.u32 %v869, 16
      %v953 = vrot.slane %v951, 4
      %v954 = vor.u32 %v953, %v949
      %v955 = vrot.slane %v954, 4
      %v957 = vshll.u32 %v870, 16
      %v959 = vrot.slane %v957, 5
      %v960 = vsel %vm886, %v955, %v959
      %v961 = vshrl.u32 %v870, 16
      %v963 = vrot.slane %v961, 4
      %v964 = vor.u32 %v963, %v959
      %v965 = vrot.slane %v964, 4
      %v967 = vshll.u32 %v871, 16
      %v969 = vrot.slane %v967, 5
      %v970 = vsel %vm886, %v965, %v969
      %v971 = vshrl.u32 %v871, 16
      %v973 = vrot.slane %v971, 4
      %v974 = vor.u32 %v973, %v969
      %v975 = vrot.slane %v974, 4
      %v977 = vshll.u32 %v872, 16
      %v979 = vrot.slane %v977, 5
      %v980 = vsel %vm886, %v975, %v979
      %v981 = vshrl.u32 %v872, 16
      %v983 = vrot.slane %v981, 4
      %v984 = vor.u32 %v983, %v979
      %v985 = vrot.slane %v984, 4
      %v987 = vshll.u32 %v873, 16
      %v989 = vrot.slane %v987, 5
      %v990 = vsel %vm886, %v985, %v989
      %v991 = vshrl.u32 %v873, 16
      %v993 = vrot.slane %v991, 4
      %v994 = vor.u32 %v993, %v989
      %v995 = vrot.slane %v994, 4
      %v997 = vshll.u32 %v874, 16
      %v999 = vrot.slane %v997, 5
      %v1000 = vsel %vm886, %v995, %v999
      %v1001 = vshrl.u32 %v874, 16
      %v1003 = vrot.slane %v1001, 4
      %v1004 = vor.u32 %v1003, %v999
      %v1005 = vrot.slane %v1004, 4
      %v1007 = vshll.u32 %v875, 16
      %v1009 = vrot.slane %v1007, 5
      %v1010 = vsel %vm886, %v1005, %v1009
      %v1011 = vshrl.u32 %v875, 16
      %v1013 = vrot.slane %v1011, 4
      %v1014 = vor.u32 %v1013, %v1009
      %v1015 = vrot.slane %v1014, 4
      %v1017 = vshll.u32 %v876, 16
      %v1019 = vrot.slane %v1017, 5
      %v1020 = vsel %vm886, %v1015, %v1019
      %v1021 = vshrl.u32 %v876, 16
      %v1023 = vrot.slane %v1021, 4
      %v1024 = vor.u32 %v1023, %v1019
      %v1025 = vrot.slane %v1024, 4
      %v1027 = vshll.u32 %v877, 16
      %v1029 = vrot.slane %v1027, 5
      %v1030 = vsel %vm886, %v1025, %v1029
      %v1031 = vshrl.u32 %v877, 16
      %v1033 = vrot.slane %v1031, 4
      %v1034 = vor.u32 %v1033, %v1029
      %v1035 = vrot.slane %v1034, 4
      %v1037 = vshll.u32 %v878, 16
      %v1039 = vrot.slane %v1037, 5
      %v1040 = vsel %vm886, %v1035, %v1039
      %v1041 = vshrl.u32 %v878, 16
      %v1043 = vrot.slane %v1041, 4
      %v1044 = vor.u32 %v1043, %v1039
      %v1045 = vrot.slane %v1044, 4
      %v1047 = vshll.u32 %v879, 16
      %v1049 = vrot.slane %v1047, 5
      %v1050 = vsel %vm886, %v1045, %v1049
      %v1051 = vshrl.u32 %v879, 16
      %v1053 = vrot.slane %v1051, 4
      %v1054 = vor.u32 %v1053, %v1049
      %v1055 = vrot.slane %v1054, 4
      %v1057 = vshll.u32 %v880, 16
      %v1059 = vrot.slane %v1057, 5
      %v1060 = vsel %vm886, %v1055, %v1059
      %v1061 = vshrl.u32 %v880, 16
      %v1063 = vrot.slane %v1061, 4
      %v1064 = vor.u32 %v1063, %v1059
      %v1065 = vrot.slane %v1064, 4
      %v1067 = vshll.u32 %v881, 16
      %v1069 = vrot.slane %v1067, 5
      %v1070 = vsel %vm886, %v1065, %v1069
      %v1071 = vshrl.u32 %v881, 16
      %v1073 = vrot.slane %v1071, 4
      %v1074 = vor.u32 %v1073, %v1069
      %v1075 = vrot.slane %v1074, 4
      %v1077 = vshll.u32 %v882, 16
      %v1079 = vrot.slane %v1077, 5
      %v1080 = vsel %vm886, %v1075, %v1079
      %v1081 = vshrl.u32 %v882, 16
      %v1083 = vrot.slane %v1081, 4
      %v1084 = vor.u32 %v1083, %v1079
      %v1085 = vrot.slane %v1084, 4
      %v1087 = vshll.u32 %v883, 16
      %v1089 = vrot.slane %v1087, 5
      %v1090 = vsel %vm886, %v1085, %v1089
      %1111 = vst [vmem:[#allocation3] sm:$0xf] %v900
      %1112 = vst [vmem:[#allocation3 + $0x4] sm:$0xf] %v910
      %1113 = vst [vmem:[#allocation3 + $0x8] sm:$0xf] %v920
      %1114 = vst [vmem:[#allocation3 + $0xc] sm:$0xf] %v930
      %1115 = vst [vmem:[#allocation3 + $0x10] sm:$0xf] %v940
      %1116 = vst [vmem:[#allocation3 + $0x14] sm:$0xf] %v950
      %1117 = vst [vmem:[#allocation3 + $0x18] sm:$0xf] %v960
      %1118 = vst [vmem:[#allocation3 + $0x1c] sm:$0xf] %v970
      %1119 = vst [vmem:[#allocation3 + $0x20] sm:$0xf] %v980
      %1120 = vst [vmem:[#allocation3 + $0x24] sm:$0xf] %v990
      %1121 = vst [vmem:[#allocation3 + $0x28] sm:$0xf] %v1000
      %1122 = vst [vmem:[#allocation3 + $0x2c] sm:$0xf] %v1010
      %1123 = vst [vmem:[#allocation3 + $0x30] sm:$0xf] %v1020
      %1124 = vst [vmem:[#allocation3 + $0x34] sm:$0xf] %v1030
      %1125 = vst [vmem:[#allocation3 + $0x38] sm:$0xf] %v1040
      %1126 = vst [vmem:[#allocation3 + $0x3c] sm:$0xf] %v1050
      %1127 = vst [vmem:[#allocation3 + $0x40] sm:$0xf] %v1060
      %1128 = vst [vmem:[#allocation3 + $0x44] sm:$0xf] %v1070
      %1129 = vst [vmem:[#allocation3 + $0x48] sm:$0xf] %v1080
      %1130 = vst [vmem:[#allocation3 + $0x4c] sm:$0xf] %v1090
      %v1131 = vld [vmem:[#allocation3] sm:$0xf]
      %v1132 = vld [vmem:[#allocation3 + $0x4] sm:$0xf]
      %v1133 = vld [vmem:[#allocation3 + $0x8] sm:$0xf]
      %v1134 = vld [vmem:[#allocation3 + $0xc] sm:$0xf]
      %v1135 = vld [vmem:[#allocation3 + $0x10] sm:$0xf]
      %v1136 = vld [vmem:[#allocation3 + $0x14] sm:$0xf]
      %v1137 = vld [vmem:[#allocation3 + $0x18] sm:$0xf]
      %v1138 = vld [vmem:[#allocation3 + $0x1c] sm:$0xf]
      %v1139 = vld [vmem:[#allocation3 + $0x20] sm:$0xf]
      %v1140 = vld [vmem:[#allocation3 + $0x24] sm:$0xf]
      %v1141 = vld [vmem:[#allocation3 + $0x28] sm:$0xf]
      %v1142 = vld [vmem:[#allocation3 + $0x2c] sm:$0xf]
      %v1143 = vld [vmem:[#allocation3 + $0x30] sm:$0xf]
      %v1144 = vld [vmem:[#allocation3 + $0x34] sm:$0xf]
      %v1145 = vld [vmem:[#allocation3 + $0x38] sm:$0xf]
      %v1146 = vld [vmem:[#allocation3 + $0x3c] sm:$0xf]
      %s1147 = scalar_lea.vmem %s1, 64
      %v1148 = vld [vmem:[%s1147] sm:$0xf]
      %v1149 = vld [vmem:[%s1147 + $0x4] sm:$0xf]
      %v1150 = vld [vmem:[%s1147 + $0x8] sm:$0xf]
      %v1151 = vld [vmem:[%s1147 + $0xc] sm:$0xf]
      %v1152 = vld [vmem:[%s1147 + $0x10] sm:$0xf]
      %v1153 = vld [vmem:[%s1147 + $0x14] sm:$0xf]
      %v1154 = vld [vmem:[%s1147 + $0x18] sm:$0xf]
      %v1155 = vld [vmem:[%s1147 + $0x1c] sm:$0xf]
      %v1156 = vld [vmem:[%s1147 + $0x20] sm:$0xf]
      %v1157 = vld [vmem:[%s1147 + $0x24] sm:$0xf]
      %v1158 = vld [vmem:[%s1147 + $0x28] sm:$0xf]
      %v1159 = vld [vmem:[%s1147 + $0x2c] sm:$0xf]
      %v1160 = vld [vmem:[%s1147 + $0x30] sm:$0xf]
      %v1161 = vld [vmem:[%s1147 + $0x34] sm:$0xf]
      %v1162 = vld [vmem:[%s1147 + $0x38] sm:$0xf]
      %v1163 = vld [vmem:[%s1147 + $0x3c] sm:$0xf]
      %v1180 = vunpack.c.l.b16 %v1131
      %v1181 = vunpack.c.l.b16 %v1132
      %v1182 = vunpack.c.l.b16 %v1133
      %v1183 = vunpack.c.l.b16 %v1134
      %v1184 = vunpack.c.l.b16 %v1135
      %v1185 = vunpack.c.l.b16 %v1136
      %v1186 = vunpack.c.l.b16 %v1137
      %v1187 = vunpack.c.l.b16 %v1138
      %v1188 = vunpack.c.l.b16 %v1139
      %v1189 = vunpack.c.l.b16 %v1140
      %v1190 = vunpack.c.l.b16 %v1141
      %v1191 = vunpack.c.l.b16 %v1142
      %v1192 = vunpack.c.l.b16 %v1143
      %v1193 = vunpack.c.l.b16 %v1144
      %v1194 = vunpack.c.l.b16 %v1145
      %v1195 = vunpack.c.l.b16 %v1146
      %v1196 = vpack.c.b16 %v1181, %v1180
      %v1197 = vpack.c.b16 %v1183, %v1182
      %v1198 = vpack.c.b16 %v1185, %v1184
      %v1199 = vpack.c.b16 %v1187, %v1186
      %v1200 = vpack.c.b16 %v1189, %v1188
      %v1201 = vpack.c.b16 %v1191, %v1190
      %v1202 = vpack.c.b16 %v1193, %v1192
      %v1203 = vpack.c.b16 %v1195, %v1194
      %v1228 = vunpack.c.l.b16 %v1148
      %v1229 = vunpack.c.l.b16 %v1149
      %v1230 = vunpack.c.l.b16 %v1150
      %v1231 = vunpack.c.l.b16 %v1151
      %v1232 = vunpack.c.l.b16 %v1152
      %v1233 = vunpack.c.l.b16 %v1153
      %v1234 = vunpack.c.l.b16 %v1154
      %v1235 = vunpack.c.l.b16 %v1155
      %v1236 = vunpack.c.l.b16 %v1156
      %v1237 = vunpack.c.l.b16 %v1157
      %v1238 = vunpack.c.l.b16 %v1158
      %v1239 = vunpack.c.l.b16 %v1159
      %v1240 = vunpack.c.l.b16 %v1160
      %v1241 = vunpack.c.l.b16 %v1161
      %v1242 = vunpack.c.l.b16 %v1162
      %v1243 = vunpack.c.l.b16 %v1163
      %v1244 = vpack.c.b16 %v1229, %v1228
      %v1245 = vpack.c.b16 %v1231, %v1230
      %v1246 = vpack.c.b16 %v1233, %v1232
      %v1247 = vpack.c.b16 %v1235, %v1234
      %v1248 = vpack.c.b16 %v1237, %v1236
      %v1249 = vpack.c.b16 %v1239, %v1238
      %v1250 = vpack.c.b16 %v1241, %v1240
      %v1251 = vpack.c.b16 %v1243, %v1242
      %1260 = vmatpush.bf16.msra.mxu0 %v1251
      %1261 = vmatpush.bf16.msra.mxu0 %v1250
      %1262 = vmatpush.bf16.msra.mxu0 %v1249
      %1263 = vmatpush.bf16.msra.mxu0 %v1248
      %1264 = vmatpush.bf16.msra.mxu0 %v1247
      %1265 = vmatpush.bf16.msra.mxu0 %v1246
      %1266 = vmatpush.bf16.msra.mxu0 %v1245
      %1267 = vmatpush.bf16.msra.mxu0 %v1244
      %1268 = vmatmul.bf16.gmra.mxu0 %v1196
      %v1269 = vpop.f32.mrf.mxu0
      %v1270 = vadd.f32 0.0, %v1269
      %v1271 = vpop.f32.mrf.mxu0
      %v1272 = vadd.f32 0.0, %v1271
      %1273 = vmatmul.bf16.gmra.mxu0 %v1197
      %v1274 = vpop.f32.mrf.mxu0
      %v1275 = vadd.f32 0.0, %v1274
      %v1276 = vpop.f32.mrf.mxu0
      %v1277 = vadd.f32 0.0, %v1276
      %1278 = vmatmul.bf16.gmra.mxu0 %v1198
      %v1279 = vpop.f32.mrf.mxu0
      %v1280 = vadd.f32 0.0, %v1279
      %v1281 = vpop.f32.mrf.mxu0
      %v1282 = vadd.f32 0.0, %v1281
      %1283 = vmatmul.bf16.gmra.mxu0 %v1199
      %v1284 = vpop.f32.mrf.mxu0
      %v1285 = vadd.f32 0.0, %v1284
      %v1286 = vpop.f32.mrf.mxu0
      %v1287 = vadd.f32 0.0, %v1286
      %1288 = vmatmul.bf16.gmra.mxu0 %v1200
      %v1289 = vpop.f32.mrf.mxu0
      %v1290 = vadd.f32 0.0, %v1289
      %v1291 = vpop.f32.mrf.mxu0
      %v1292 = vadd.f32 0.0, %v1291
      %1293 = vmatmul.bf16.gmra.mxu0 %v1201
      %v1294 = vpop.f32.mrf.mxu0
      %v1295 = vadd.f32 0.0, %v1294
      %v1296 = vpop.f32.mrf.mxu0
      %v1297 = vadd.f32 0.0, %v1296
      %1298 = vmatmul.bf16.gmra.mxu0 %v1202
      %v1299 = vpop.f32.mrf.mxu0
      %v1300 = vadd.f32 0.0, %v1299
      %v1301 = vpop.f32.mrf.mxu0
      %v1302 = vadd.f32 0.0, %v1301
      %1303 = vmatmul.bf16.gmra.mxu0 %v1203
      %v1304 = vpop.f32.mrf.mxu0
      %v1305 = vadd.f32 0.0, %v1304
      %v1306 = vpop.f32.mrf.mxu0
      %v1307 = vadd.f32 0.0, %v1306
      %1308 = vdwg.mxu0
      %v1309 = vld [vmem:[#allocation2] sm:$0xff]
      %v1310 = vld [vmem:[#allocation2 + $0x8] sm:$0xff]
      %v1311 = vld [vmem:[#allocation2 + $0x10] sm:$0xff]
      %v1312 = vld [vmem:[#allocation2 + $0x18] sm:$0xff]
      %v1313 = vld [vmem:[#allocation2 + $0x20] sm:$0xff]
      %v1314 = vld [vmem:[#allocation2 + $0x28] sm:$0xff]
      %v1315 = vld [vmem:[#allocation2 + $0x30] sm:$0xff]
      %v1316 = vld [vmem:[#allocation2 + $0x38] sm:$0xff]
      %v1317 = vld [vmem:[#allocation2 + $0x40] sm:$0xff]
      %v1318 = vld [vmem:[#allocation2 + $0x48] sm:$0xff]
      %v1319 = vld [vmem:[#allocation2 + $0x50] sm:$0xff]
      %v1320 = vld [vmem:[#allocation2 + $0x58] sm:$0xff]
      %v1321 = vld [vmem:[#allocation2 + $0x60] sm:$0xff]
      %v1322 = vld [vmem:[#allocation2 + $0x68] sm:$0xff]
      %v1323 = vld [vmem:[#allocation2 + $0x70] sm:$0xff]
      %v1324 = vld [vmem:[#allocation2 + $0x78] sm:$0xff]
      %v1325 = vadd.f32 %v1309, %v1270
      %v1326 = vadd.f32 %v1310, %v1272
      %v1327 = vadd.f32 %v1311, %v1275
      %v1328 = vadd.f32 %v1312, %v1277
      %v1329 = vadd.f32 %v1313, %v1280
      %v1330 = vadd.f32 %v1314, %v1282
      %v1331 = vadd.f32 %v1315, %v1285
      %v1332 = vadd.f32 %v1316, %v1287
      %v1333 = vadd.f32 %v1317, %v1290
      %v1334 = vadd.f32 %v1318, %v1292
      %v1335 = vadd.f32 %v1319, %v1295
      %v1336 = vadd.f32 %v1320, %v1297
      %v1337 = vadd.f32 %v1321, %v1300
      %v1338 = vadd.f32 %v1322, %v1302
      %v1339 = vadd.f32 %v1323, %v1305
      %v1340 = vadd.f32 %v1324, %v1307
      %1341 = vst [vmem:[#allocation2] sm:$0xff] %v1325
      %1342 = vst [vmem:[#allocation2 + $0x8] sm:$0xff] %v1326
      %1343 = vst [vmem:[#allocation2 + $0x10] sm:$0xff] %v1327
      %1344 = vst [vmem:[#allocation2 + $0x18] sm:$0xff] %v1328
      %1345 = vst [vmem:[#allocation2 + $0x20] sm:$0xff] %v1329
      %1346 = vst [vmem:[#allocation2 + $0x28] sm:$0xff] %v1330
      %1347 = vst [vmem:[#allocation2 + $0x30] sm:$0xff] %v1331
      %1348 = vst [vmem:[#allocation2 + $0x38] sm:$0xff] %v1332
      %1349 = vst [vmem:[#allocation2 + $0x40] sm:$0xff] %v1333
      %1350 = vst [vmem:[#allocation2 + $0x48] sm:$0xff] %v1334
      %1351 = vst [vmem:[#allocation2 + $0x50] sm:$0xff] %v1335
      %1352 = vst [vmem:[#allocation2 + $0x58] sm:$0xff] %v1336
      %1353 = vst [vmem:[#allocation2 + $0x60] sm:$0xff] %v1337
      %1354 = vst [vmem:[#allocation2 + $0x68] sm:$0xff] %v1338
      %1355 = vst [vmem:[#allocation2 + $0x70] sm:$0xff] %v1339
      %1356 = vst [vmem:[#allocation2 + $0x78] sm:$0xff] %v1340
      %v1357 = vld [vmem:[#allocation3 + $0x8] sm:$0xf]
      %v1358 = vld [vmem:[#allocation3 + $0xc] sm:$0xf]
      %v1359 = vld [vmem:[#allocation3 + $0x10] sm:$0xf]
      %v1360 = vld [vmem:[#allocation3 + $0x14] sm:$0xf]
      %v1361 = vld [vmem:[#allocation3 + $0x18] sm:$0xf]
      %v1362 = vld [vmem:[#allocation3 + $0x1c] sm:$0xf]
      %v1363 = vld [vmem:[#allocation3 + $0x20] sm:$0xf]
      %v1364 = vld [vmem:[#allocation3 + $0x24] sm:$0xf]
      %v1365 = vld [vmem:[#allocation3 + $0x28] sm:$0xf]
      %v1366 = vld [vmem:[#allocation3 + $0x2c] sm:$0xf]
      %v1367 = vld [vmem:[#allocation3 + $0x30] sm:$0xf]
      %v1368 = vld [vmem:[#allocation3 + $0x34] sm:$0xf]
      %v1369 = vld [vmem:[#allocation3 + $0x38] sm:$0xf]
      %v1370 = vld [vmem:[#allocation3 + $0x3c] sm:$0xf]
      %v1371 = vld [vmem:[#allocation3 + $0x40] sm:$0xf]
      %v1372 = vld [vmem:[#allocation3 + $0x44] sm:$0xf]
      %s1373 = scalar_lea.vmem %s1, 256
      %v1374 = vld [vmem:[%s1373] sm:$0xf]
      %v1375 = vld [vmem:[%s1373 + $0x4] sm:$0xf]
      %v1376 = vld [vmem:[%s1373 + $0x8] sm:$0xf]
      %v1377 = vld [vmem:[%s1373 + $0xc] sm:$0xf]
      %v1378 = vld [vmem:[%s1373 + $0x10] sm:$0xf]
      %v1379 = vld [vmem:[%s1373 + $0x14] sm:$0xf]
      %v1380 = vld [vmem:[%s1373 + $0x18] sm:$0xf]
      %v1381 = vld [vmem:[%s1373 + $0x1c] sm:$0xf]
      %v1382 = vld [vmem:[%s1373 + $0x20] sm:$0xf]
      %v1383 = vld [vmem:[%s1373 + $0x24] sm:$0xf]
      %v1384 = vld [vmem:[%s1373 + $0x28] sm:$0xf]
      %v1385 = vld [vmem:[%s1373 + $0x2c] sm:$0xf]
      %v1386 = vld [vmem:[%s1373 + $0x30] sm:$0xf]
      %v1387 = vld [vmem:[%s1373 + $0x34] sm:$0xf]
      %v1388 = vld [vmem:[%s1373 + $0x38] sm:$0xf]
      %v1389 = vld [vmem:[%s1373 + $0x3c] sm:$0xf]
      %v1406 = vunpack.c.l.b16 %v1357
      %v1407 = vunpack.c.l.b16 %v1358
      %v1408 = vunpack.c.l.b16 %v1359
      %v1409 = vunpack.c.l.b16 %v1360
      %v1410 = vunpack.c.l.b16 %v1361
      %v1411 = vunpack.c.l.b16 %v1362
      %v1412 = vunpack.c.l.b16 %v1363
      %v1413 = vunpack.c.l.b16 %v1364
      %v1414 = vunpack.c.l.b16 %v1365
      %v1415 = vunpack.c.l.b16 %v1366
      %v1416 = vunpack.c.l.b16 %v1367
      %v1417 = vunpack.c.l.b16 %v1368
      %v1418 = vunpack.c.l.b16 %v1369
      %v1419 = vunpack.c.l.b16 %v1370
      %v1420 = vunpack.c.l.b16 %v1371
      %v1421 = vunpack.c.l.b16 %v1372
      %v1422 = vpack.c.b16 %v1407, %v1406
      %v1423 = vpack.c.b16 %v1409, %v1408
      %v1424 = vpack.c.b16 %v1411, %v1410
      %v1425 = vpack.c.b16 %v1413, %v1412
      %v1426 = vpack.c.b16 %v1415, %v1414
      %v1427 = vpack.c.b16 %v1417, %v1416
      %v1428 = vpack.c.b16 %v1419, %v1418
      %v1429 = vpack.c.b16 %v1421, %v1420
      %v1454 = vunpack.c.l.b16 %v1374
      %v1455 = vunpack.c.l.b16 %v1375
      %v1456 = vunpack.c.l.b16 %v1376
      %v1457 = vunpack.c.l.b16 %v1377
      %v1458 = vunpack.c.l.b16 %v1378
      %v1459 = vunpack.c.l.b16 %v1379
      %v1460 = vunpack.c.l.b16 %v1380
      %v1461 = vunpack.c.l.b16 %v1381
      %v1462 = vunpack.c.l.b16 %v1382
      %v1463 = vunpack.c.l.b16 %v1383
      %v1464 = vunpack.c.l.b16 %v1384
      %v1465 = vunpack.c.l.b16 %v1385
      %v1466 = vunpack.c.l.b16 %v1386
      %v1467 = vunpack.c.l.b16 %v1387
      %v1468 = vunpack.c.l.b16 %v1388
      %v1469 = vunpack.c.l.b16 %v1389
      %v1470 = vpack.c.b16 %v1455, %v1454
      %v1471 = vpack.c.b16 %v1457, %v1456
      %v1472 = vpack.c.b16 %v1459, %v1458
      %v1473 = vpack.c.b16 %v1461, %v1460
      %v1474 = vpack.c.b16 %v1463, %v1462
      %v1475 = vpack.c.b16 %v1465, %v1464
      %v1476 = vpack.c.b16 %v1467, %v1466
      %v1477 = vpack.c.b16 %v1469, %v1468
      %1486 = vmatpush.bf16.msra.mxu0 %v1477
      %1487 = vmatpush.bf16.msra.mxu0 %v1476
      %1488 = vmatpush.bf16.msra.mxu0 %v1475
      %1489 = vmatpush.bf16.msra.mxu0 %v1474
      %1490 = vmatpush.bf16.msra.mxu0 %v1473
      %1491 = vmatpush.bf16.msra.mxu0 %v1472
      %1492 = vmatpush.bf16.msra.mxu0 %v1471
      %1493 = vmatpush.bf16.msra.mxu0 %v1470
      %1494 = vmatmul.bf16.gmra.mxu0 %v1422
      %v1495 = vpop.f32.mrf.mxu0
      %v1496 = vadd.f32 0.0, %v1495
      %v1497 = vpop.f32.mrf.mxu0
      %v1498 = vadd.f32 0.0, %v1497
      %1499 = vmatmul.bf16.gmra.mxu0 %v1423
      %v1500 = vpop.f32.mrf.mxu0
      %v1501 = vadd.f32 0.0, %v1500
      %v1502 = vpop.f32.mrf.mxu0
      %v1503 = vadd.f32 0.0, %v1502
      %1504 = vmatmul.bf16.gmra.mxu0 %v1424
      %v1505 = vpop.f32.mrf.mxu0
      %v1506 = vadd.f32 0.0, %v1505
      %v1507 = vpop.f32.mrf.mxu0
      %v1508 = vadd.f32 0.0, %v1507
      %1509 = vmatmul.bf16.gmra.mxu0 %v1425
      %v1510 = vpop.f32.mrf.mxu0
      %v1511 = vadd.f32 0.0, %v1510
      %v1512 = vpop.f32.mrf.mxu0
      %v1513 = vadd.f32 0.0, %v1512
      %1514 = vmatmul.bf16.gmra.mxu0 %v1426
      %v1515 = vpop.f32.mrf.mxu0
      %v1516 = vadd.f32 0.0, %v1515
      %v1517 = vpop.f32.mrf.mxu0
      %v1518 = vadd.f32 0.0, %v1517
      %1519 = vmatmul.bf16.gmra.mxu0 %v1427
      %v1520 = vpop.f32.mrf.mxu0
      %v1521 = vadd.f32 0.0, %v1520
      %v1522 = vpop.f32.mrf.mxu0
      %v1523 = vadd.f32 0.0, %v1522
      %1524 = vmatmul.bf16.gmra.mxu0 %v1428
      %v1525 = vpop.f32.mrf.mxu0
      %v1526 = vadd.f32 0.0, %v1525
      %v1527 = vpop.f32.mrf.mxu0
      %v1528 = vadd.f32 0.0, %v1527
      %1529 = vmatmul.bf16.gmra.mxu0 %v1429
      %v1530 = vpop.f32.mrf.mxu0
      %v1531 = vadd.f32 0.0, %v1530
      %v1532 = vpop.f32.mrf.mxu0
      %v1533 = vadd.f32 0.0, %v1532
      %1534 = vdwg.mxu0
      %v1535 = vld [vmem:[#allocation2] sm:$0xff]
      %v1536 = vld [vmem:[#allocation2 + $0x8] sm:$0xff]
      %v1537 = vld [vmem:[#allocation2 + $0x10] sm:$0xff]
      %v1538 = vld [vmem:[#allocation2 + $0x18] sm:$0xff]
      %v1539 = vld [vmem:[#allocation2 + $0x20] sm:$0xff]
      %v1540 = vld [vmem:[#allocation2 + $0x28] sm:$0xff]
      %v1541 = vld [vmem:[#allocation2 + $0x30] sm:$0xff]
      %v1542 = vld [vmem:[#allocation2 + $0x38] sm:$0xff]
      %v1543 = vld [vmem:[#allocation2 + $0x40] sm:$0xff]
      %v1544 = vld [vmem:[#allocation2 + $0x48] sm:$0xff]
      %v1545 = vld [vmem:[#allocation2 + $0x50] sm:$0xff]
      %v1546 = vld [vmem:[#allocation2 + $0x58] sm:$0xff]
      %v1547 = vld [vmem:[#allocation2 + $0x60] sm:$0xff]
      %v1548 = vld [vmem:[#allocation2 + $0x68] sm:$0xff]
      %v1549 = vld [vmem:[#allocation2 + $0x70] sm:$0xff]
      %v1550 = vld [vmem:[#allocation2 + $0x78] sm:$0xff]
      %v1551 = vadd.f32 %v1535, %v1496
      %v1552 = vadd.f32 %v1536, %v1498
      %v1553 = vadd.f32 %v1537, %v1501
      %v1554 = vadd.f32 %v1538, %v1503
      %v1555 = vadd.f32 %v1539, %v1506
      %v1556 = vadd.f32 %v1540, %v1508
      %v1557 = vadd.f32 %v1541, %v1511
      %v1558 = vadd.f32 %v1542, %v1513
      %v1559 = vadd.f32 %v1543, %v1516
      %v1560 = vadd.f32 %v1544, %v1518
      %v1561 = vadd.f32 %v1545, %v1521
      %v1562 = vadd.f32 %v1546, %v1523
      %v1563 = vadd.f32 %v1547, %v1526
      %v1564 = vadd.f32 %v1548, %v1528
      %v1565 = vadd.f32 %v1549, %v1531
      %v1566 = vadd.f32 %v1550, %v1533
      %1567 = vst [vmem:[#allocation2] sm:$0xff] %v1551
      %1568 = vst [vmem:[#allocation2 + $0x8] sm:$0xff] %v1552
      %1569 = vst [vmem:[#allocation2 + $0x10] sm:$0xff] %v1553
      %1570 = vst [vmem:[#allocation2 + $0x18] sm:$0xff] %v1554
      %1571 = vst [vmem:[#allocation2 + $0x20] sm:$0xff] %v1555
      %1572 = vst [vmem:[#allocation2 + $0x28] sm:$0xff] %v1556
      %1573 = vst [vmem:[#allocation2 + $0x30] sm:$0xff] %v1557
      %1574 = vst [vmem:[#allocation2 + $0x38] sm:$0xff] %v1558
      %1575 = vst [vmem:[#allocation2 + $0x40] sm:$0xff] %v1559
      %1576 = vst [vmem:[#allocation2 + $0x48] sm:$0xff] %v1560
      %1577 = vst [vmem:[#allocation2 + $0x50] sm:$0xff] %v1561
      %1578 = vst [vmem:[#allocation2 + $0x58] sm:$0xff] %v1562
      %1579 = vst [vmem:[#allocation2 + $0x60] sm:$0xff] %v1563
      %1580 = vst [vmem:[#allocation2 + $0x68] sm:$0xff] %v1564
      %1581 = vst [vmem:[#allocation2 + $0x70] sm:$0xff] %v1565
      %1582 = vst [vmem:[#allocation2 + $0x78] sm:$0xff] %v1566
      %v1583 = vld [vmem:[#allocation3 + $0x10] sm:$0xf]
      %v1584 = vld [vmem:[#allocation3 + $0x14] sm:$0xf]
      %v1585 = vld [vmem:[#allocation3 + $0x18] sm:$0xf]
      %v1586 = vld [vmem:[#allocation3 + $0x1c] sm:$0xf]
      %v1587 = vld [vmem:[#allocation3 + $0x20] sm:$0xf]
      %v1588 = vld [vmem:[#allocation3 + $0x24] sm:$0xf]
      %v1589 = vld [vmem:[#allocation3 + $0x28] sm:$0xf]
      %v1590 = vld [vmem:[#allocation3 + $0x2c] sm:$0xf]
      %v1591 = vld [vmem:[#allocation3 + $0x30] sm:$0xf]
      %v1592 = vld [vmem:[#allocation3 + $0x34] sm:$0xf]
      %v1593 = vld [vmem:[#allocation3 + $0x38] sm:$0xf]
      %v1594 = vld [vmem:[#allocation3 + $0x3c] sm:$0xf]
      %v1595 = vld [vmem:[#allocation3 + $0x40] sm:$0xf]
      %v1596 = vld [vmem:[#allocation3 + $0x44] sm:$0xf]
      %v1597 = vld [vmem:[#allocation3 + $0x48] sm:$0xf]
      %v1598 = vld [vmem:[#allocation3 + $0x4c] sm:$0xf]
      %s1599 = scalar_lea.vmem %s1, 448
      %v1600 = vld [vmem:[%s1599] sm:$0xf]
      %v1601 = vld [vmem:[%s1599 + $0x4] sm:$0xf]
      %v1602 = vld [vmem:[%s1599 + $0x8] sm:$0xf]
      %v1603 = vld [vmem:[%s1599 + $0xc] sm:$0xf]
      %v1604 = vld [vmem:[%s1599 + $0x10] sm:$0xf]
      %v1605 = vld [vmem:[%s1599 + $0x14] sm:$0xf]
      %v1606 = vld [vmem:[%s1599 + $0x18] sm:$0xf]
      %v1607 = vld [vmem:[%s1599 + $0x1c] sm:$0xf]
      %v1608 = vld [vmem:[%s1599 + $0x20] sm:$0xf]
      %v1609 = vld [vmem:[%s1599 + $0x24] sm:$0xf]
      %v1610 = vld [vmem:[%s1599 + $0x28] sm:$0xf]
      %v1611 = vld [vmem:[%s1599 + $0x2c] sm:$0xf]
      %v1612 = vld [vmem:[%s1599 + $0x30] sm:$0xf]
      %v1613 = vld [vmem:[%s1599 + $0x34] sm:$0xf]
      %v1614 = vld [vmem:[%s1599 + $0x38] sm:$0xf]
      %v1615 = vld [vmem:[%s1599 + $0x3c] sm:$0xf]
      %v1632 = vunpack.c.l.b16 %v1583
      %v1633 = vunpack.c.l.b16 %v1584
      %v1634 = vunpack.c.l.b16 %v1585
      %v1635 = vunpack.c.l.b16 %v1586
      %v1636 = vunpack.c.l.b16 %v1587
      %v1637 = vunpack.c.l.b16 %v1588
      %v1638 = vunpack.c.l.b16 %v1589
      %v1639 = vunpack.c.l.b16 %v1590
      %v1640 = vunpack.c.l.b16 %v1591
      %v1641 = vunpack.c.l.b16 %v1592
      %v1642 = vunpack.c.l.b16 %v1593
      %v1643 = vunpack.c.l.b16 %v1594
      %v1644 = vunpack.c.l.b16 %v1595
      %v1645 = vunpack.c.l.b16 %v1596
      %v1646 = vunpack.c.l.b16 %v1597
      %v1647 = vunpack.c.l.b16 %v1598
      %v1648 = vpack.c.b16 %v1633, %v1632
      %v1649 = vpack.c.b16 %v1635, %v1634
      %v1650 = vpack.c.b16 %v1637, %v1636
      %v1651 = vpack.c.b16 %v1639, %v1638
      %v1652 = vpack.c.b16 %v1641, %v1640
      %v1653 = vpack.c.b16 %v1643, %v1642
      %v1654 = vpack.c.b16 %v1645, %v1644
      %v1655 = vpack.c.b16 %v1647, %v1646
      %v1680 = vunpack.c.l.b16 %v1600
      %v1681 = vunpack.c.l.b16 %v1601
      %v1682 = vunpack.c.l.b16 %v1602
      %v1683 = vunpack.c.l.b16 %v1603
      %v1684 = vunpack.c.l.b16 %v1604
      %v1685 = vunpack.c.l.b16 %v1605
      %v1686 = vunpack.c.l.b16 %v1606
      %v1687 = vunpack.c.l.b16 %v1607
      %v1688 = vunpack.c.l.b16 %v1608
      %v1689 = vunpack.c.l.b16 %v1609
      %v1690 = vunpack.c.l.b16 %v1610
      %v1691 = vunpack.c.l.b16 %v1611
      %v1692 = vunpack.c.l.b16 %v1612
      %v1693 = vunpack.c.l.b16 %v1613
      %v1694 = vunpack.c.l.b16 %v1614
      %v1695 = vunpack.c.l.b16 %v1615
      %v1696 = vpack.c.b16 %v1681, %v1680
      %v1697 = vpack.c.b16 %v1683, %v1682
      %v1698 = vpack.c.b16 %v1685, %v1684
      %v1699 = vpack.c.b16 %v1687, %v1686
      %v1700 = vpack.c.b16 %v1689, %v1688
      %v1701 = vpack.c.b16 %v1691, %v1690
      %v1702 = vpack.c.b16 %v1693, %v1692
      %v1703 = vpack.c.b16 %v1695, %v1694
      %1712 = vmatpush.bf16.msra.mxu0 %v1703
      %1713 = vmatpush.bf16.msra.mxu0 %v1702
      %1714 = vmatpush.bf16.msra.mxu0 %v1701
      %1715 = vmatpush.bf16.msra.mxu0 %v1700
      %1716 = vmatpush.bf16.msra.mxu0 %v1699
      %1717 = vmatpush.bf16.msra.mxu0 %v1698
      %1718 = vmatpush.bf16.msra.mxu0 %v1697
      %1719 = vmatpush.bf16.msra.mxu0 %v1696
      %1720 = vmatmul.bf16.gmra.mxu0 %v1648
      %v1721 = vpop.f32.mrf.mxu0
      %v1722 = vadd.f32 0.0, %v1721
      %v1723 = vpop.f32.mrf.mxu0
      %v1724 = vadd.f32 0.0, %v1723
      %1725 = vmatmul.bf16.gmra.mxu0 %v1649
      %v1726 = vpop.f32.mrf.mxu0
      %v1727 = vadd.f32 0.0, %v1726
      %v1728 = vpop.f32.mrf.mxu0
      %v1729 = vadd.f32 0.0, %v1728
      %1730 = vmatmul.bf16.gmra.mxu0 %v1650
      %v1731 = vpop.f32.mrf.mxu0
      %v1732 = vadd.f32 0.0, %v1731
      %v1733 = vpop.f32.mrf.mxu0
      %v1734 = vadd.f32 0.0, %v1733
      %1735 = vmatmul.bf16.gmra.mxu0 %v1651
      %v1736 = vpop.f32.mrf.mxu0
      %v1737 = vadd.f32 0.0, %v1736
      %v1738 = vpop.f32.mrf.mxu0
      %v1739 = vadd.f32 0.0, %v1738
      %1740 = vmatmul.bf16.gmra.mxu0 %v1652
      %v1741 = vpop.f32.mrf.mxu0
      %v1742 = vadd.f32 0.0, %v1741
      %v1743 = vpop.f32.mrf.mxu0
      %v1744 = vadd.f32 0.0, %v1743
      %1745 = vmatmul.bf16.gmra.mxu0 %v1653
      %v1746 = vpop.f32.mrf.mxu0
      %v1747 = vadd.f32 0.0, %v1746
      %v1748 = vpop.f32.mrf.mxu0
      %v1749 = vadd.f32 0.0, %v1748
      %1750 = vmatmul.bf16.gmra.mxu0 %v1654
      %v1751 = vpop.f32.mrf.mxu0
      %v1752 = vadd.f32 0.0, %v1751
      %v1753 = vpop.f32.mrf.mxu0
      %v1754 = vadd.f32 0.0, %v1753
      %1755 = vmatmul.bf16.gmra.mxu0 %v1655
      %v1756 = vpop.f32.mrf.mxu0
      %v1757 = vadd.f32 0.0, %v1756
      %v1758 = vpop.f32.mrf.mxu0
      %v1759 = vadd.f32 0.0, %v1758
      %1760 = vdwg.mxu0
      %v1761 = vld [vmem:[#allocation2] sm:$0xff]
      %v1762 = vld [vmem:[#allocation2 + $0x8] sm:$0xff]
      %v1763 = vld [vmem:[#allocation2 + $0x10] sm:$0xff]
      %v1764 = vld [vmem:[#allocation2 + $0x18] sm:$0xff]
      %v1765 = vld [vmem:[#allocation2 + $0x20] sm:$0xff]
      %v1766 = vld [vmem:[#allocation2 + $0x28] sm:$0xff]
      %v1767 = vld [vmem:[#allocation2 + $0x30] sm:$0xff]
      %v1768 = vld [vmem:[#allocation2 + $0x38] sm:$0xff]
      %v1769 = vld [vmem:[#allocation2 + $0x40] sm:$0xff]
      %v1770 = vld [vmem:[#allocation2 + $0x48] sm:$0xff]
      %v1771 = vld [vmem:[#allocation2 + $0x50] sm:$0xff]
      %v1772 = vld [vmem:[#allocation2 + $0x58] sm:$0xff]
      %v1773 = vld [vmem:[#allocation2 + $0x60] sm:$0xff]
      %v1774 = vld [vmem:[#allocation2 + $0x68] sm:$0xff]
      %v1775 = vld [vmem:[#allocation2 + $0x70] sm:$0xff]
      %v1776 = vld [vmem:[#allocation2 + $0x78] sm:$0xff]
      %v1777 = vadd.f32 %v1761, %v1722
      %v1778 = vadd.f32 %v1762, %v1724
      %v1779 = vadd.f32 %v1763, %v1727
      %v1780 = vadd.f32 %v1764, %v1729
      %v1781 = vadd.f32 %v1765, %v1732
      %v1782 = vadd.f32 %v1766, %v1734
      %v1783 = vadd.f32 %v1767, %v1737
      %v1784 = vadd.f32 %v1768, %v1739
      %v1785 = vadd.f32 %v1769, %v1742
      %v1786 = vadd.f32 %v1770, %v1744
      %v1787 = vadd.f32 %v1771, %v1747
      %v1788 = vadd.f32 %v1772, %v1749
      %v1789 = vadd.f32 %v1773, %v1752
      %v1790 = vadd.f32 %v1774, %v1754
      %v1791 = vadd.f32 %v1775, %v1757
      %v1792 = vadd.f32 %v1776, %v1759
      %1793 = vst [vmem:[#allocation2] sm:$0xff] %v1777
      %1794 = vst [vmem:[#allocation2 + $0x8] sm:$0xff] %v1778
      %1795 = vst [vmem:[#allocation2 + $0x10] sm:$0xff] %v1779
      %1796 = vst [vmem:[#allocation2 + $0x18] sm:$0xff] %v1780
      %1797 = vst [vmem:[#allocation2 + $0x20] sm:$0xff] %v1781
      %1798 = vst [vmem:[#allocation2 + $0x28] sm:$0xff] %v1782
      %1799 = vst [vmem:[#allocation2 + $0x30] sm:$0xff] %v1783
      %1800 = vst [vmem:[#allocation2 + $0x38] sm:$0xff] %v1784
      %1801 = vst [vmem:[#allocation2 + $0x40] sm:$0xff] %v1785
      %1802 = vst [vmem:[#allocation2 + $0x48] sm:$0xff] %v1786
      %1803 = vst [vmem:[#allocation2 + $0x50] sm:$0xff] %v1787
      %1804 = vst [vmem:[#allocation2 + $0x58] sm:$0xff] %v1788
      %1805 = vst [vmem:[#allocation2 + $0x60] sm:$0xff] %v1789
      %1806 = vst [vmem:[#allocation2 + $0x68] sm:$0xff] %v1790
      %1807 = vst [vmem:[#allocation2 + $0x70] sm:$0xff] %v1791
      %1808 = vst [vmem:[#allocation2 + $0x78] sm:$0xff] %v1792
      %v1809 = vld [vmem:[%s207] sm:$0xe]
      %v1810 = vld [vmem:[%s207 + $0x4] sm:$0xf]
      %v1811 = vld [vmem:[%s207 + $0x8] sm:$0xf]
      %v1812 = vld [vmem:[%s207 + $0xc] sm:$0xf]
      %v1813 = vld [vmem:[%s207 + $0x10] sm:$0xf]
      %v1814 = vld [vmem:[%s207 + $0x14] sm:$0xf]
      %v1815 = vld [vmem:[%s207 + $0x18] sm:$0xf]
      %v1816 = vld [vmem:[%s207 + $0x1c] sm:$0xf]
      %v1817 = vld [vmem:[%s207 + $0x20] sm:$0xf]
      %v1818 = vld [vmem:[%s207 + $0x24] sm:$0xf]
      %v1819 = vld [vmem:[%s207 + $0x28] sm:$0xf]
      %v1820 = vld [vmem:[%s207 + $0x2c] sm:$0xf]
      %v1821 = vld [vmem:[%s207 + $0x30] sm:$0xf]
      %v1822 = vld [vmem:[%s207 + $0x34] sm:$0xf]
      %v1823 = vld [vmem:[%s207 + $0x38] sm:$0xf]
      %v1824 = vld [vmem:[%s207 + $0x3c] sm:$0xf]
      %v1825 = vld [vmem:[%s207 + $0x40] sm:$0xf]
      %v1826 = vld [vmem:[%s207 + $0x44] sm:$0xf]
      %v1827 = vld [vmem:[%s207 + $0x48] sm:$0xf]
      %v1828 = vld [vmem:[%s207 + $0x4c] sm:$0xf]
      %v1829 = vld [vmem:[%s207 + $0x50] sm:$0x1]
      %vm1851 = vcmask 1042432
      %vm1852 = vcmask 1046532
      %vm1853 = vmor %vm1851, %vm1852
      %v1854 = vrot.slane %v1809, 5
      %v1855 = vrot.slane %v1854, 4
      %v1856 = vrot.slane %v1810, 5
      %v1857 = vsel %vm1853, %v1855, %v1856
      %v1858 = vrot.slane %v1856, 4
      %v1859 = vrot.slane %v1811, 5
      %v1860 = vsel %vm1853, %v1858, %v1859
      %v1861 = vrot.slane %v1859, 4
      %v1862 = vrot.slane %v1812, 5
      %v1863 = vsel %vm1853, %v1861, %v1862
      %v1864 = vrot.slane %v1862, 4
      %v1865 = vrot.slane %v1813, 5
      %v1866 = vsel %vm1853, %v1864, %v1865
      %v1867 = vrot.slane %v1865, 4
      %v1868 = vrot.slane %v1814, 5
      %v1869 = vsel %vm1853, %v1867, %v1868
      %v1870 = vrot.slane %v1868, 4
      %v1871 = vrot.slane %v1815, 5
      %v1872 = vsel %vm1853, %v1870, %v1871
      %v1873 = vrot.slane %v1871, 4
      %v1874 = vrot.slane %v1816, 5
      %v1875 = vsel %vm1853, %v1873, %v1874
      %v1876 = vrot.slane %v1874, 4
      %v1877 = vrot.slane %v1817, 5
      %v1878 = vsel %vm1853, %v1876, %v1877
      %v1879 = vrot.slane %v1877, 4
      %v1880 = vrot.slane %v1818, 5
      %v1881 = vsel %vm1853, %v1879, %v1880
      %v1882 = vrot.slane %v1880, 4
      %v1883 = vrot.slane %v1819, 5
      %v1884 = vsel %vm1853, %v1882, %v1883
      %v1885 = vrot.slane %v1883, 4
      %v1886 = vrot.slane %v1820, 5
      %v1887 = vsel %vm1853, %v1885, %v1886
      %v1888 = vrot.slane %v1886, 4
      %v1889 = vrot.slane %v1821, 5
      %v1890 = vsel %vm1853, %v1888, %v1889
      %v1891 = vrot.slane %v1889, 4
      %v1892 = vrot.slane %v1822, 5
      %v1893 = vsel %vm1853, %v1891, %v1892
      %v1894 = vrot.slane %v1892, 4
      %v1895 = vrot.slane %v1823, 5
      %v1896 = vsel %vm1853, %v1894, %v1895
      %v1897 = vrot.slane %v1895, 4
      %v1898 = vrot.slane %v1824, 5
      %v1899 = vsel %vm1853, %v1897, %v1898
      %v1900 = vrot.slane %v1898, 4
      %v1901 = vrot.slane %v1825, 5
      %v1902 = vsel %vm1853, %v1900, %v1901
      %v1903 = vrot.slane %v1901, 4
      %v1904 = vrot.slane %v1826, 5
      %v1905 = vsel %vm1853, %v1903, %v1904
      %v1906 = vrot.slane %v1904, 4
      %v1907 = vrot.slane %v1827, 5
      %v1908 = vsel %vm1853, %v1906, %v1907
      %v1909 = vrot.slane %v1907, 4
      %v1910 = vrot.slane %v1828, 5
      %v1911 = vsel %vm1853, %v1909, %v1910
      %v1912 = vrot.slane %v1910, 4
      %v1913 = vrot.slane %v1829, 5
      %v1914 = vsel %vm1853, %v1912, %v1913
      %1935 = vst [vmem:[#allocation3] sm:$0xf] %v1857
      %1936 = vst [vmem:[#allocation3 + $0x4] sm:$0xf] %v1860
      %1937 = vst [vmem:[#allocation3 + $0x8] sm:$0xf] %v1863
      %1938 = vst [vmem:[#allocation3 + $0xc] sm:$0xf] %v1866
      %1939 = vst [vmem:[#allocation3 + $0x10] sm:$0xf] %v1869
      %1940 = vst [vmem:[#allocation3 + $0x14] sm:$0xf] %v1872
      %1941 = vst [vmem:[#allocation3 + $0x18] sm:$0xf] %v1875
      %1942 = vst [vmem:[#allocation3 + $0x1c] sm:$0xf] %v1878
      %1943 = vst [vmem:[#allocation3 + $0x20] sm:$0xf] %v1881
      %1944 = vst [vmem:[#allocation3 + $0x24] sm:$0xf] %v1884
      %1945 = vst [vmem:[#allocation3 + $0x28] sm:$0xf] %v1887
      %1946 = vst [vmem:[#allocation3 + $0x2c] sm:$0xf] %v1890
      %1947 = vst [vmem:[#allocation3 + $0x30] sm:$0xf] %v1893
      %1948 = vst [vmem:[#allocation3 + $0x34] sm:$0xf] %v1896
      %1949 = vst [vmem:[#allocation3 + $0x38] sm:$0xf] %v1899
      %1950 = vst [vmem:[#allocation3 + $0x3c] sm:$0xf] %v1902
      %1951 = vst [vmem:[#allocation3 + $0x40] sm:$0xf] %v1905
      %1952 = vst [vmem:[#allocation3 + $0x44] sm:$0xf] %v1908
      %1953 = vst [vmem:[#allocation3 + $0x48] sm:$0xf] %v1911
      %1954 = vst [vmem:[#allocation3 + $0x4c] sm:$0xf] %v1914
      %v1955 = vld [vmem:[#allocation3] sm:$0xf]
      %v1956 = vld [vmem:[#allocation3 + $0x4] sm:$0xf]
      %v1957 = vld [vmem:[#allocation3 + $0x8] sm:$0xf]
      %v1958 = vld [vmem:[#allocation3 + $0xc] sm:$0xf]
      %v1959 = vld [vmem:[#allocation3 + $0x10] sm:$0xf]
      %v1960 = vld [vmem:[#allocation3 + $0x14] sm:$0xf]
      %v1961 = vld [vmem:[#allocation3 + $0x18] sm:$0xf]
      %v1962 = vld [vmem:[#allocation3 + $0x1c] sm:$0xf]
      %v1963 = vld [vmem:[#allocation3 + $0x20] sm:$0xf]
      %v1964 = vld [vmem:[#allocation3 + $0x24] sm:$0xf]
      %v1965 = vld [vmem:[#allocation3 + $0x28] sm:$0xf]
      %v1966 = vld [vmem:[#allocation3 + $0x2c] sm:$0xf]
      %v1967 = vld [vmem:[#allocation3 + $0x30] sm:$0xf]
      %v1968 = vld [vmem:[#allocation3 + $0x34] sm:$0xf]
      %v1969 = vld [vmem:[#allocation3 + $0x38] sm:$0xf]
      %v1970 = vld [vmem:[#allocation3 + $0x3c] sm:$0xf]
      %s1971 = scalar_lea.vmem %s1, 128
      %v1972 = vld [vmem:[%s1971] sm:$0xf]
      %v1973 = vld [vmem:[%s1971 + $0x4] sm:$0xf]
      %v1974 = vld [vmem:[%s1971 + $0x8] sm:$0xf]
      %v1975 = vld [vmem:[%s1971 + $0xc] sm:$0xf]
      %v1976 = vld [vmem:[%s1971 + $0x10] sm:$0xf]
      %v1977 = vld [vmem:[%s1971 + $0x14] sm:$0xf]
      %v1978 = vld [vmem:[%s1971 + $0x18] sm:$0xf]
      %v1979 = vld [vmem:[%s1971 + $0x1c] sm:$0xf]
      %v1980 = vld [vmem:[%s1971 + $0x20] sm:$0xf]
      %v1981 = vld [vmem:[%s1971 + $0x24] sm:$0xf]
      %v1982 = vld [vmem:[%s1971 + $0x28] sm:$0xf]
      %v1983 = vld [vmem:[%s1971 + $0x2c] sm:$0xf]
      %v1984 = vld [vmem:[%s1971 + $0x30] sm:$0xf]
      %v1985 = vld [vmem:[%s1971 + $0x34] sm:$0xf]
      %v1986 = vld [vmem:[%s1971 + $0x38] sm:$0xf]
      %v1987 = vld [vmem:[%s1971 + $0x3c] sm:$0xf]
      %v2004 = vunpack.c.l.b16 %v1955
      %v2005 = vunpack.c.l.b16 %v1956
      %v2006 = vunpack.c.l.b16 %v1957
      %v2007 = vunpack.c.l.b16 %v1958
      %v2008 = vunpack.c.l.b16 %v1959
      %v2009 = vunpack.c.l.b16 %v1960
      %v2010 = vunpack.c.l.b16 %v1961
      %v2011 = vunpack.c.l.b16 %v1962
      %v2012 = vunpack.c.l.b16 %v1963
      %v2013 = vunpack.c.l.b16 %v1964
      %v2014 = vunpack.c.l.b16 %v1965
      %v2015 = vunpack.c.l.b16 %v1966
      %v2016 = vunpack.c.l.b16 %v1967
      %v2017 = vunpack.c.l.b16 %v1968
      %v2018 = vunpack.c.l.b16 %v1969
      %v2019 = vunpack.c.l.b16 %v1970
      %v2020 = vpack.c.b16 %v2005, %v2004
      %v2021 = vpack.c.b16 %v2007, %v2006
      %v2022 = vpack.c.b16 %v2009, %v2008
      %v2023 = vpack.c.b16 %v2011, %v2010
      %v2024 = vpack.c.b16 %v2013, %v2012
      %v2025 = vpack.c.b16 %v2015, %v2014
      %v2026 = vpack.c.b16 %v2017, %v2016
      %v2027 = vpack.c.b16 %v2019, %v2018
      %v2052 = vunpack.c.l.b16 %v1972
      %v2053 = vunpack.c.l.b16 %v1973
      %v2054 = vunpack.c.l.b16 %v1974
      %v2055 = vunpack.c.l.b16 %v1975
      %v2056 = vunpack.c.l.b16 %v1976
      %v2057 = vunpack.c.l.b16 %v1977
      %v2058 = vunpack.c.l.b16 %v1978
      %v2059 = vunpack.c.l.b16 %v1979
      %v2060 = vunpack.c.l.b16 %v1980
      %v2061 = vunpack.c.l.b16 %v1981
      %v2062 = vunpack.c.l.b16 %v1982
      %v2063 = vunpack.c.l.b16 %v1983
      %v2064 = vunpack.c.l.b16 %v1984
      %v2065 = vunpack.c.l.b16 %v1985
      %v2066 = vunpack.c.l.b16 %v1986
      %v2067 = vunpack.c.l.b16 %v1987
      %v2068 = vpack.c.b16 %v2053, %v2052
      %v2069 = vpack.c.b16 %v2055, %v2054
      %v2070 = vpack.c.b16 %v2057, %v2056
      %v2071 = vpack.c.b16 %v2059, %v2058
      %v2072 = vpack.c.b16 %v2061, %v2060
      %v2073 = vpack.c.b16 %v2063, %v2062
      %v2074 = vpack.c.b16 %v2065, %v2064
      %v2075 = vpack.c.b16 %v2067, %v2066
      %2084 = vmatpush.bf16.msra.mxu0 %v2075
      %2085 = vmatpush.bf16.msra.mxu0 %v2074
      %2086 = vmatpush.bf16.msra.mxu0 %v2073
      %2087 = vmatpush.bf16.msra.mxu0 %v2072
      %2088 = vmatpush.bf16.msra.mxu0 %v2071
      %2089 = vmatpush.bf16.msra.mxu0 %v2070
      %2090 = vmatpush.bf16.msra.mxu0 %v2069
      %2091 = vmatpush.bf16.msra.mxu0 %v2068
      %2092 = vmatmul.bf16.gmra.mxu0 %v2020
      %v2093 = vpop.f32.mrf.mxu0
      %v2094 = vadd.f32 0.0, %v2093
      %v2095 = vpop.f32.mrf.mxu0
      %v2096 = vadd.f32 0.0, %v2095
      %2097 = vmatmul.bf16.gmra.mxu0 %v2021
      %v2098 = vpop.f32.mrf.mxu0
      %v2099 = vadd.f32 0.0, %v2098
      %v2100 = vpop.f32.mrf.mxu0
      %v2101 = vadd.f32 0.0, %v2100
      %2102 = vmatmul.bf16.gmra.mxu0 %v2022
      %v2103 = vpop.f32.mrf.mxu0
      %v2104 = vadd.f32 0.0, %v2103
      %v2105 = vpop.f32.mrf.mxu0
      %v2106 = vadd.f32 0.0, %v2105
      %2107 = vmatmul.bf16.gmra.mxu0 %v2023
      %v2108 = vpop.f32.mrf.mxu0
      %v2109 = vadd.f32 0.0, %v2108
      %v2110 = vpop.f32.mrf.mxu0
      %v2111 = vadd.f32 0.0, %v2110
      %2112 = vmatmul.bf16.gmra.mxu0 %v2024
      %v2113 = vpop.f32.mrf.mxu0
      %v2114 = vadd.f32 0.0, %v2113
      %v2115 = vpop.f32.mrf.mxu0
      %v2116 = vadd.f32 0.0, %v2115
      %2117 = vmatmul.bf16.gmra.mxu0 %v2025
      %v2118 = vpop.f32.mrf.mxu0
      %v2119 = vadd.f32 0.0, %v2118
      %v2120 = vpop.f32.mrf.mxu0
      %v2121 = vadd.f32 0.0, %v2120
      %2122 = vmatmul.bf16.gmra.mxu0 %v2026
      %v2123 = vpop.f32.mrf.mxu0
      %v2124 = vadd.f32 0.0, %v2123
      %v2125 = vpop.f32.mrf.mxu0
      %v2126 = vadd.f32 0.0, %v2125
      %2127 = vmatmul.bf16.gmra.mxu0 %v2027
      %v2128 = vpop.f32.mrf.mxu0
      %v2129 = vadd.f32 0.0, %v2128
      %v2130 = vpop.f32.mrf.mxu0
      %v2131 = vadd.f32 0.0, %v2130
      %2132 = vdwg.mxu0
      %v2133 = vld [vmem:[#allocation2] sm:$0xff]
      %v2134 = vld [vmem:[#allocation2 + $0x8] sm:$0xff]
      %v2135 = vld [vmem:[#allocation2 + $0x10] sm:$0xff]
      %v2136 = vld [vmem:[#allocation2 + $0x18] sm:$0xff]
      %v2137 = vld [vmem:[#allocation2 + $0x20] sm:$0xff]
      %v2138 = vld [vmem:[#allocation2 + $0x28] sm:$0xff]
      %v2139 = vld [vmem:[#allocation2 + $0x30] sm:$0xff]
      %v2140 = vld [vmem:[#allocation2 + $0x38] sm:$0xff]
      %v2141 = vld [vmem:[#allocation2 + $0x40] sm:$0xff]
      %v2142 = vld [vmem:[#allocation2 + $0x48] sm:$0xff]
      %v2143 = vld [vmem:[#allocation2 + $0x50] sm:$0xff]
      %v2144 = vld [vmem:[#allocation2 + $0x58] sm:$0xff]
      %v2145 = vld [vmem:[#allocation2 + $0x60] sm:$0xff]
      %v2146 = vld [vmem:[#allocation2 + $0x68] sm:$0xff]
      %v2147 = vld [vmem:[#allocation2 + $0x70] sm:$0xff]
      %v2148 = vld [vmem:[#allocation2 + $0x78] sm:$0xff]
      %v2149 = vadd.f32 %v2133, %v2094
      %v2150 = vadd.f32 %v2134, %v2096
      %v2151 = vadd.f32 %v2135, %v2099
      %v2152 = vadd.f32 %v2136, %v2101
      %v2153 = vadd.f32 %v2137, %v2104
      %v2154 = vadd.f32 %v2138, %v2106
      %v2155 = vadd.f32 %v2139, %v2109
      %v2156 = vadd.f32 %v2140, %v2111
      %v2157 = vadd.f32 %v2141, %v2114
      %v2158 = vadd.f32 %v2142, %v2116
      %v2159 = vadd.f32 %v2143, %v2119
      %v2160 = vadd.f32 %v2144, %v2121
      %v2161 = vadd.f32 %v2145, %v2124
      %v2162 = vadd.f32 %v2146, %v2126
      %v2163 = vadd.f32 %v2147, %v2129
      %v2164 = vadd.f32 %v2148, %v2131
      %2165 = vst [vmem:[#allocation2] sm:$0xff] %v2149
      %2166 = vst [vmem:[#allocation2 + $0x8] sm:$0xff] %v2150
      %2167 = vst [vmem:[#allocation2 + $0x10] sm:$0xff] %v2151
      %2168 = vst [vmem:[#allocation2 + $0x18] sm:$0xff] %v2152
      %2169 = vst [vmem:[#allocation2 + $0x20] sm:$0xff] %v2153
      %2170 = vst [vmem:[#allocation2 + $0x28] sm:$0xff] %v2154
      %2171 = vst [vmem:[#allocation2 + $0x30] sm:$0xff] %v2155
      %2172 = vst [vmem:[#allocation2 + $0x38] sm:$0xff] %v2156
      %2173 = vst [vmem:[#allocation2 + $0x40] sm:$0xff] %v2157
      %2174 = vst [vmem:[#allocation2 + $0x48] sm:$0xff] %v2158
      %2175 = vst [vmem:[#allocation2 + $0x50] sm:$0xff] %v2159
      %2176 = vst [vmem:[#allocation2 + $0x58] sm:$0xff] %v2160
      %2177 = vst [vmem:[#allocation2 + $0x60] sm:$0xff] %v2161
      %2178 = vst [vmem:[#allocation2 + $0x68] sm:$0xff] %v2162
      %2179 = vst [vmem:[#allocation2 + $0x70] sm:$0xff] %v2163
      %2180 = vst [vmem:[#allocation2 + $0x78] sm:$0xff] %v2164
      %v2181 = vld [vmem:[#allocation3 + $0x8] sm:$0xf]
      %v2182 = vld [vmem:[#allocation3 + $0xc] sm:$0xf]
      %v2183 = vld [vmem:[#allocation3 + $0x10] sm:$0xf]
      %v2184 = vld [vmem:[#allocation3 + $0x14] sm:$0xf]
      %v2185 = vld [vmem:[#allocation3 + $0x18] sm:$0xf]
      %v2186 = vld [vmem:[#allocation3 + $0x1c] sm:$0xf]
      %v2187 = vld [vmem:[#allocation3 + $0x20] sm:$0xf]
      %v2188 = vld [vmem:[#allocation3 + $0x24] sm:$0xf]
      %v2189 = vld [vmem:[#allocation3 + $0x28] sm:$0xf]
      %v2190 = vld [vmem:[#allocation3 + $0x2c] sm:$0xf]
      %v2191 = vld [vmem:[#allocation3 + $0x30] sm:$0xf]
      %v2192 = vld [vmem:[#allocation3 + $0x34] sm:$0xf]
      %v2193 = vld [vmem:[#allocation3 + $0x38] sm:$0xf]
      %v2194 = vld [vmem:[#allocation3 + $0x3c] sm:$0xf]
      %v2195 = vld [vmem:[#allocation3 + $0x40] sm:$0xf]
      %v2196 = vld [vmem:[#allocation3 + $0x44] sm:$0xf]
      %s2197 = scalar_lea.vmem %s1, 320
      %v2198 = vld [vmem:[%s2197] sm:$0xf]
      %v2199 = vld [vmem:[%s2197 + $0x4] sm:$0xf]
      %v2200 = vld [vmem:[%s2197 + $0x8] sm:$0xf]
      %v2201 = vld [vmem:[%s2197 + $0xc] sm:$0xf]
      %v2202 = vld [vmem:[%s2197 + $0x10] sm:$0xf]
      %v2203 = vld [vmem:[%s2197 + $0x14] sm:$0xf]
      %v2204 = vld [vmem:[%s2197 + $0x18] sm:$0xf]
      %v2205 = vld [vmem:[%s2197 + $0x1c] sm:$0xf]
      %v2206 = vld [vmem:[%s2197 + $0x20] sm:$0xf]
      %v2207 = vld [vmem:[%s2197 + $0x24] sm:$0xf]
      %v2208 = vld [vmem:[%s2197 + $0x28] sm:$0xf]
      %v2209 = vld [vmem:[%s2197 + $0x2c] sm:$0xf]
      %v2210 = vld [vmem:[%s2197 + $0x30] sm:$0xf]
      %v2211 = vld [vmem:[%s2197 + $0x34] sm:$0xf]
      %v2212 = vld [vmem:[%s2197 + $0x38] sm:$0xf]
      %v2213 = vld [vmem:[%s2197 + $0x3c] sm:$0xf]
      %v2230 = vunpack.c.l.b16 %v2181
      %v2231 = vunpack.c.l.b16 %v2182
      %v2232 = vunpack.c.l.b16 %v2183
      %v2233 = vunpack.c.l.b16 %v2184
      %v2234 = vunpack.c.l.b16 %v2185
      %v2235 = vunpack.c.l.b16 %v2186
      %v2236 = vunpack.c.l.b16 %v2187
      %v2237 = vunpack.c.l.b16 %v2188
      %v2238 = vunpack.c.l.b16 %v2189
      %v2239 = vunpack.c.l.b16 %v2190
      %v2240 = vunpack.c.l.b16 %v2191
      %v2241 = vunpack.c.l.b16 %v2192
      %v2242 = vunpack.c.l.b16 %v2193
      %v2243 = vunpack.c.l.b16 %v2194
      %v2244 = vunpack.c.l.b16 %v2195
      %v2245 = vunpack.c.l.b16 %v2196
      %v2246 = vpack.c.b16 %v2231, %v2230
      %v2247 = vpack.c.b16 %v2233, %v2232
      %v2248 = vpack.c.b16 %v2235, %v2234
      %v2249 = vpack.c.b16 %v2237, %v2236
      %v2250 = vpack.c.b16 %v2239, %v2238
      %v2251 = vpack.c.b16 %v2241, %v2240
      %v2252 = vpack.c.b16 %v2243, %v2242
      %v2253 = vpack.c.b16 %v2245, %v2244
      %v2278 = vunpack.c.l.b16 %v2198
      %v2279 = vunpack.c.l.b16 %v2199
      %v2280 = vunpack.c.l.b16 %v2200
      %v2281 = vunpack.c.l.b16 %v2201
      %v2282 = vunpack.c.l.b16 %v2202
      %v2283 = vunpack.c.l.b16 %v2203
      %v2284 = vunpack.c.l.b16 %v2204
      %v2285 = vunpack.c.l.b16 %v2205
      %v2286 = vunpack.c.l.b16 %v2206
      %v2287 = vunpack.c.l.b16 %v2207
      %v2288 = vunpack.c.l.b16 %v2208
      %v2289 = vunpack.c.l.b16 %v2209
      %v2290 = vunpack.c.l.b16 %v2210
      %v2291 = vunpack.c.l.b16 %v2211
      %v2292 = vunpack.c.l.b16 %v2212
      %v2293 = vunpack.c.l.b16 %v2213
      %v2294 = vpack.c.b16 %v2279, %v2278
      %v2295 = vpack.c.b16 %v2281, %v2280
      %v2296 = vpack.c.b16 %v2283, %v2282
      %v2297 = vpack.c.b16 %v2285, %v2284
      %v2298 = vpack.c.b16 %v2287, %v2286
      %v2299 = vpack.c.b16 %v2289, %v2288
      %v2300 = vpack.c.b16 %v2291, %v2290
      %v2301 = vpack.c.b16 %v2293, %v2292
      %2310 = vmatpush.bf16.msra.mxu0 %v2301
      %2311 = vmatpush.bf16.msra.mxu0 %v2300
      %2312 = vmatpush.bf16.msra.mxu0 %v2299
      %2313 = vmatpush.bf16.msra.mxu0 %v2298
      %2314 = vmatpush.bf16.msra.mxu0 %v2297
      %2315 = vmatpush.bf16.msra.mxu0 %v2296
      %2316 = vmatpush.bf16.msra.mxu0 %v2295
      %2317 = vmatpush.bf16.msra.mxu0 %v2294
      %2318 = vmatmul.bf16.gmra.mxu0 %v2246
      %v2319 = vpop.f32.mrf.mxu0
      %v2320 = vadd.f32 0.0, %v2319
      %v2321 = vpop.f32.mrf.mxu0
      %v2322 = vadd.f32 0.0, %v2321
      %2323 = vmatmul.bf16.gmra.mxu0 %v2247
      %v2324 = vpop.f32.mrf.mxu0
      %v2325 = vadd.f32 0.0, %v2324
      %v2326 = vpop.f32.mrf.mxu0
      %v2327 = vadd.f32 0.0, %v2326
      %2328 = vmatmul.bf16.gmra.mxu0 %v2248
      %v2329 = vpop.f32.mrf.mxu0
      %v2330 = vadd.f32 0.0, %v2329
      %v2331 = vpop.f32.mrf.mxu0
      %v2332 = vadd.f32 0.0, %v2331
      %2333 = vmatmul.bf16.gmra.mxu0 %v2249
      %v2334 = vpop.f32.mrf.mxu0
      %v2335 = vadd.f32 0.0, %v2334
      %v2336 = vpop.f32.mrf.mxu0
      %v2337 = vadd.f32 0.0, %v2336
      %2338 = vmatmul.bf16.gmra.mxu0 %v2250
      %v2339 = vpop.f32.mrf.mxu0
      %v2340 = vadd.f32 0.0, %v2339
      %v2341 = vpop.f32.mrf.mxu0
      %v2342 = vadd.f32 0.0, %v2341
      %2343 = vmatmul.bf16.gmra.mxu0 %v2251
      %v2344 = vpop.f32.mrf.mxu0
      %v2345 = vadd.f32 0.0, %v2344
      %v2346 = vpop.f32.mrf.mxu0
      %v2347 = vadd.f32 0.0, %v2346
      %2348 = vmatmul.bf16.gmra.mxu0 %v2252
      %v2349 = vpop.f32.mrf.mxu0
      %v2350 = vadd.f32 0.0, %v2349
      %v2351 = vpop.f32.mrf.mxu0
      %v2352 = vadd.f32 0.0, %v2351
      %2353 = vmatmul.bf16.gmra.mxu0 %v2253
      %v2354 = vpop.f32.mrf.mxu0
      %v2355 = vadd.f32 0.0, %v2354
      %v2356 = vpop.f32.mrf.mxu0
      %v2357 = vadd.f32 0.0, %v2356
      %2358 = vdwg.mxu0
      %v2359 = vld [vmem:[#allocation2] sm:$0xff]
      %v2360 = vld [vmem:[#allocation2 + $0x8] sm:$0xff]
      %v2361 = vld [vmem:[#allocation2 + $0x10] sm:$0xff]
      %v2362 = vld [vmem:[#allocation2 + $0x18] sm:$0xff]
      %v2363 = vld [vmem:[#allocation2 + $0x20] sm:$0xff]
      %v2364 = vld [vmem:[#allocation2 + $0x28] sm:$0xff]
      %v2365 = vld [vmem:[#allocation2 + $0x30] sm:$0xff]
      %v2366 = vld [vmem:[#allocation2 + $0x38] sm:$0xff]
      %v2367 = vld [vmem:[#allocation2 + $0x40] sm:$0xff]
      %v2368 = vld [vmem:[#allocation2 + $0x48] sm:$0xff]
      %v2369 = vld [vmem:[#allocation2 + $0x50] sm:$0xff]
      %v2370 = vld [vmem:[#allocation2 + $0x58] sm:$0xff]
      %v2371 = vld [vmem:[#allocation2 + $0x60] sm:$0xff]
      %v2372 = vld [vmem:[#allocation2 + $0x68] sm:$0xff]
      %v2373 = vld [vmem:[#allocation2 + $0x70] sm:$0xff]
      %v2374 = vld [vmem:[#allocation2 + $0x78] sm:$0xff]
      %v2375 = vadd.f32 %v2359, %v2320
      %v2376 = vadd.f32 %v2360, %v2322
      %v2377 = vadd.f32 %v2361, %v2325
      %v2378 = vadd.f32 %v2362, %v2327
      %v2379 = vadd.f32 %v2363, %v2330
      %v2380 = vadd.f32 %v2364, %v2332
      %v2381 = vadd.f32 %v2365, %v2335
      %v2382 = vadd.f32 %v2366, %v2337
      %v2383 = vadd.f32 %v2367, %v2340
      %v2384 = vadd.f32 %v2368, %v2342
      %v2385 = vadd.f32 %v2369, %v2345
      %v2386 = vadd.f32 %v2370, %v2347
      %v2387 = vadd.f32 %v2371, %v2350
      %v2388 = vadd.f32 %v2372, %v2352
      %v2389 = vadd.f32 %v2373, %v2355
      %v2390 = vadd.f32 %v2374, %v2357
      %2391 = vst [vmem:[#allocation2] sm:$0xff] %v2375
      %2392 = vst [vmem:[#allocation2 + $0x8] sm:$0xff] %v2376
      %2393 = vst [vmem:[#allocation2 + $0x10] sm:$0xff] %v2377
      %2394 = vst [vmem:[#allocation2 + $0x18] sm:$0xff] %v2378
      %2395 = vst [vmem:[#allocation2 + $0x20] sm:$0xff] %v2379
      %2396 = vst [vmem:[#allocation2 + $0x28] sm:$0xff] %v2380
      %2397 = vst [vmem:[#allocation2 + $0x30] sm:$0xff] %v2381
      %2398 = vst [vmem:[#allocation2 + $0x38] sm:$0xff] %v2382
      %2399 = vst [vmem:[#allocation2 + $0x40] sm:$0xff] %v2383
      %2400 = vst [vmem:[#allocation2 + $0x48] sm:$0xff] %v2384
      %2401 = vst [vmem:[#allocation2 + $0x50] sm:$0xff] %v2385
      %2402 = vst [vmem:[#allocation2 + $0x58] sm:$0xff] %v2386
      %2403 = vst [vmem:[#allocation2 + $0x60] sm:$0xff] %v2387
      %2404 = vst [vmem:[#allocation2 + $0x68] sm:$0xff] %v2388
      %2405 = vst [vmem:[#allocation2 + $0x70] sm:$0xff] %v2389
      %2406 = vst [vmem:[#allocation2 + $0x78] sm:$0xff] %v2390
      %v2407 = vld [vmem:[#allocation3 + $0x10] sm:$0xf]
      %v2408 = vld [vmem:[#allocation3 + $0x14] sm:$0xf]
      %v2409 = vld [vmem:[#allocation3 + $0x18] sm:$0xf]
      %v2410 = vld [vmem:[#allocation3 + $0x1c] sm:$0xf]
      %v2411 = vld [vmem:[#allocation3 + $0x20] sm:$0xf]
      %v2412 = vld [vmem:[#allocation3 + $0x24] sm:$0xf]
      %v2413 = vld [vmem:[#allocation3 + $0x28] sm:$0xf]
      %v2414 = vld [vmem:[#allocation3 + $0x2c] sm:$0xf]
      %v2415 = vld [vmem:[#allocation3 + $0x30] sm:$0xf]
      %v2416 = vld [vmem:[#allocation3 + $0x34] sm:$0xf]
      %v2417 = vld [vmem:[#allocation3 + $0x38] sm:$0xf]
      %v2418 = vld [vmem:[#allocation3 + $0x3c] sm:$0xf]
      %v2419 = vld [vmem:[#allocation3 + $0x40] sm:$0xf]
      %v2420 = vld [vmem:[#allocation3 + $0x44] sm:$0xf]
      %v2421 = vld [vmem:[#allocation3 + $0x48] sm:$0xf]
      %v2422 = vld [vmem:[#allocation3 + $0x4c] sm:$0xf]
      %s2423 = scalar_lea.vmem %s1, 512
      %v2424 = vld [vmem:[%s2423] sm:$0xf]
      %v2425 = vld [vmem:[%s2423 + $0x4] sm:$0xf]
      %v2426 = vld [vmem:[%s2423 + $0x8] sm:$0xf]
      %v2427 = vld [vmem:[%s2423 + $0xc] sm:$0xf]
      %v2428 = vld [vmem:[%s2423 + $0x10] sm:$0xf]
      %v2429 = vld [vmem:[%s2423 + $0x14] sm:$0xf]
      %v2430 = vld [vmem:[%s2423 + $0x18] sm:$0xf]
      %v2431 = vld [vmem:[%s2423 + $0x1c] sm:$0xf]
      %v2432 = vld [vmem:[%s2423 + $0x20] sm:$0xf]
      %v2433 = vld [vmem:[%s2423 + $0x24] sm:$0xf]
      %v2434 = vld [vmem:[%s2423 + $0x28] sm:$0xf]
      %v2435 = vld [vmem:[%s2423 + $0x2c] sm:$0xf]
      %v2436 = vld [vmem:[%s2423 + $0x30] sm:$0xf]
      %v2437 = vld [vmem:[%s2423 + $0x34] sm:$0xf]
      %v2438 = vld [vmem:[%s2423 + $0x38] sm:$0xf]
      %v2439 = vld [vmem:[%s2423 + $0x3c] sm:$0xf]
      %v2456 = vunpack.c.l.b16 %v2407
      %v2457 = vunpack.c.l.b16 %v2408
      %v2458 = vunpack.c.l.b16 %v2409
      %v2459 = vunpack.c.l.b16 %v2410
      %v2460 = vunpack.c.l.b16 %v2411
      %v2461 = vunpack.c.l.b16 %v2412
      %v2462 = vunpack.c.l.b16 %v2413
      %v2463 = vunpack.c.l.b16 %v2414
      %v2464 = vunpack.c.l.b16 %v2415
      %v2465 = vunpack.c.l.b16 %v2416
      %v2466 = vunpack.c.l.b16 %v2417
      %v2467 = vunpack.c.l.b16 %v2418
      %v2468 = vunpack.c.l.b16 %v2419
      %v2469 = vunpack.c.l.b16 %v2420
      %v2470 = vunpack.c.l.b16 %v2421
      %v2471 = vunpack.c.l.b16 %v2422
      %v2472 = vpack.c.b16 %v2457, %v2456
      %v2473 = vpack.c.b16 %v2459, %v2458
      %v2474 = vpack.c.b16 %v2461, %v2460
      %v2475 = vpack.c.b16 %v2463, %v2462
      %v2476 = vpack.c.b16 %v2465, %v2464
      %v2477 = vpack.c.b16 %v2467, %v2466
      %v2478 = vpack.c.b16 %v2469, %v2468
      %v2479 = vpack.c.b16 %v2471, %v2470
      %v2504 = vunpack.c.l.b16 %v2424
      %v2505 = vunpack.c.l.b16 %v2425
      %v2506 = vunpack.c.l.b16 %v2426
      %v2507 = vunpack.c.l.b16 %v2427
      %v2508 = vunpack.c.l.b16 %v2428
      %v2509 = vunpack.c.l.b16 %v2429
      %v2510 = vunpack.c.l.b16 %v2430
      %v2511 = vunpack.c.l.b16 %v2431
      %v2512 = vunpack.c.l.b16 %v2432
      %v2513 = vunpack.c.l.b16 %v2433
      %v2514 = vunpack.c.l.b16 %v2434
      %v2515 = vunpack.c.l.b16 %v2435
      %v2516 = vunpack.c.l.b16 %v2436
      %v2517 = vunpack.c.l.b16 %v2437
      %v2518 = vunpack.c.l.b16 %v2438
      %v2519 = vunpack.c.l.b16 %v2439
      %v2520 = vpack.c.b16 %v2505, %v2504
      %v2521 = vpack.c.b16 %v2507, %v2506
      %v2522 = vpack.c.b16 %v2509, %v2508
      %v2523 = vpack.c.b16 %v2511, %v2510
      %v2524 = vpack.c.b16 %v2513, %v2512
      %v2525 = vpack.c.b16 %v2515, %v2514
      %v2526 = vpack.c.b16 %v2517, %v2516
      %v2527 = vpack.c.b16 %v2519, %v2518
      %2536 = vmatpush.bf16.msra.mxu0 %v2527
      %2537 = vmatpush.bf16.msra.mxu0 %v2526
      %2538 = vmatpush.bf16.msra.mxu0 %v2525
      %2539 = vmatpush.bf16.msra.mxu0 %v2524
      %2540 = vmatpush.bf16.msra.mxu0 %v2523
      %2541 = vmatpush.bf16.msra.mxu0 %v2522
      %2542 = vmatpush.bf16.msra.mxu0 %v2521
      %2543 = vmatpush.bf16.msra.mxu0 %v2520
      %2544 = vmatmul.bf16.gmra.mxu0 %v2472
      %v2545 = vpop.f32.mrf.mxu0
      %v2546 = vadd.f32 0.0, %v2545
      %v2547 = vpop.f32.mrf.mxu0
      %v2548 = vadd.f32 0.0, %v2547
      %2549 = vmatmul.bf16.gmra.mxu0 %v2473
      %v2550 = vpop.f32.mrf.mxu0
      %v2551 = vadd.f32 0.0, %v2550
      %v2552 = vpop.f32.mrf.mxu0
      %v2553 = vadd.f32 0.0, %v2552
      %2554 = vmatmul.bf16.gmra.mxu0 %v2474
      %v2555 = vpop.f32.mrf.mxu0
      %v2556 = vadd.f32 0.0, %v2555
      %v2557 = vpop.f32.mrf.mxu0
      %v2558 = vadd.f32 0.0, %v2557
      %2559 = vmatmul.bf16.gmra.mxu0 %v2475
      %v2560 = vpop.f32.mrf.mxu0
      %v2561 = vadd.f32 0.0, %v2560
      %v2562 = vpop.f32.mrf.mxu0
      %v2563 = vadd.f32 0.0, %v2562
      %2564 = vmatmul.bf16.gmra.mxu0 %v2476
      %v2565 = vpop.f32.mrf.mxu0
      %v2566 = vadd.f32 0.0, %v2565
      %v2567 = vpop.f32.mrf.mxu0
      %v2568 = vadd.f32 0.0, %v2567
      %2569 = vmatmul.bf16.gmra.mxu0 %v2477
      %v2570 = vpop.f32.mrf.mxu0
      %v2571 = vadd.f32 0.0, %v2570
      %v2572 = vpop.f32.mrf.mxu0
      %v2573 = vadd.f32 0.0, %v2572
      %2574 = vmatmul.bf16.gmra.mxu0 %v2478
      %v2575 = vpop.f32.mrf.mxu0
      %v2576 = vadd.f32 0.0, %v2575
      %v2577 = vpop.f32.mrf.mxu0
      %v2578 = vadd.f32 0.0, %v2577
      %2579 = vmatmul.bf16.gmra.mxu0 %v2479
      %v2580 = vpop.f32.mrf.mxu0
      %v2581 = vadd.f32 0.0, %v2580
      %v2582 = vpop.f32.mrf.mxu0
      %v2583 = vadd.f32 0.0, %v2582
      %2584 = vdwg.mxu0
      %v2585 = vld [vmem:[#allocation2] sm:$0xff]
      %v2586 = vld [vmem:[#allocation2 + $0x8] sm:$0xff]
      %v2587 = vld [vmem:[#allocation2 + $0x10] sm:$0xff]
      %v2588 = vld [vmem:[#allocation2 + $0x18] sm:$0xff]
      %v2589 = vld [vmem:[#allocation2 + $0x20] sm:$0xff]
      %v2590 = vld [vmem:[#allocation2 + $0x28] sm:$0xff]
      %v2591 = vld [vmem:[#allocation2 + $0x30] sm:$0xff]
      %v2592 = vld [vmem:[#allocation2 + $0x38] sm:$0xff]
      %v2593 = vld [vmem:[#allocation2 + $0x40] sm:$0xff]
      %v2594 = vld [vmem:[#allocation2 + $0x48] sm:$0xff]
      %v2595 = vld [vmem:[#allocation2 + $0x50] sm:$0xff]
      %v2596 = vld [vmem:[#allocation2 + $0x58] sm:$0xff]
      %v2597 = vld [vmem:[#allocation2 + $0x60] sm:$0xff]
      %v2598 = vld [vmem:[#allocation2 + $0x68] sm:$0xff]
      %v2599 = vld [vmem:[#allocation2 + $0x70] sm:$0xff]
      %v2600 = vld [vmem:[#allocation2 + $0x78] sm:$0xff]
      %v2601 = vadd.f32 %v2585, %v2546
      %v2602 = vadd.f32 %v2586, %v2548
      %v2603 = vadd.f32 %v2587, %v2551
      %v2604 = vadd.f32 %v2588, %v2553
      %v2605 = vadd.f32 %v2589, %v2556
      %v2606 = vadd.f32 %v2590, %v2558
      %v2607 = vadd.f32 %v2591, %v2561
      %v2608 = vadd.f32 %v2592, %v2563
      %v2609 = vadd.f32 %v2593, %v2566
      %v2610 = vadd.f32 %v2594, %v2568
      %v2611 = vadd.f32 %v2595, %v2571
      %v2612 = vadd.f32 %v2596, %v2573
      %v2613 = vadd.f32 %v2597, %v2576
      %v2614 = vadd.f32 %v2598, %v2578
      %v2615 = vadd.f32 %v2599, %v2581
      %v2616 = vadd.f32 %v2600, %v2583
      %2617 = vst [vmem:[#allocation2] sm:$0xff] %v2601
      %2618 = vst [vmem:[#allocation2 + $0x8] sm:$0xff] %v2602
      %2619 = vst [vmem:[#allocation2 + $0x10] sm:$0xff] %v2603
      %2620 = vst [vmem:[#allocation2 + $0x18] sm:$0xff] %v2604
      %2621 = vst [vmem:[#allocation2 + $0x20] sm:$0xff] %v2605
      %2622 = vst [vmem:[#allocation2 + $0x28] sm:$0xff] %v2606
      %2623 = vst [vmem:[#allocation2 + $0x30] sm:$0xff] %v2607
      %2624 = vst [vmem:[#allocation2 + $0x38] sm:$0xff] %v2608
      %2625 = vst [vmem:[#allocation2 + $0x40] sm:$0xff] %v2609
      %2626 = vst [vmem:[#allocation2 + $0x48] sm:$0xff] %v2610
      %2627 = vst [vmem:[#allocation2 + $0x50] sm:$0xff] %v2611
      %2628 = vst [vmem:[#allocation2 + $0x58] sm:$0xff] %v2612
      %2629 = vst [vmem:[#allocation2 + $0x60] sm:$0xff] %v2613
      %2630 = vst [vmem:[#allocation2 + $0x68] sm:$0xff] %v2614
      %2631 = vst [vmem:[#allocation2 + $0x70] sm:$0xff] %v2615
      %2632 = vst [vmem:[#allocation2 + $0x78] sm:$0xff] %v2616
      %v2633 = vld [vmem:[#allocation2] sm:$0xff]
      %v2634 = vld [vmem:[#allocation2 + $0x8] sm:$0xff]
      %v2635 = vld [vmem:[#allocation2 + $0x10] sm:$0xff]
      %v2636 = vld [vmem:[#allocation2 + $0x18] sm:$0xff]
      %v2637 = vld [vmem:[#allocation2 + $0x20] sm:$0xff]
      %v2638 = vld [vmem:[#allocation2 + $0x28] sm:$0xff]
      %v2639 = vld [vmem:[#allocation2 + $0x30] sm:$0xff]
      %v2640 = vld [vmem:[#allocation2 + $0x38] sm:$0xff]
      %v2641 = vld [vmem:[#allocation2 + $0x40] sm:$0xff]
      %v2642 = vld [vmem:[#allocation2 + $0x48] sm:$0xff]
      %v2643 = vld [vmem:[#allocation2 + $0x50] sm:$0xff]
      %v2644 = vld [vmem:[#allocation2 + $0x58] sm:$0xff]
      %v2645 = vld [vmem:[#allocation2 + $0x60] sm:$0xff]
      %v2646 = vld [vmem:[#allocation2 + $0x68] sm:$0xff]
      %v2647 = vld [vmem:[#allocation2 + $0x70] sm:$0xff]
      %v2648 = vld [vmem:[#allocation2 + $0x78] sm:$0xff]
      %v2649 = vld [vmem:[%s2] sm:$0x1]
      %v2651 = vperm.slane %v2649, 0
      %v2653 = vadd.f32 %v2633, %v2651
      %v2654 = vadd.f32 %v2634, %v2651
      %v2655 = vadd.f32 %v2635, %v2651
      %v2656 = vadd.f32 %v2636, %v2651
      %v2657 = vadd.f32 %v2637, %v2651
      %v2658 = vadd.f32 %v2638, %v2651
      %v2659 = vadd.f32 %v2639, %v2651
      %v2660 = vadd.f32 %v2640, %v2651
      %v2661 = vadd.f32 %v2641, %v2651
      %v2662 = vadd.f32 %v2642, %v2651
      %v2663 = vadd.f32 %v2643, %v2651
      %v2664 = vadd.f32 %v2644, %v2651
      %v2665 = vadd.f32 %v2645, %v2651
      %v2666 = vadd.f32 %v2646, %v2651
      %v2667 = vadd.f32 %v2647, %v2651
      %v2668 = vadd.f32 %v2648, %v2651
      %v2669 = vld [vmem:[%s212] sm:$0xf]
      %v2670 = vld [vmem:[%s212 + $0x4] sm:$0xf]
      %v2671 = vld [vmem:[%s212 + $0x8] sm:$0xf]
      %v2672 = vld [vmem:[%s212 + $0xc] sm:$0xf]
      %v2673 = vld [vmem:[%s212 + $0x10] sm:$0xf]
      %v2674 = vld [vmem:[%s212 + $0x14] sm:$0xf]
      %v2675 = vld [vmem:[%s212 + $0x18] sm:$0xf]
      %v2676 = vld [vmem:[%s212 + $0x1c] sm:$0xf]
      %v2677 = vld [vmem:[%s212 + $0x20] sm:$0xf]
      %v2678 = vld [vmem:[%s212 + $0x24] sm:$0xf]
      %v2679 = vld [vmem:[%s212 + $0x28] sm:$0xf]
      %v2680 = vld [vmem:[%s212 + $0x2c] sm:$0xf]
      %v2681 = vld [vmem:[%s212 + $0x30] sm:$0xf]
      %v2682 = vld [vmem:[%s212 + $0x34] sm:$0xf]
      %v2683 = vld [vmem:[%s212 + $0x38] sm:$0xf]
      %v2684 = vld [vmem:[%s212 + $0x3c] sm:$0xf]
      %v2685 = vunpack.c.l.bf16 %v2669
      %v2686 = vunpack.c.l.bf16 %v2670
      %v2687 = vunpack.c.l.bf16 %v2671
      %v2688 = vunpack.c.l.bf16 %v2672
      %v2689 = vunpack.c.l.bf16 %v2673
      %v2690 = vunpack.c.l.bf16 %v2674
      %v2691 = vunpack.c.l.bf16 %v2675
      %v2692 = vunpack.c.l.bf16 %v2676
      %v2693 = vunpack.c.l.bf16 %v2677
      %v2694 = vunpack.c.l.bf16 %v2678
      %v2695 = vunpack.c.l.bf16 %v2679
      %v2696 = vunpack.c.l.bf16 %v2680
      %v2697 = vunpack.c.l.bf16 %v2681
      %v2698 = vunpack.c.l.bf16 %v2682
      %v2699 = vunpack.c.l.bf16 %v2683
      %v2700 = vunpack.c.l.bf16 %v2684
      %v2701 = vadd.f32 %v2653, %v2685
      %v2702 = vadd.f32 %v2654, %v2686
      %v2703 = vadd.f32 %v2655, %v2687
      %v2704 = vadd.f32 %v2656, %v2688
      %v2705 = vadd.f32 %v2657, %v2689
      %v2706 = vadd.f32 %v2658, %v2690
      %v2707 = vadd.f32 %v2659, %v2691
      %v2708 = vadd.f32 %v2660, %v2692
      %v2709 = vadd.f32 %v2661, %v2693
      %v2710 = vadd.f32 %v2662, %v2694
      %v2711 = vadd.f32 %v2663, %v2695
      %v2712 = vadd.f32 %v2664, %v2696
      %v2713 = vadd.f32 %v2665, %v2697
      %v2714 = vadd.f32 %v2666, %v2698
      %v2715 = vadd.f32 %v2667, %v2699
      %v2716 = vadd.f32 %v2668, %v2700
      %v2717 = vmax.f32 %v2701, 0.0
      %v2718 = vmax.f32 %v2702, 0.0
      %v2719 = vmax.f32 %v2703, 0.0
      %v2720 = vmax.f32 %v2704, 0.0
      %v2721 = vmax.f32 %v2705, 0.0
      %v2722 = vmax.f32 %v2706, 0.0
      %v2723 = vmax.f32 %v2707, 0.0
      %v2724 = vmax.f32 %v2708, 0.0
      %v2725 = vmax.f32 %v2709, 0.0
      %v2726 = vmax.f32 %v2710, 0.0
      %v2727 = vmax.f32 %v2711, 0.0
      %v2728 = vmax.f32 %v2712, 0.0
      %v2729 = vmax.f32 %v2713, 0.0
      %v2730 = vmax.f32 %v2714, 0.0
      %v2731 = vmax.f32 %v2715, 0.0
      %v2732 = vmax.f32 %v2716, 0.0
      %2733 = vst [vmem:[%s217] sm:$0xff] %v2717
      %2734 = vst [vmem:[%s217 + $0x8] sm:$0xff] %v2718
      %2735 = vst [vmem:[%s217 + $0x10] sm:$0xff] %v2719
      %2736 = vst [vmem:[%s217 + $0x18] sm:$0xff] %v2720
      %2737 = vst [vmem:[%s217 + $0x20] sm:$0xff] %v2721
      %2738 = vst [vmem:[%s217 + $0x28] sm:$0xff] %v2722
      %2739 = vst [vmem:[%s217 + $0x30] sm:$0xff] %v2723
      %2740 = vst [vmem:[%s217 + $0x38] sm:$0xff] %v2724
      %2741 = vst [vmem:[%s217 + $0x40] sm:$0xff] %v2725
      %2742 = vst [vmem:[%s217 + $0x48] sm:$0xff] %v2726
      %2743 = vst [vmem:[%s217 + $0x50] sm:$0xff] %v2727
      %2744 = vst [vmem:[%s217 + $0x58] sm:$0xff] %v2728
      %2745 = vst [vmem:[%s217 + $0x60] sm:$0xff] %v2729
      %2746 = vst [vmem:[%s217 + $0x68] sm:$0xff] %v2730
      %2747 = vst [vmem:[%s217 + $0x70] sm:$0xff] %v2731
      %2748 = vst [vmem:[%s217 + $0x78] sm:$0xff] %v2732
      %p2749 = scmp.lt.s32.totalorder %s15, 1
      %s2750 = scalar_select %p2749, %s15, 1
      %s2751 = smul.addr %s2750, 16
      %s2752 = smul.addr %s2751, 8
      %s2753 = scalar_lea.vmem %s4, %s2752
      // Predicated region
      $region37: #{_lambda_.3} parent=35 // pred_check
        %p2754 = pneg %p127
      $region38: #{_lambda_.3} parent=35 // pred_check_branch
        %2756 = sbr.rel (%p2754) target = $region40
      $region39: #{_lambda_.3} parent=35 // pred_region
        _
      $region40: #{_lambda_.3} parent=35 // pred_fallthru
        _
    $region36: #{_lambda_.3} parent=5 // pred_fallthru
      _
    %p2757 = scmp.le.s32.totalorder 2, %s10
    // Predicated region
    $region41: #{_lambda_.3} parent=5 // pred_check
      %p2758 = pneg %p2757
    $region42: #{_lambda_.3} parent=5 // pred_check_branch
      %2760 = sbr.rel (%p2758) target = $region44
    $region43: #{_lambda_.3} parent=5 // pred_region
      %s2761 = ssub.s32 %s10, 2
      // Predicated region
      $region45: #{_lambda_.3} parent=43 // pred_check
        %p2762 = pneg %p133
      $region46: #{_lambda_.3} parent=43 // pred_check_branch
        %2764 = sbr.rel (%p2762) target = $region48
      $region47: #{_lambda_.3} parent=43 // pred_region
        %p2765 = scmp.lt.s32.totalorder %s16, 1
        %s2766 = scalar_select %p2765, %s16, 1
        %s2767 = smul.addr %s2766, 16
        %s2768 = smul.addr %s2767, 8
        %s2769 = scalar_lea.vmem %s4, %s2768
      $region48: #{_lambda_.3} parent=43 // pred_fallthru
        _
    $region44: #{_lambda_.3} parent=5 // pred_fallthru
      _
  $region6: #{_lambda_.3} parent=0 // loop_footer
    %s14 = sadd.s32 1, %s10
  $region7: #{_lambda_.3} parent=0 // loop_footer_branch
    %9 = sbr.rel target = $region3
  $region8: #{_lambda_.3} parent=0 // loop_exit
    _

// kernel: _lambda_.2
$region0: #{_lambda_.2}
  #allocation0 [shape = 'u32[]', space=smem, size = 0x4, offset = 0x4, fixed_abs, tag = 'smem constant byte address 0x4 - core index']
  #allocation1 [shape = 'u32[72,128]{1,0:T(1,128)}', space=vmem, size = 0x9000, scoped, tag = 'internal scratch']
  #allocation2 [shape = 'f32[128,128]{1,0:T(8,128)}', space=vmem, size = 0x10000, scoped, tag = 'scratch operand']
  #allocation3 [shape = 'bf16[576,128]{1,0:T(8,128)(2,1)}', space=vmem, size = 0x24000, scoped, tag = 'scratch operand']
  %s0 = inlined_call_operand.vmem [shape: bf16[2,592,128], index: 0, kind: input, shape index: {}]
  %s1 = inlined_call_operand.vmem [shape: bf16[10,128,128], index: 1, kind: input, shape index: {}]
  %s2 = inlined_call_operand.vmem [shape: f32[2,128], index: 2, kind: input, shape index: {}]
  %s3 = inlined_call_operand.vmem [shape: bf16[2,128,128], index: 3, kind: output, shape index: {0}]
  %s4 = inlined_call_operand.vmem [shape: bf16[2,128,128], index: 4, kind: output, shape index: {1}]
  %5 = xla_tuple %s3, %s4
  %s6 = sld [smem:[#allocation0]]
  $region53: #{_lambda_.2} parent=0
    _
  %s8 = ssub.s32 1, %s6
  %s9 = scalar_select 0, %s8, %s6
  loop: start=0, step=1, limit=4
  $region2: #{_lambda_.2} parent=0 // loop_pre_header
    _
  $region3: #{_lambda_.2} parent=0 // loop_header
    %s11 = sphi 0, %s15
    %p12 = scmp.ge.s32.totalorder %s11, 4
    %s21 = sphi 0, %s23
    %s24 = sphi 0, %s21
    %s25 = sphi 0, %s24
    %s41 = sphi 0, %s25
    %s45 = sphi 0, %s45
    %s47 = sphi 0, %s45
    %s48 = sphi 0, %s47
    %s62 = sphi 0, %s48
    %s66 = sphi 0, %s66
    %s68 = sphi 0, %s66
    %s69 = sphi 0, %s68
    %s83 = sphi 0, %s69
    %s89 = sphi 0, %s91
    %s92 = sphi 0, %s89
    %s93 = sphi 0, %s92
    %s109 = sphi 0, %s93
    %s115 = sphi 0, %s117
    %s118 = sphi 0, %s115
    %s119 = sphi 0, %s118
    %s135 = sphi 0, %s119
  $region4: #{_lambda_.2} parent=0 // loop_header_branch
    %14 = sbr.rel (%p12) target = $region8
  $region5: #{_lambda_.2} parent=0 // loop_body
    %s16 = ssub.s32 %s11, 1
    %s17 = ssub.s32 %s11, 2
    %s18 = sadd.s32 %s11, 1
    %s19 = ssub.s32 %s11, %s18
    %p20 = scmp.eq.s32.totalorder %s19, 0
    %s22 = sadd.s32 %s21, 1
    %s23 = scalar_select %p20, %s21, %s22
    %p26 = pneg %p20
    %p27 = scmp.eq.s32.totalorder %s11, 1
    %p28 = por %p26, %p27
    %p29 = scmp.ne.s32.totalorder %s21, %s24
    %p30 = scmp.eq.s32.totalorder %s11, 0
    %p31 = por %p29, %p30
    %p32 = scmp.ne.s32.totalorder %s21, %s24
    %p33 = scmp.eq.s32.totalorder %s16, 1
    %p34 = por %p32, %p33
    %p35 = scmp.ne.s32.totalorder %s24, %s25
    %p36 = scmp.eq.s32.totalorder %s16, 0
    %p37 = por %p35, %p36
    %p38 = scmp.ne.s32.totalorder %s24, %s25
    %p39 = scmp.eq.s32.totalorder %s17, 1
    %p40 = por %p38, %p39
    %p42 = scmp.ne.s32.totalorder %s25, %s41
    %p43 = scmp.eq.s32.totalorder %s17, 0
    %p44 = por %p42, %p43
    %s46 = sadd.s32 %s45, 1
    %p49 = scmp.eq.s32.totalorder %s11, 1
    %p50 = scmp.ne.s32.totalorder %s45, %s47
    %p51 = scmp.eq.s32.totalorder %s11, 0
    %p52 = por %p50, %p51
    %p53 = scmp.ne.s32.totalorder %s45, %s47
    %p54 = scmp.eq.s32.totalorder %s16, 1
    %p55 = por %p53, %p54
    %p56 = scmp.ne.s32.totalorder %s47, %s48
    %p57 = scmp.eq.s32.totalorder %s16, 0
    %p58 = por %p56, %p57
    %p59 = scmp.ne.s32.totalorder %s47, %s48
    %p60 = scmp.eq.s32.totalorder %s17, 1
    %p61 = por %p59, %p60
    %p63 = scmp.ne.s32.totalorder %s48, %s62
    %p64 = scmp.eq.s32.totalorder %s17, 0
    %p65 = por %p63, %p64
    %s67 = sadd.s32 %s66, 1
    %p70 = scmp.eq.s32.totalorder %s11, 1
    %p71 = scmp.ne.s32.totalorder %s66, %s68
    %p72 = scmp.eq.s32.totalorder %s11, 0
    %p73 = por %p71, %p72
    %p74 = scmp.ne.s32.totalorder %s66, %s68
    %p75 = scmp.eq.s32.totalorder %s16, 1
    %p76 = por %p74, %p75
    %p77 = scmp.ne.s32.totalorder %s68, %s69
    %p78 = scmp.eq.s32.totalorder %s16, 0
    %p79 = por %p77, %p78
    %p80 = scmp.ne.s32.totalorder %s68, %s69
    %p81 = scmp.eq.s32.totalorder %s17, 1
    %p82 = por %p80, %p81
    %p84 = scmp.ne.s32.totalorder %s69, %s83
    %p85 = scmp.eq.s32.totalorder %s17, 0
    %p86 = por %p84, %p85
    %s87 = ssub.s32 %s11, %s18
    %p88 = scmp.eq.s32.totalorder %s87, 0
    %s90 = sadd.s32 %s89, 1
    %s91 = scalar_select %p88, %s89, %s90
    %p94 = pneg %p88
    %p95 = scmp.eq.s32.totalorder %s11, 1
    %p96 = por %p94, %p95
    %p97 = scmp.ne.s32.totalorder %s89, %s92
    %p98 = scmp.eq.s32.totalorder %s11, 0
    %p99 = por %p97, %p98
    %p100 = scmp.ne.s32.totalorder %s89, %s92
    %p101 = scmp.eq.s32.totalorder %s16, 1
    %p102 = por %p100, %p101
    %p103 = scmp.ne.s32.totalorder %s92, %s93
    %p104 = scmp.eq.s32.totalorder %s16, 0
    %p105 = por %p103, %p104
    %p106 = scmp.ne.s32.totalorder %s92, %s93
    %p107 = scmp.eq.s32.totalorder %s17, 1
    %p108 = por %p106, %p107
    %p110 = scmp.ne.s32.totalorder %s93, %s109
    %p111 = scmp.eq.s32.totalorder %s17, 0
    %p112 = por %p110, %p111
    %s113 = ssub.s32 %s11, %s18
    %p114 = scmp.eq.s32.totalorder %s113, 0
    %s116 = sadd.s32 %s115, 1
    %s117 = scalar_select %p114, %s115, %s116
    %p120 = pneg %p114
    %p121 = scmp.eq.s32.totalorder %s11, 1
    %p122 = por %p120, %p121
    %p123 = scmp.ne.s32.totalorder %s115, %s118
    %p124 = scmp.eq.s32.totalorder %s11, 0
    %p125 = por %p123, %p124
    %p126 = scmp.ne.s32.totalorder %s115, %s118
    %p127 = scmp.eq.s32.totalorder %s16, 1
    %p128 = por %p126, %p127
    %p129 = scmp.ne.s32.totalorder %s118, %s119
    %p130 = scmp.eq.s32.totalorder %s16, 0
    %p131 = por %p129, %p130
    %p132 = scmp.ne.s32.totalorder %s118, %s119
    %p133 = scmp.eq.s32.totalorder %s17, 1
    %p134 = por %p132, %p133
    %p136 = scmp.ne.s32.totalorder %s119, %s135
    %p137 = scmp.eq.s32.totalorder %s17, 0
    %p138 = por %p136, %p137
    %p139 = scmp.le.s32.totalorder 1, %s11
    %p140 = scmp.lt.s32.totalorder %s11, 3
    %p141 = pnand %p139, %p140
    %p142 = pneg %p141
    // Predicated region
    $region9: #{_lambda_.2} parent=5 // pred_check
      _
    $region10: #{_lambda_.2} parent=5 // pred_check_branch
      %144 = sbr.rel (%p141) target = $region12
    $region11: #{_lambda_.2} parent=5 // pred_region
      %s145 = ssub.s32 %s11, 1
      // Predicated region
      $region13: #{_lambda_.2} parent=11 // pred_check
        %p146 = pneg %p58
      $region14: #{_lambda_.2} parent=11 // pred_check_branch
        %148 = sbr.rel (%p146) target = $region16
      $region15: #{_lambda_.2} parent=11 // pred_region
        _
      $region16: #{_lambda_.2} parent=11 // pred_fallthru
        _
      // Predicated region
      $region17: #{_lambda_.2} parent=11 // pred_check
        %p149 = pneg %p79
      $region18: #{_lambda_.2} parent=11 // pred_check_branch
        %151 = sbr.rel (%p149) target = $region20
      $region19: #{_lambda_.2} parent=11 // pred_region
        _
      $region20: #{_lambda_.2} parent=11 // pred_fallthru
        _
    $region12: #{_lambda_.2} parent=5 // pred_fallthru
      _
    %p152 = scmp.lt.s32.totalorder %s11, 2
    // Predicated region
    $region21: #{_lambda_.2} parent=5 // pred_check
      %p153 = pneg %p152
    $region22: #{_lambda_.2} parent=5 // pred_check_branch
      %155 = sbr.rel (%p153) target = $region24
    $region23: #{_lambda_.2} parent=5 // pred_region
      // Predicated region
      $region25: #{_lambda_.2} parent=23 // pred_check
        %p156 = pneg %p31
      $region26: #{_lambda_.2} parent=23 // pred_check_branch
        %158 = sbr.rel (%p156) target = $region28
      $region27: #{_lambda_.2} parent=23 // pred_region
        %p159 = scmp.lt.s32.totalorder %s11, 1
        %s160 = scalar_select %p159, %s11, 1
        %s161 = smul.addr %s160, 74
        %s162 = smul.addr %s161, 4
        %s163 = scalar_lea.vmem %s0, %s162
      $region28: #{_lambda_.2} parent=23 // pred_fallthru
        _
    $region24: #{_lambda_.2} parent=5 // pred_fallthru
      _
    %p164 = scmp.le.s32.totalorder 1, %s11
    %p165 = scmp.lt.s32.totalorder %s11, 3
    %p166 = pnand %p164, %p165
    %p167 = pneg %p166
    // Predicated region
    $region29: #{_lambda_.2} parent=5 // pred_check
      _
    $region30: #{_lambda_.2} parent=5 // pred_check_branch
      %169 = sbr.rel (%p166) target = $region32
    $region31: #{_lambda_.2} parent=5 // pred_region
      %s170 = ssub.s32 %s11, 1
      %p171 = scmp.lt.s32.totalorder %s16, 1
      %s172 = scalar_select %p171, %s16, 1
      %s173 = smul.addr %s172, 74
      %s174 = smul.addr %s173, 4
      %s175 = scalar_lea.vmem %s0, %s174
      %p176 = pneg %p37
      %p177 = pneg %p34
      %p178 = pneg %p58
      %p179 = pneg %p55
      %p180 = pneg %p79
      %p181 = pneg %p76
      %p182 = pneg %p105
      %p183 = pneg %p102
      %p184 = scmp.lt.s32.totalorder %s16, 1
      %s185 = scalar_select %p184, %s16, 1
      %s186 = smul.addr %s185, 16
      %s187 = smul.addr %s186, 4
      %s188 = scalar_lea.vmem %s3, %s187
      %p189 = pneg %p131
      %p190 = pneg %p128
      %p191 = scmp.lt.s32.totalorder %s16, 1
      %s192 = scalar_select %p191, %s16, 1
      %s193 = smul.addr %s192, 16
      %s194 = smul.addr %s193, 4
      %s195 = scalar_lea.vmem %s4, %s194
      %p196 = scmp.lt.s32.totalorder %s16, 1
      %s197 = scalar_select %p196, %s16, 1
      %s198 = smul.addr %s197, 74
      %s199 = smul.addr %s198, 4
      %s200 = scalar_lea.vmem %s0, %s199
      %p201 = scmp.lt.s32.totalorder %s16, 1
      %s202 = scalar_select %p201, %s16, 1
      %s203 = smul.addr %s202, 16
      %s204 = smul.addr %s203, 4
      %s205 = scalar_lea.vmem %s3, %s204
      %p206 = scmp.lt.s32.totalorder %s16, 1
      %s207 = scalar_select %p206, %s16, 1
      %s208 = smul.addr %s207, 16
      %s209 = smul.addr %s208, 4
      %s210 = scalar_lea.vmem %s4, %s209
      %v211 = vld [vmem:[%s200] sm:$0xf]
      %v212 = vld [vmem:[%s200 + $0x4] sm:$0xf]
      %v213 = vld [vmem:[%s200 + $0x8] sm:$0xf]
      %v214 = vld [vmem:[%s200 + $0xc] sm:$0xf]
      %v215 = vld [vmem:[%s200 + $0x10] sm:$0xf]
      %v216 = vld [vmem:[%s200 + $0x14] sm:$0xf]
      %v217 = vld [vmem:[%s200 + $0x18] sm:$0xf]
      %v218 = vld [vmem:[%s200 + $0x1c] sm:$0xf]
      %v219 = vld [vmem:[%s200 + $0x20] sm:$0xf]
      %v220 = vld [vmem:[%s200 + $0x24] sm:$0xf]
      %v221 = vld [vmem:[%s200 + $0x28] sm:$0xf]
      %v222 = vld [vmem:[%s200 + $0x2c] sm:$0xf]
      %v223 = vld [vmem:[%s200 + $0x30] sm:$0xf]
      %v224 = vld [vmem:[%s200 + $0x34] sm:$0xf]
      %v225 = vld [vmem:[%s200 + $0x38] sm:$0xf]
      %v226 = vld [vmem:[%s200 + $0x3c] sm:$0xf]
      %v227 = vld [vmem:[%s1] sm:$0xf]
      %v228 = vld [vmem:[%s1 + $0x4] sm:$0xf]
      %v229 = vld [vmem:[%s1 + $0x8] sm:$0xf]
      %v230 = vld [vmem:[%s1 + $0xc] sm:$0xf]
      %v231 = vld [vmem:[%s1 + $0x10] sm:$0xf]
      %v232 = vld [vmem:[%s1 + $0x14] sm:$0xf]
      %v233 = vld [vmem:[%s1 + $0x18] sm:$0xf]
      %v234 = vld [vmem:[%s1 + $0x1c] sm:$0xf]
      %v235 = vld [vmem:[%s1 + $0x20] sm:$0xf]
      %v236 = vld [vmem:[%s1 + $0x24] sm:$0xf]
      %v237 = vld [vmem:[%s1 + $0x28] sm:$0xf]
      %v238 = vld [vmem:[%s1 + $0x2c] sm:$0xf]
      %v239 = vld [vmem:[%s1 + $0x30] sm:$0xf]
      %v240 = vld [vmem:[%s1 + $0x34] sm:$0xf]
      %v241 = vld [vmem:[%s1 + $0x38] sm:$0xf]
      %v242 = vld [vmem:[%s1 + $0x3c] sm:$0xf]
      %v259 = vunpack.c.l.b16 %v211
      %v260 = vunpack.c.l.b16 %v212
      %v261 = vunpack.c.l.b16 %v213
      %v262 = vunpack.c.l.b16 %v214
      %v263 = vunpack.c.l.b16 %v215
      %v264 = vunpack.c.l.b16 %v216
      %v265 = vunpack.c.l.b16 %v217
      %v266 = vunpack.c.l.b16 %v218
      %v267 = vunpack.c.l.b16 %v219
      %v268 = vunpack.c.l.b16 %v220
      %v269 = vunpack.c.l.b16 %v221
      %v270 = vunpack.c.l.b16 %v222
      %v271 = vunpack.c.l.b16 %v223
      %v272 = vunpack.c.l.b16 %v224
      %v273 = vunpack.c.l.b16 %v225
      %v274 = vunpack.c.l.b16 %v226
      %v275 = vpack.c.b16 %v260, %v259
      %v276 = vpack.c.b16 %v262, %v261
      %v277 = vpack.c.b16 %v264, %v263
      %v278 = vpack.c.b16 %v266, %v265
      %v279 = vpack.c.b16 %v268, %v267
      %v280 = vpack.c.b16 %v270, %v269
      %v281 = vpack.c.b16 %v272, %v271
      %v282 = vpack.c.b16 %v274, %v273
      %v307 = vunpack.c.l.b16 %v227
      %v308 = vunpack.c.l.b16 %v228
      %v309 = vunpack.c.l.b16 %v229
      %v310 = vunpack.c.l.b16 %v230
      %v311 = vunpack.c.l.b16 %v231
      %v312 = vunpack.c.l.b16 %v232
      %v313 = vunpack.c.l.b16 %v233
      %v314 = vunpack.c.l.b16 %v234
      %v315 = vunpack.c.l.b16 %v235
      %v316 = vunpack.c.l.b16 %v236
      %v317 = vunpack.c.l.b16 %v237
      %v318 = vunpack.c.l.b16 %v238
      %v319 = vunpack.c.l.b16 %v239
      %v320 = vunpack.c.l.b16 %v240
      %v321 = vunpack.c.l.b16 %v241
      %v322 = vunpack.c.l.b16 %v242
      %v323 = vpack.c.b16 %v308, %v307
      %v324 = vpack.c.b16 %v310, %v309
      %v325 = vpack.c.b16 %v312, %v311
      %v326 = vpack.c.b16 %v314, %v313
      %v327 = vpack.c.b16 %v316, %v315
      %v328 = vpack.c.b16 %v318, %v317
      %v329 = vpack.c.b16 %v320, %v319
      %v330 = vpack.c.b16 %v322, %v321
      %339 = vmatpush.bf16.msra.mxu0 %v330
      %340 = vmatpush.bf16.msra.mxu0 %v329
      %341 = vmatpush.bf16.msra.mxu0 %v328
      %342 = vmatpush.bf16.msra.mxu0 %v327
      %343 = vmatpush.bf16.msra.mxu0 %v326
      %344 = vmatpush.bf16.msra.mxu0 %v325
      %345 = vmatpush.bf16.msra.mxu0 %v324
      %346 = vmatpush.bf16.msra.mxu0 %v323
      %347 = vmatmul.bf16.gmra.mxu0 %v275
      %v348 = vpop.f32.mrf.mxu0
      %v349 = vadd.f32 0.0, %v348
      %v350 = vpop.f32.mrf.mxu0
      %v351 = vadd.f32 0.0, %v350
      %352 = vmatmul.bf16.gmra.mxu0 %v276
      %v353 = vpop.f32.mrf.mxu0
      %v354 = vadd.f32 0.0, %v353
      %v355 = vpop.f32.mrf.mxu0
      %v356 = vadd.f32 0.0, %v355
      %357 = vmatmul.bf16.gmra.mxu0 %v277
      %v358 = vpop.f32.mrf.mxu0
      %v359 = vadd.f32 0.0, %v358
      %v360 = vpop.f32.mrf.mxu0
      %v361 = vadd.f32 0.0, %v360
      %362 = vmatmul.bf16.gmra.mxu0 %v278
      %v363 = vpop.f32.mrf.mxu0
      %v364 = vadd.f32 0.0, %v363
      %v365 = vpop.f32.mrf.mxu0
      %v366 = vadd.f32 0.0, %v365
      %367 = vmatmul.bf16.gmra.mxu0 %v279
      %v368 = vpop.f32.mrf.mxu0
      %v369 = vadd.f32 0.0, %v368
      %v370 = vpop.f32.mrf.mxu0
      %v371 = vadd.f32 0.0, %v370
      %372 = vmatmul.bf16.gmra.mxu0 %v280
      %v373 = vpop.f32.mrf.mxu0
      %v374 = vadd.f32 0.0, %v373
      %v375 = vpop.f32.mrf.mxu0
      %v376 = vadd.f32 0.0, %v375
      %377 = vmatmul.bf16.gmra.mxu0 %v281
      %v378 = vpop.f32.mrf.mxu0
      %v379 = vadd.f32 0.0, %v378
      %v380 = vpop.f32.mrf.mxu0
      %v381 = vadd.f32 0.0, %v380
      %382 = vmatmul.bf16.gmra.mxu0 %v282
      %v383 = vpop.f32.mrf.mxu0
      %v384 = vadd.f32 0.0, %v383
      %v385 = vpop.f32.mrf.mxu0
      %v386 = vadd.f32 0.0, %v385
      %387 = vdwg.mxu0
      %388 = vst [vmem:[#allocation2] sm:$0xff] %v349
      %389 = vst [vmem:[#allocation2 + $0x8] sm:$0xff] %v351
      %390 = vst [vmem:[#allocation2 + $0x10] sm:$0xff] %v354
      %391 = vst [vmem:[#allocation2 + $0x18] sm:$0xff] %v356
      %392 = vst [vmem:[#allocation2 + $0x20] sm:$0xff] %v359
      %393 = vst [vmem:[#allocation2 + $0x28] sm:$0xff] %v361
      %394 = vst [vmem:[#allocation2 + $0x30] sm:$0xff] %v364
      %395 = vst [vmem:[#allocation2 + $0x38] sm:$0xff] %v366
      %396 = vst [vmem:[#allocation2 + $0x40] sm:$0xff] %v369
      %397 = vst [vmem:[#allocation2 + $0x48] sm:$0xff] %v371
      %398 = vst [vmem:[#allocation2 + $0x50] sm:$0xff] %v374
      %399 = vst [vmem:[#allocation2 + $0x58] sm:$0xff] %v376
      %400 = vst [vmem:[#allocation2 + $0x60] sm:$0xff] %v379
      %401 = vst [vmem:[#allocation2 + $0x68] sm:$0xff] %v381
      %402 = vst [vmem:[#allocation2 + $0x70] sm:$0xff] %v384
      %403 = vst [vmem:[#allocation2 + $0x78] sm:$0xff] %v386
      %v404 = vld [vmem:[%s200 + $0x48] sm:$0xf]
      %v405 = vld [vmem:[%s200 + $0x4c] sm:$0xf]
      %v406 = vld [vmem:[%s200 + $0x50] sm:$0xf]
      %v407 = vld [vmem:[%s200 + $0x54] sm:$0xf]
      %v408 = vld [vmem:[%s200 + $0x58] sm:$0xf]
      %v409 = vld [vmem:[%s200 + $0x5c] sm:$0xf]
      %v410 = vld [vmem:[%s200 + $0x60] sm:$0xf]
      %v411 = vld [vmem:[%s200 + $0x64] sm:$0xf]
      %v412 = vld [vmem:[%s200 + $0x68] sm:$0xf]
      %v413 = vld [vmem:[%s200 + $0x6c] sm:$0xf]
      %v414 = vld [vmem:[%s200 + $0x70] sm:$0xf]
      %v415 = vld [vmem:[%s200 + $0x74] sm:$0xf]
      %v416 = vld [vmem:[%s200 + $0x78] sm:$0xf]
      %v417 = vld [vmem:[%s200 + $0x7c] sm:$0xf]
      %v418 = vld [vmem:[%s200 + $0x80] sm:$0xf]
      %v419 = vld [vmem:[%s200 + $0x84] sm:$0xf]
      %s420 = scalar_lea.vmem %s1, 64
      %v421 = vld [vmem:[%s420] sm:$0xf]
      %v422 = vld [vmem:[%s420 + $0x4] sm:$0xf]
      %v423 = vld [vmem:[%s420 + $0x8] sm:$0xf]
      %v424 = vld [vmem:[%s420 + $0xc] sm:$0xf]
      %v425 = vld [vmem:[%s420 + $0x10] sm:$0xf]
      %v426 = vld [vmem:[%s420 + $0x14] sm:$0xf]
      %v427 = vld [vmem:[%s420 + $0x18] sm:$0xf]
      %v428 = vld [vmem:[%s420 + $0x1c] sm:$0xf]
      %v429 = vld [vmem:[%s420 + $0x20] sm:$0xf]
      %v430 = vld [vmem:[%s420 + $0x24] sm:$0xf]
      %v431 = vld [vmem:[%s420 + $0x28] sm:$0xf]
      %v432 = vld [vmem:[%s420 + $0x2c] sm:$0xf]
      %v433 = vld [vmem:[%s420 + $0x30] sm:$0xf]
      %v434 = vld [vmem:[%s420 + $0x34] sm:$0xf]
      %v435 = vld [vmem:[%s420 + $0x38] sm:$0xf]
      %v436 = vld [vmem:[%s420 + $0x3c] sm:$0xf]
      %v453 = vunpack.c.l.b16 %v404
      %v454 = vunpack.c.l.b16 %v405
      %v455 = vunpack.c.l.b16 %v406
      %v456 = vunpack.c.l.b16 %v407
      %v457 = vunpack.c.l.b16 %v408
      %v458 = vunpack.c.l.b16 %v409
      %v459 = vunpack.c.l.b16 %v410
      %v460 = vunpack.c.l.b16 %v411
      %v461 = vunpack.c.l.b16 %v412
      %v462 = vunpack.c.l.b16 %v413
      %v463 = vunpack.c.l.b16 %v414
      %v464 = vunpack.c.l.b16 %v415
      %v465 = vunpack.c.l.b16 %v416
      %v466 = vunpack.c.l.b16 %v417
      %v467 = vunpack.c.l.b16 %v418
      %v468 = vunpack.c.l.b16 %v419
      %v469 = vpack.c.b16 %v454, %v453
      %v470 = vpack.c.b16 %v456, %v455
      %v471 = vpack.c.b16 %v458, %v457
      %v472 = vpack.c.b16 %v460, %v459
      %v473 = vpack.c.b16 %v462, %v461
      %v474 = vpack.c.b16 %v464, %v463
      %v475 = vpack.c.b16 %v466, %v465
      %v476 = vpack.c.b16 %v468, %v467
      %v501 = vunpack.c.l.b16 %v421
      %v502 = vunpack.c.l.b16 %v422
      %v503 = vunpack.c.l.b16 %v423
      %v504 = vunpack.c.l.b16 %v424
      %v505 = vunpack.c.l.b16 %v425
      %v506 = vunpack.c.l.b16 %v426
      %v507 = vunpack.c.l.b16 %v427
      %v508 = vunpack.c.l.b16 %v428
      %v509 = vunpack.c.l.b16 %v429
      %v510 = vunpack.c.l.b16 %v430
      %v511 = vunpack.c.l.b16 %v431
      %v512 = vunpack.c.l.b16 %v432
      %v513 = vunpack.c.l.b16 %v433
      %v514 = vunpack.c.l.b16 %v434
      %v515 = vunpack.c.l.b16 %v435
      %v516 = vunpack.c.l.b16 %v436
      %v517 = vpack.c.b16 %v502, %v501
      %v518 = vpack.c.b16 %v504, %v503
      %v519 = vpack.c.b16 %v506, %v505
      %v520 = vpack.c.b16 %v508, %v507
      %v521 = vpack.c.b16 %v510, %v509
      %v522 = vpack.c.b16 %v512, %v511
      %v523 = vpack.c.b16 %v514, %v513
      %v524 = vpack.c.b16 %v516, %v515
      %533 = vmatpush.bf16.msra.mxu0 %v524
      %534 = vmatpush.bf16.msra.mxu0 %v523
      %535 = vmatpush.bf16.msra.mxu0 %v522
      %536 = vmatpush.bf16.msra.mxu0 %v521
      %537 = vmatpush.bf16.msra.mxu0 %v520
      %538 = vmatpush.bf16.msra.mxu0 %v519
      %539 = vmatpush.bf16.msra.mxu0 %v518
      %540 = vmatpush.bf16.msra.mxu0 %v517
      %541 = vmatmul.bf16.gmra.mxu0 %v469
      %v542 = vpop.f32.mrf.mxu0
      %v543 = vadd.f32 0.0, %v542
      %v544 = vpop.f32.mrf.mxu0
      %v545 = vadd.f32 0.0, %v544
      %546 = vmatmul.bf16.gmra.mxu0 %v470
      %v547 = vpop.f32.mrf.mxu0
      %v548 = vadd.f32 0.0, %v547
      %v549 = vpop.f32.mrf.mxu0
      %v550 = vadd.f32 0.0, %v549
      %551 = vmatmul.bf16.gmra.mxu0 %v471
      %v552 = vpop.f32.mrf.mxu0
      %v553 = vadd.f32 0.0, %v552
      %v554 = vpop.f32.mrf.mxu0
      %v555 = vadd.f32 0.0, %v554
      %556 = vmatmul.bf16.gmra.mxu0 %v472
      %v557 = vpop.f32.mrf.mxu0
      %v558 = vadd.f32 0.0, %v557
      %v559 = vpop.f32.mrf.mxu0
      %v560 = vadd.f32 0.0, %v559
      %561 = vmatmul.bf16.gmra.mxu0 %v473
      %v562 = vpop.f32.mrf.mxu0
      %v563 = vadd.f32 0.0, %v562
      %v564 = vpop.f32.mrf.mxu0
      %v565 = vadd.f32 0.0, %v564
      %566 = vmatmul.bf16.gmra.mxu0 %v474
      %v567 = vpop.f32.mrf.mxu0
      %v568 = vadd.f32 0.0, %v567
      %v569 = vpop.f32.mrf.mxu0
      %v570 = vadd.f32 0.0, %v569
      %571 = vmatmul.bf16.gmra.mxu0 %v475
      %v572 = vpop.f32.mrf.mxu0
      %v573 = vadd.f32 0.0, %v572
      %v574 = vpop.f32.mrf.mxu0
      %v575 = vadd.f32 0.0, %v574
      %576 = vmatmul.bf16.gmra.mxu0 %v476
      %v577 = vpop.f32.mrf.mxu0
      %v578 = vadd.f32 0.0, %v577
      %v579 = vpop.f32.mrf.mxu0
      %v580 = vadd.f32 0.0, %v579
      %581 = vdwg.mxu0
      %v582 = vld [vmem:[#allocation2] sm:$0xff]
      %v583 = vld [vmem:[#allocation2 + $0x8] sm:$0xff]
      %v584 = vld [vmem:[#allocation2 + $0x10] sm:$0xff]
      %v585 = vld [vmem:[#allocation2 + $0x18] sm:$0xff]
      %v586 = vld [vmem:[#allocation2 + $0x20] sm:$0xff]
      %v587 = vld [vmem:[#allocation2 + $0x28] sm:$0xff]
      %v588 = vld [vmem:[#allocation2 + $0x30] sm:$0xff]
      %v589 = vld [vmem:[#allocation2 + $0x38] sm:$0xff]
      %v590 = vld [vmem:[#allocation2 + $0x40] sm:$0xff]
      %v591 = vld [vmem:[#allocation2 + $0x48] sm:$0xff]
      %v592 = vld [vmem:[#allocation2 + $0x50] sm:$0xff]
      %v593 = vld [vmem:[#allocation2 + $0x58] sm:$0xff]
      %v594 = vld [vmem:[#allocation2 + $0x60] sm:$0xff]
      %v595 = vld [vmem:[#allocation2 + $0x68] sm:$0xff]
      %v596 = vld [vmem:[#allocation2 + $0x70] sm:$0xff]
      %v597 = vld [vmem:[#allocation2 + $0x78] sm:$0xff]
      %v598 = vadd.f32 %v582, %v543
      %v599 = vadd.f32 %v583, %v545
      %v600 = vadd.f32 %v584, %v548
      %v601 = vadd.f32 %v585, %v550
      %v602 = vadd.f32 %v586, %v553
      %v603 = vadd.f32 %v587, %v555
      %v604 = vadd.f32 %v588, %v558
      %v605 = vadd.f32 %v589, %v560
      %v606 = vadd.f32 %v590, %v563
      %v607 = vadd.f32 %v591, %v565
      %v608 = vadd.f32 %v592, %v568
      %v609 = vadd.f32 %v593, %v570
      %v610 = vadd.f32 %v594, %v573
      %v611 = vadd.f32 %v595, %v575
      %v612 = vadd.f32 %v596, %v578
      %v613 = vadd.f32 %v597, %v580
      %614 = vst [vmem:[#allocation2] sm:$0xff] %v598
      %615 = vst [vmem:[#allocation2 + $0x8] sm:$0xff] %v599
      %616 = vst [vmem:[#allocation2 + $0x10] sm:$0xff] %v600
      %617 = vst [vmem:[#allocation2 + $0x18] sm:$0xff] %v601
      %618 = vst [vmem:[#allocation2 + $0x20] sm:$0xff] %v602
      %619 = vst [vmem:[#allocation2 + $0x28] sm:$0xff] %v603
      %620 = vst [vmem:[#allocation2 + $0x30] sm:$0xff] %v604
      %621 = vst [vmem:[#allocation2 + $0x38] sm:$0xff] %v605
      %622 = vst [vmem:[#allocation2 + $0x40] sm:$0xff] %v606
      %623 = vst [vmem:[#allocation2 + $0x48] sm:$0xff] %v607
      %624 = vst [vmem:[#allocation2 + $0x50] sm:$0xff] %v608
      %625 = vst [vmem:[#allocation2 + $0x58] sm:$0xff] %v609
      %626 = vst [vmem:[#allocation2 + $0x60] sm:$0xff] %v610
      %627 = vst [vmem:[#allocation2 + $0x68] sm:$0xff] %v611
      %628 = vst [vmem:[#allocation2 + $0x70] sm:$0xff] %v612
      %629 = vst [vmem:[#allocation2 + $0x78] sm:$0xff] %v613
      %v630 = vld [vmem:[%s200 + $0x90] sm:$0xf]
      %v631 = vld [vmem:[%s200 + $0x94] sm:$0xf]
      %v632 = vld [vmem:[%s200 + $0x98] sm:$0xf]
      %v633 = vld [vmem:[%s200 + $0x9c] sm:$0xf]
      %v634 = vld [vmem:[%s200 + $0xa0] sm:$0xf]
      %v635 = vld [vmem:[%s200 + $0xa4] sm:$0xf]
      %v636 = vld [vmem:[%s200 + $0xa8] sm:$0xf]
      %v637 = vld [vmem:[%s200 + $0xac] sm:$0xf]
      %v638 = vld [vmem:[%s200 + $0xb0] sm:$0xf]
      %v639 = vld [vmem:[%s200 + $0xb4] sm:$0xf]
      %v640 = vld [vmem:[%s200 + $0xb8] sm:$0xf]
      %v641 = vld [vmem:[%s200 + $0xbc] sm:$0xf]
      %v642 = vld [vmem:[%s200 + $0xc0] sm:$0xf]
      %v643 = vld [vmem:[%s200 + $0xc4] sm:$0xf]
      %v644 = vld [vmem:[%s200 + $0xc8] sm:$0xf]
      %v645 = vld [vmem:[%s200 + $0xcc] sm:$0xf]
      %s646 = scalar_lea.vmem %s1, 192
      %v647 = vld [vmem:[%s646] sm:$0xf]
      %v648 = vld [vmem:[%s646 + $0x4] sm:$0xf]
      %v649 = vld [vmem:[%s646 + $0x8] sm:$0xf]
      %v650 = vld [vmem:[%s646 + $0xc] sm:$0xf]
      %v651 = vld [vmem:[%s646 + $0x10] sm:$0xf]
      %v652 = vld [vmem:[%s646 + $0x14] sm:$0xf]
      %v653 = vld [vmem:[%s646 + $0x18] sm:$0xf]
      %v654 = vld [vmem:[%s646 + $0x1c] sm:$0xf]
      %v655 = vld [vmem:[%s646 + $0x20] sm:$0xf]
      %v656 = vld [vmem:[%s646 + $0x24] sm:$0xf]
      %v657 = vld [vmem:[%s646 + $0x28] sm:$0xf]
      %v658 = vld [vmem:[%s646 + $0x2c] sm:$0xf]
      %v659 = vld [vmem:[%s646 + $0x30] sm:$0xf]
      %v660 = vld [vmem:[%s646 + $0x34] sm:$0xf]
      %v661 = vld [vmem:[%s646 + $0x38] sm:$0xf]
      %v662 = vld [vmem:[%s646 + $0x3c] sm:$0xf]
      %v679 = vunpack.c.l.b16 %v630
      %v680 = vunpack.c.l.b16 %v631
      %v681 = vunpack.c.l.b16 %v632
      %v682 = vunpack.c.l.b16 %v633
      %v683 = vunpack.c.l.b16 %v634
      %v684 = vunpack.c.l.b16 %v635
      %v685 = vunpack.c.l.b16 %v636
      %v686 = vunpack.c.l.b16 %v637
      %v687 = vunpack.c.l.b16 %v638
      %v688 = vunpack.c.l.b16 %v639
      %v689 = vunpack.c.l.b16 %v640
      %v690 = vunpack.c.l.b16 %v641
      %v691 = vunpack.c.l.b16 %v642
      %v692 = vunpack.c.l.b16 %v643
      %v693 = vunpack.c.l.b16 %v644
      %v694 = vunpack.c.l.b16 %v645
      %v695 = vpack.c.b16 %v680, %v679
      %v696 = vpack.c.b16 %v682, %v681
      %v697 = vpack.c.b16 %v684, %v683
      %v698 = vpack.c.b16 %v686, %v685
      %v699 = vpack.c.b16 %v688, %v687
      %v700 = vpack.c.b16 %v690, %v689
      %v701 = vpack.c.b16 %v692, %v691
      %v702 = vpack.c.b16 %v694, %v693
      %v727 = vunpack.c.l.b16 %v647
      %v728 = vunpack.c.l.b16 %v648
      %v729 = vunpack.c.l.b16 %v649
      %v730 = vunpack.c.l.b16 %v650
      %v731 = vunpack.c.l.b16 %v651
      %v732 = vunpack.c.l.b16 %v652
      %v733 = vunpack.c.l.b16 %v653
      %v734 = vunpack.c.l.b16 %v654
      %v735 = vunpack.c.l.b16 %v655
      %v736 = vunpack.c.l.b16 %v656
      %v737 = vunpack.c.l.b16 %v657
      %v738 = vunpack.c.l.b16 %v658
      %v739 = vunpack.c.l.b16 %v659
      %v740 = vunpack.c.l.b16 %v660
      %v741 = vunpack.c.l.b16 %v661
      %v742 = vunpack.c.l.b16 %v662
      %v743 = vpack.c.b16 %v728, %v727
      %v744 = vpack.c.b16 %v730, %v729
      %v745 = vpack.c.b16 %v732, %v731
      %v746 = vpack.c.b16 %v734, %v733
      %v747 = vpack.c.b16 %v736, %v735
      %v748 = vpack.c.b16 %v738, %v737
      %v749 = vpack.c.b16 %v740, %v739
      %v750 = vpack.c.b16 %v742, %v741
      %759 = vmatpush.bf16.msra.mxu0 %v750
      %760 = vmatpush.bf16.msra.mxu0 %v749
      %761 = vmatpush.bf16.msra.mxu0 %v748
      %762 = vmatpush.bf16.msra.mxu0 %v747
      %763 = vmatpush.bf16.msra.mxu0 %v746
      %764 = vmatpush.bf16.msra.mxu0 %v745
      %765 = vmatpush.bf16.msra.mxu0 %v744
      %766 = vmatpush.bf16.msra.mxu0 %v743
      %767 = vmatmul.bf16.gmra.mxu0 %v695
      %v768 = vpop.f32.mrf.mxu0
      %v769 = vadd.f32 0.0, %v768
      %v770 = vpop.f32.mrf.mxu0
      %v771 = vadd.f32 0.0, %v770
      %772 = vmatmul.bf16.gmra.mxu0 %v696
      %v773 = vpop.f32.mrf.mxu0
      %v774 = vadd.f32 0.0, %v773
      %v775 = vpop.f32.mrf.mxu0
      %v776 = vadd.f32 0.0, %v775
      %777 = vmatmul.bf16.gmra.mxu0 %v697
      %v778 = vpop.f32.mrf.mxu0
      %v779 = vadd.f32 0.0, %v778
      %v780 = vpop.f32.mrf.mxu0
      %v781 = vadd.f32 0.0, %v780
      %782 = vmatmul.bf16.gmra.mxu0 %v698
      %v783 = vpop.f32.mrf.mxu0
      %v784 = vadd.f32 0.0, %v783
      %v785 = vpop.f32.mrf.mxu0
      %v786 = vadd.f32 0.0, %v785
      %787 = vmatmul.bf16.gmra.mxu0 %v699
      %v788 = vpop.f32.mrf.mxu0
      %v789 = vadd.f32 0.0, %v788
      %v790 = vpop.f32.mrf.mxu0
      %v791 = vadd.f32 0.0, %v790
      %792 = vmatmul.bf16.gmra.mxu0 %v700
      %v793 = vpop.f32.mrf.mxu0
      %v794 = vadd.f32 0.0, %v793
      %v795 = vpop.f32.mrf.mxu0
      %v796 = vadd.f32 0.0, %v795
      %797 = vmatmul.bf16.gmra.mxu0 %v701
      %v798 = vpop.f32.mrf.mxu0
      %v799 = vadd.f32 0.0, %v798
      %v800 = vpop.f32.mrf.mxu0
      %v801 = vadd.f32 0.0, %v800
      %802 = vmatmul.bf16.gmra.mxu0 %v702
      %v803 = vpop.f32.mrf.mxu0
      %v804 = vadd.f32 0.0, %v803
      %v805 = vpop.f32.mrf.mxu0
      %v806 = vadd.f32 0.0, %v805
      %807 = vdwg.mxu0
      %v808 = vld [vmem:[#allocation2] sm:$0xff]
      %v809 = vld [vmem:[#allocation2 + $0x8] sm:$0xff]
      %v810 = vld [vmem:[#allocation2 + $0x10] sm:$0xff]
      %v811 = vld [vmem:[#allocation2 + $0x18] sm:$0xff]
      %v812 = vld [vmem:[#allocation2 + $0x20] sm:$0xff]
      %v813 = vld [vmem:[#allocation2 + $0x28] sm:$0xff]
      %v814 = vld [vmem:[#allocation2 + $0x30] sm:$0xff]
      %v815 = vld [vmem:[#allocation2 + $0x38] sm:$0xff]
      %v816 = vld [vmem:[#allocation2 + $0x40] sm:$0xff]
      %v817 = vld [vmem:[#allocation2 + $0x48] sm:$0xff]
      %v818 = vld [vmem:[#allocation2 + $0x50] sm:$0xff]
      %v819 = vld [vmem:[#allocation2 + $0x58] sm:$0xff]
      %v820 = vld [vmem:[#allocation2 + $0x60] sm:$0xff]
      %v821 = vld [vmem:[#allocation2 + $0x68] sm:$0xff]
      %v822 = vld [vmem:[#allocation2 + $0x70] sm:$0xff]
      %v823 = vld [vmem:[#allocation2 + $0x78] sm:$0xff]
      %v824 = vadd.f32 %v808, %v769
      %v825 = vadd.f32 %v809, %v771
      %v826 = vadd.f32 %v810, %v774
      %v827 = vadd.f32 %v811, %v776
      %v828 = vadd.f32 %v812, %v779
      %v829 = vadd.f32 %v813, %v781
      %v830 = vadd.f32 %v814, %v784
      %v831 = vadd.f32 %v815, %v786
      %v832 = vadd.f32 %v816, %v789
      %v833 = vadd.f32 %v817, %v791
      %v834 = vadd.f32 %v818, %v794
      %v835 = vadd.f32 %v819, %v796
      %v836 = vadd.f32 %v820, %v799
      %v837 = vadd.f32 %v821, %v801
      %v838 = vadd.f32 %v822, %v804
      %v839 = vadd.f32 %v823, %v806
      %840 = vst [vmem:[#allocation2] sm:$0xff] %v824
      %841 = vst [vmem:[#allocation2 + $0x8] sm:$0xff] %v825
      %842 = vst [vmem:[#allocation2 + $0x10] sm:$0xff] %v826
      %843 = vst [vmem:[#allocation2 + $0x18] sm:$0xff] %v827
      %844 = vst [vmem:[#allocation2 + $0x20] sm:$0xff] %v828
      %845 = vst [vmem:[#allocation2 + $0x28] sm:$0xff] %v829
      %846 = vst [vmem:[#allocation2 + $0x30] sm:$0xff] %v830
      %847 = vst [vmem:[#allocation2 + $0x38] sm:$0xff] %v831
      %848 = vst [vmem:[#allocation2 + $0x40] sm:$0xff] %v832
      %849 = vst [vmem:[#allocation2 + $0x48] sm:$0xff] %v833
      %850 = vst [vmem:[#allocation2 + $0x50] sm:$0xff] %v834
      %851 = vst [vmem:[#allocation2 + $0x58] sm:$0xff] %v835
      %852 = vst [vmem:[#allocation2 + $0x60] sm:$0xff] %v836
      %853 = vst [vmem:[#allocation2 + $0x68] sm:$0xff] %v837
      %854 = vst [vmem:[#allocation2 + $0x70] sm:$0xff] %v838
      %855 = vst [vmem:[#allocation2 + $0x78] sm:$0xff] %v839
      %v856 = vld [vmem:[%s200 + $0xd8] sm:$0xf]
      %v857 = vld [vmem:[%s200 + $0xdc] sm:$0xf]
      %v858 = vld [vmem:[%s200 + $0xe0] sm:$0xf]
      %v859 = vld [vmem:[%s200 + $0xe4] sm:$0xf]
      %v860 = vld [vmem:[%s200 + $0xe8] sm:$0xf]
      %v861 = vld [vmem:[%s200 + $0xec] sm:$0xf]
      %v862 = vld [vmem:[%s200 + $0xf0] sm:$0xf]
      %v863 = vld [vmem:[%s200 + $0xf4] sm:$0xf]
      %v864 = vld [vmem:[%s200 + $0xf8] sm:$0xf]
      %v865 = vld [vmem:[%s200 + $0xfc] sm:$0xf]
      %v866 = vld [vmem:[%s200 + $0x100] sm:$0xf]
      %v867 = vld [vmem:[%s200 + $0x104] sm:$0xf]
      %v868 = vld [vmem:[%s200 + $0x108] sm:$0xf]
      %v869 = vld [vmem:[%s200 + $0x10c] sm:$0xf]
      %v870 = vld [vmem:[%s200 + $0x110] sm:$0xf]
      %v871 = vld [vmem:[%s200 + $0x114] sm:$0xf]
      %s872 = scalar_lea.vmem %s1, 256
      %v873 = vld [vmem:[%s872] sm:$0xf]
      %v874 = vld [vmem:[%s872 + $0x4] sm:$0xf]
      %v875 = vld [vmem:[%s872 + $0x8] sm:$0xf]
      %v876 = vld [vmem:[%s872 + $0xc] sm:$0xf]
      %v877 = vld [vmem:[%s872 + $0x10] sm:$0xf]
      %v878 = vld [vmem:[%s872 + $0x14] sm:$0xf]
      %v879 = vld [vmem:[%s872 + $0x18] sm:$0xf]
      %v880 = vld [vmem:[%s872 + $0x1c] sm:$0xf]
      %v881 = vld [vmem:[%s872 + $0x20] sm:$0xf]
      %v882 = vld [vmem:[%s872 + $0x24] sm:$0xf]
      %v883 = vld [vmem:[%s872 + $0x28] sm:$0xf]
      %v884 = vld [vmem:[%s872 + $0x2c] sm:$0xf]
      %v885 = vld [vmem:[%s872 + $0x30] sm:$0xf]
      %v886 = vld [vmem:[%s872 + $0x34] sm:$0xf]
      %v887 = vld [vmem:[%s872 + $0x38] sm:$0xf]
      %v888 = vld [vmem:[%s872 + $0x3c] sm:$0xf]
      %v905 = vunpack.c.l.b16 %v856
      %v906 = vunpack.c.l.b16 %v857
      %v907 = vunpack.c.l.b16 %v858
      %v908 = vunpack.c.l.b16 %v859
      %v909 = vunpack.c.l.b16 %v860
      %v910 = vunpack.c.l.b16 %v861
      %v911 = vunpack.c.l.b16 %v862
      %v912 = vunpack.c.l.b16 %v863
      %v913 = vunpack.c.l.b16 %v864
      %v914 = vunpack.c.l.b16 %v865
      %v915 = vunpack.c.l.b16 %v866
      %v916 = vunpack.c.l.b16 %v867
      %v917 = vunpack.c.l.b16 %v868
      %v918 = vunpack.c.l.b16 %v869
      %v919 = vunpack.c.l.b16 %v870
      %v920 = vunpack.c.l.b16 %v871
      %v921 = vpack.c.b16 %v906, %v905
      %v922 = vpack.c.b16 %v908, %v907
      %v923 = vpack.c.b16 %v910, %v909
      %v924 = vpack.c.b16 %v912, %v911
      %v925 = vpack.c.b16 %v914, %v913
      %v926 = vpack.c.b16 %v916, %v915
      %v927 = vpack.c.b16 %v918, %v917
      %v928 = vpack.c.b16 %v920, %v919
      %v953 = vunpack.c.l.b16 %v873
      %v954 = vunpack.c.l.b16 %v874
      %v955 = vunpack.c.l.b16 %v875
      %v956 = vunpack.c.l.b16 %v876
      %v957 = vunpack.c.l.b16 %v877
      %v958 = vunpack.c.l.b16 %v878
      %v959 = vunpack.c.l.b16 %v879
      %v960 = vunpack.c.l.b16 %v880
      %v961 = vunpack.c.l.b16 %v881
      %v962 = vunpack.c.l.b16 %v882
      %v963 = vunpack.c.l.b16 %v883
      %v964 = vunpack.c.l.b16 %v884
      %v965 = vunpack.c.l.b16 %v885
      %v966 = vunpack.c.l.b16 %v886
      %v967 = vunpack.c.l.b16 %v887
      %v968 = vunpack.c.l.b16 %v888
      %v969 = vpack.c.b16 %v954, %v953
      %v970 = vpack.c.b16 %v956, %v955
      %v971 = vpack.c.b16 %v958, %v957
      %v972 = vpack.c.b16 %v960, %v959
      %v973 = vpack.c.b16 %v962, %v961
      %v974 = vpack.c.b16 %v964, %v963
      %v975 = vpack.c.b16 %v966, %v965
      %v976 = vpack.c.b16 %v968, %v967
      %985 = vmatpush.bf16.msra.mxu0 %v976
      %986 = vmatpush.bf16.msra.mxu0 %v975
      %987 = vmatpush.bf16.msra.mxu0 %v974
      %988 = vmatpush.bf16.msra.mxu0 %v973
      %989 = vmatpush.bf16.msra.mxu0 %v972
      %990 = vmatpush.bf16.msra.mxu0 %v971
      %991 = vmatpush.bf16.msra.mxu0 %v970
      %992 = vmatpush.bf16.msra.mxu0 %v969
      %993 = vmatmul.bf16.gmra.mxu0 %v921
      %v994 = vpop.f32.mrf.mxu0
      %v995 = vadd.f32 0.0, %v994
      %v996 = vpop.f32.mrf.mxu0
      %v997 = vadd.f32 0.0, %v996
      %998 = vmatmul.bf16.gmra.mxu0 %v922
      %v999 = vpop.f32.mrf.mxu0
      %v1000 = vadd.f32 0.0, %v999
      %v1001 = vpop.f32.mrf.mxu0
      %v1002 = vadd.f32 0.0, %v1001
      %1003 = vmatmul.bf16.gmra.mxu0 %v923
      %v1004 = vpop.f32.mrf.mxu0
      %v1005 = vadd.f32 0.0, %v1004
      %v1006 = vpop.f32.mrf.mxu0
      %v1007 = vadd.f32 0.0, %v1006
      %1008 = vmatmul.bf16.gmra.mxu0 %v924
      %v1009 = vpop.f32.mrf.mxu0
      %v1010 = vadd.f32 0.0, %v1009
      %v1011 = vpop.f32.mrf.mxu0
      %v1012 = vadd.f32 0.0, %v1011
      %1013 = vmatmul.bf16.gmra.mxu0 %v925
      %v1014 = vpop.f32.mrf.mxu0
      %v1015 = vadd.f32 0.0, %v1014
      %v1016 = vpop.f32.mrf.mxu0
      %v1017 = vadd.f32 0.0, %v1016
      %1018 = vmatmul.bf16.gmra.mxu0 %v926
      %v1019 = vpop.f32.mrf.mxu0
      %v1020 = vadd.f32 0.0, %v1019
      %v1021 = vpop.f32.mrf.mxu0
      %v1022 = vadd.f32 0.0, %v1021
      %1023 = vmatmul.bf16.gmra.mxu0 %v927
      %v1024 = vpop.f32.mrf.mxu0
      %v1025 = vadd.f32 0.0, %v1024
      %v1026 = vpop.f32.mrf.mxu0
      %v1027 = vadd.f32 0.0, %v1026
      %1028 = vmatmul.bf16.gmra.mxu0 %v928
      %v1029 = vpop.f32.mrf.mxu0
      %v1030 = vadd.f32 0.0, %v1029
      %v1031 = vpop.f32.mrf.mxu0
      %v1032 = vadd.f32 0.0, %v1031
      %1033 = vdwg.mxu0
      %v1034 = vld [vmem:[#allocation2] sm:$0xff]
      %v1035 = vld [vmem:[#allocation2 + $0x8] sm:$0xff]
      %v1036 = vld [vmem:[#allocation2 + $0x10] sm:$0xff]
      %v1037 = vld [vmem:[#allocation2 + $0x18] sm:$0xff]
      %v1038 = vld [vmem:[#allocation2 + $0x20] sm:$0xff]
      %v1039 = vld [vmem:[#allocation2 + $0x28] sm:$0xff]
      %v1040 = vld [vmem:[#allocation2 + $0x30] sm:$0xff]
      %v1041 = vld [vmem:[#allocation2 + $0x38] sm:$0xff]
      %v1042 = vld [vmem:[#allocation2 + $0x40] sm:$0xff]
      %v1043 = vld [vmem:[#allocation2 + $0x48] sm:$0xff]
      %v1044 = vld [vmem:[#allocation2 + $0x50] sm:$0xff]
      %v1045 = vld [vmem:[#allocation2 + $0x58] sm:$0xff]
      %v1046 = vld [vmem:[#allocation2 + $0x60] sm:$0xff]
      %v1047 = vld [vmem:[#allocation2 + $0x68] sm:$0xff]
      %v1048 = vld [vmem:[#allocation2 + $0x70] sm:$0xff]
      %v1049 = vld [vmem:[#allocation2 + $0x78] sm:$0xff]
      %v1050 = vadd.f32 %v1034, %v995
      %v1051 = vadd.f32 %v1035, %v997
      %v1052 = vadd.f32 %v1036, %v1000
      %v1053 = vadd.f32 %v1037, %v1002
      %v1054 = vadd.f32 %v1038, %v1005
      %v1055 = vadd.f32 %v1039, %v1007
      %v1056 = vadd.f32 %v1040, %v1010
      %v1057 = vadd.f32 %v1041, %v1012
      %v1058 = vadd.f32 %v1042, %v1015
      %v1059 = vadd.f32 %v1043, %v1017
      %v1060 = vadd.f32 %v1044, %v1020
      %v1061 = vadd.f32 %v1045, %v1022
      %v1062 = vadd.f32 %v1046, %v1025
      %v1063 = vadd.f32 %v1047, %v1027
      %v1064 = vadd.f32 %v1048, %v1030
      %v1065 = vadd.f32 %v1049, %v1032
      %1066 = vst [vmem:[#allocation2] sm:$0xff] %v1050
      %1067 = vst [vmem:[#allocation2 + $0x8] sm:$0xff] %v1051
      %1068 = vst [vmem:[#allocation2 + $0x10] sm:$0xff] %v1052
      %1069 = vst [vmem:[#allocation2 + $0x18] sm:$0xff] %v1053
      %1070 = vst [vmem:[#allocation2 + $0x20] sm:$0xff] %v1054
      %1071 = vst [vmem:[#allocation2 + $0x28] sm:$0xff] %v1055
      %1072 = vst [vmem:[#allocation2 + $0x30] sm:$0xff] %v1056
      %1073 = vst [vmem:[#allocation2 + $0x38] sm:$0xff] %v1057
      %1074 = vst [vmem:[#allocation2 + $0x40] sm:$0xff] %v1058
      %1075 = vst [vmem:[#allocation2 + $0x48] sm:$0xff] %v1059
      %1076 = vst [vmem:[#allocation2 + $0x50] sm:$0xff] %v1060
      %1077 = vst [vmem:[#allocation2 + $0x58] sm:$0xff] %v1061
      %1078 = vst [vmem:[#allocation2 + $0x60] sm:$0xff] %v1062
      %1079 = vst [vmem:[#allocation2 + $0x68] sm:$0xff] %v1063
      %1080 = vst [vmem:[#allocation2 + $0x70] sm:$0xff] %v1064
      %1081 = vst [vmem:[#allocation2 + $0x78] sm:$0xff] %v1065
      %v1082 = vld [vmem:[%s200 + $0x8] sm:$0xf]
      %v1083 = vld [vmem:[%s200 + $0xc] sm:$0xf]
      %v1084 = vld [vmem:[%s200 + $0x10] sm:$0xf]
      %v1085 = vld [vmem:[%s200 + $0x14] sm:$0xf]
      %v1086 = vld [vmem:[%s200 + $0x18] sm:$0xf]
      %v1087 = vld [vmem:[%s200 + $0x1c] sm:$0xf]
      %v1088 = vld [vmem:[%s200 + $0x20] sm:$0xf]
      %v1089 = vld [vmem:[%s200 + $0x24] sm:$0xf]
      %v1090 = vld [vmem:[%s200 + $0x28] sm:$0xf]
      %v1091 = vld [vmem:[%s200 + $0x2c] sm:$0xf]
      %v1092 = vld [vmem:[%s200 + $0x30] sm:$0xf]
      %v1093 = vld [vmem:[%s200 + $0x34] sm:$0xf]
      %v1094 = vld [vmem:[%s200 + $0x38] sm:$0xf]
      %v1095 = vld [vmem:[%s200 + $0x3c] sm:$0xf]
      %v1096 = vld [vmem:[%s200 + $0x40] sm:$0xf]
      %v1097 = vld [vmem:[%s200 + $0x44] sm:$0xf]
      %s1098 = scalar_lea.vmem %s1, 384
      %v1099 = vld [vmem:[%s1098] sm:$0xf]
      %v1100 = vld [vmem:[%s1098 + $0x4] sm:$0xf]
      %v1101 = vld [vmem:[%s1098 + $0x8] sm:$0xf]
      %v1102 = vld [vmem:[%s1098 + $0xc] sm:$0xf]
      %v1103 = vld [vmem:[%s1098 + $0x10] sm:$0xf]
      %v1104 = vld [vmem:[%s1098 + $0x14] sm:$0xf]
      %v1105 = vld [vmem:[%s1098 + $0x18] sm:$0xf]
      %v1106 = vld [vmem:[%s1098 + $0x1c] sm:$0xf]
      %v1107 = vld [vmem:[%s1098 + $0x20] sm:$0xf]
      %v1108 = vld [vmem:[%s1098 + $0x24] sm:$0xf]
      %v1109 = vld [vmem:[%s1098 + $0x28] sm:$0xf]
      %v1110 = vld [vmem:[%s1098 + $0x2c] sm:$0xf]
      %v1111 = vld [vmem:[%s1098 + $0x30] sm:$0xf]
      %v1112 = vld [vmem:[%s1098 + $0x34] sm:$0xf]
      %v1113 = vld [vmem:[%s1098 + $0x38] sm:$0xf]
      %v1114 = vld [vmem:[%s1098 + $0x3c] sm:$0xf]
      %v1131 = vunpack.c.l.b16 %v1082
      %v1132 = vunpack.c.l.b16 %v1083
      %v1133 = vunpack.c.l.b16 %v1084
      %v1134 = vunpack.c.l.b16 %v1085
      %v1135 = vunpack.c.l.b16 %v1086
      %v1136 = vunpack.c.l.b16 %v1087
      %v1137 = vunpack.c.l.b16 %v1088
      %v1138 = vunpack.c.l.b16 %v1089
      %v1139 = vunpack.c.l.b16 %v1090
      %v1140 = vunpack.c.l.b16 %v1091
      %v1141 = vunpack.c.l.b16 %v1092
      %v1142 = vunpack.c.l.b16 %v1093
      %v1143 = vunpack.c.l.b16 %v1094
      %v1144 = vunpack.c.l.b16 %v1095
      %v1145 = vunpack.c.l.b16 %v1096
      %v1146 = vunpack.c.l.b16 %v1097
      %v1147 = vpack.c.b16 %v1132, %v1131
      %v1148 = vpack.c.b16 %v1134, %v1133
      %v1149 = vpack.c.b16 %v1136, %v1135
      %v1150 = vpack.c.b16 %v1138, %v1137
      %v1151 = vpack.c.b16 %v1140, %v1139
      %v1152 = vpack.c.b16 %v1142, %v1141
      %v1153 = vpack.c.b16 %v1144, %v1143
      %v1154 = vpack.c.b16 %v1146, %v1145
      %v1179 = vunpack.c.l.b16 %v1099
      %v1180 = vunpack.c.l.b16 %v1100
      %v1181 = vunpack.c.l.b16 %v1101
      %v1182 = vunpack.c.l.b16 %v1102
      %v1183 = vunpack.c.l.b16 %v1103
      %v1184 = vunpack.c.l.b16 %v1104
      %v1185 = vunpack.c.l.b16 %v1105
      %v1186 = vunpack.c.l.b16 %v1106
      %v1187 = vunpack.c.l.b16 %v1107
      %v1188 = vunpack.c.l.b16 %v1108
      %v1189 = vunpack.c.l.b16 %v1109
      %v1190 = vunpack.c.l.b16 %v1110
      %v1191 = vunpack.c.l.b16 %v1111
      %v1192 = vunpack.c.l.b16 %v1112
      %v1193 = vunpack.c.l.b16 %v1113
      %v1194 = vunpack.c.l.b16 %v1114
      %v1195 = vpack.c.b16 %v1180, %v1179
      %v1196 = vpack.c.b16 %v1182, %v1181
      %v1197 = vpack.c.b16 %v1184, %v1183
      %v1198 = vpack.c.b16 %v1186, %v1185
      %v1199 = vpack.c.b16 %v1188, %v1187
      %v1200 = vpack.c.b16 %v1190, %v1189
      %v1201 = vpack.c.b16 %v1192, %v1191
      %v1202 = vpack.c.b16 %v1194, %v1193
      %1211 = vmatpush.bf16.msra.mxu0 %v1202
      %1212 = vmatpush.bf16.msra.mxu0 %v1201
      %1213 = vmatpush.bf16.msra.mxu0 %v1200
      %1214 = vmatpush.bf16.msra.mxu0 %v1199
      %1215 = vmatpush.bf16.msra.mxu0 %v1198
      %1216 = vmatpush.bf16.msra.mxu0 %v1197
      %1217 = vmatpush.bf16.msra.mxu0 %v1196
      %1218 = vmatpush.bf16.msra.mxu0 %v1195
      %1219 = vmatmul.bf16.gmra.mxu0 %v1147
      %v1220 = vpop.f32.mrf.mxu0
      %v1221 = vadd.f32 0.0, %v1220
      %v1222 = vpop.f32.mrf.mxu0
      %v1223 = vadd.f32 0.0, %v1222
      %1224 = vmatmul.bf16.gmra.mxu0 %v1148
      %v1225 = vpop.f32.mrf.mxu0
      %v1226 = vadd.f32 0.0, %v1225
      %v1227 = vpop.f32.mrf.mxu0
      %v1228 = vadd.f32 0.0, %v1227
      %1229 = vmatmul.bf16.gmra.mxu0 %v1149
      %v1230 = vpop.f32.mrf.mxu0
      %v1231 = vadd.f32 0.0, %v1230
      %v1232 = vpop.f32.mrf.mxu0
      %v1233 = vadd.f32 0.0, %v1232
      %1234 = vmatmul.bf16.gmra.mxu0 %v1150
      %v1235 = vpop.f32.mrf.mxu0
      %v1236 = vadd.f32 0.0, %v1235
      %v1237 = vpop.f32.mrf.mxu0
      %v1238 = vadd.f32 0.0, %v1237
      %1239 = vmatmul.bf16.gmra.mxu0 %v1151
      %v1240 = vpop.f32.mrf.mxu0
      %v1241 = vadd.f32 0.0, %v1240
      %v1242 = vpop.f32.mrf.mxu0
      %v1243 = vadd.f32 0.0, %v1242
      %1244 = vmatmul.bf16.gmra.mxu0 %v1152
      %v1245 = vpop.f32.mrf.mxu0
      %v1246 = vadd.f32 0.0, %v1245
      %v1247 = vpop.f32.mrf.mxu0
      %v1248 = vadd.f32 0.0, %v1247
      %1249 = vmatmul.bf16.gmra.mxu0 %v1153
      %v1250 = vpop.f32.mrf.mxu0
      %v1251 = vadd.f32 0.0, %v1250
      %v1252 = vpop.f32.mrf.mxu0
      %v1253 = vadd.f32 0.0, %v1252
      %1254 = vmatmul.bf16.gmra.mxu0 %v1154
      %v1255 = vpop.f32.mrf.mxu0
      %v1256 = vadd.f32 0.0, %v1255
      %v1257 = vpop.f32.mrf.mxu0
      %v1258 = vadd.f32 0.0, %v1257
      %1259 = vdwg.mxu0
      %v1260 = vld [vmem:[#allocation2] sm:$0xff]
      %v1261 = vld [vmem:[#allocation2 + $0x8] sm:$0xff]
      %v1262 = vld [vmem:[#allocation2 + $0x10] sm:$0xff]
      %v1263 = vld [vmem:[#allocation2 + $0x18] sm:$0xff]
      %v1264 = vld [vmem:[#allocation2 + $0x20] sm:$0xff]
      %v1265 = vld [vmem:[#allocation2 + $0x28] sm:$0xff]
      %v1266 = vld [vmem:[#allocation2 + $0x30] sm:$0xff]
      %v1267 = vld [vmem:[#allocation2 + $0x38] sm:$0xff]
      %v1268 = vld [vmem:[#allocation2 + $0x40] sm:$0xff]
      %v1269 = vld [vmem:[#allocation2 + $0x48] sm:$0xff]
      %v1270 = vld [vmem:[#allocation2 + $0x50] sm:$0xff]
      %v1271 = vld [vmem:[#allocation2 + $0x58] sm:$0xff]
      %v1272 = vld [vmem:[#allocation2 + $0x60] sm:$0xff]
      %v1273 = vld [vmem:[#allocation2 + $0x68] sm:$0xff]
      %v1274 = vld [vmem:[#allocation2 + $0x70] sm:$0xff]
      %v1275 = vld [vmem:[#allocation2 + $0x78] sm:$0xff]
      %v1276 = vadd.f32 %v1260, %v1221
      %v1277 = vadd.f32 %v1261, %v1223
      %v1278 = vadd.f32 %v1262, %v1226
      %v1279 = vadd.f32 %v1263, %v1228
      %v1280 = vadd.f32 %v1264, %v1231
      %v1281 = vadd.f32 %v1265, %v1233
      %v1282 = vadd.f32 %v1266, %v1236
      %v1283 = vadd.f32 %v1267, %v1238
      %v1284 = vadd.f32 %v1268, %v1241
      %v1285 = vadd.f32 %v1269, %v1243
      %v1286 = vadd.f32 %v1270, %v1246
      %v1287 = vadd.f32 %v1271, %v1248
      %v1288 = vadd.f32 %v1272, %v1251
      %v1289 = vadd.f32 %v1273, %v1253
      %v1290 = vadd.f32 %v1274, %v1256
      %v1291 = vadd.f32 %v1275, %v1258
      %1292 = vst [vmem:[#allocation2] sm:$0xff] %v1276
      %1293 = vst [vmem:[#allocation2 + $0x8] sm:$0xff] %v1277
      %1294 = vst [vmem:[#allocation2 + $0x10] sm:$0xff] %v1278
      %1295 = vst [vmem:[#allocation2 + $0x18] sm:$0xff] %v1279
      %1296 = vst [vmem:[#allocation2 + $0x20] sm:$0xff] %v1280
      %1297 = vst [vmem:[#allocation2 + $0x28] sm:$0xff] %v1281
      %1298 = vst [vmem:[#allocation2 + $0x30] sm:$0xff] %v1282
      %1299 = vst [vmem:[#allocation2 + $0x38] sm:$0xff] %v1283
      %1300 = vst [vmem:[#allocation2 + $0x40] sm:$0xff] %v1284
      %1301 = vst [vmem:[#allocation2 + $0x48] sm:$0xff] %v1285
      %1302 = vst [vmem:[#allocation2 + $0x50] sm:$0xff] %v1286
      %1303 = vst [vmem:[#allocation2 + $0x58] sm:$0xff] %v1287
      %1304 = vst [vmem:[#allocation2 + $0x60] sm:$0xff] %v1288
      %1305 = vst [vmem:[#allocation2 + $0x68] sm:$0xff] %v1289
      %1306 = vst [vmem:[#allocation2 + $0x70] sm:$0xff] %v1290
      %1307 = vst [vmem:[#allocation2 + $0x78] sm:$0xff] %v1291
      %v1308 = vld [vmem:[%s200 + $0x50] sm:$0xf]
      %v1309 = vld [vmem:[%s200 + $0x54] sm:$0xf]
      %v1310 = vld [vmem:[%s200 + $0x58] sm:$0xf]
      %v1311 = vld [vmem:[%s200 + $0x5c] sm:$0xf]
      %v1312 = vld [vmem:[%s200 + $0x60] sm:$0xf]
      %v1313 = vld [vmem:[%s200 + $0x64] sm:$0xf]
      %v1314 = vld [vmem:[%s200 + $0x68] sm:$0xf]
      %v1315 = vld [vmem:[%s200 + $0x6c] sm:$0xf]
      %v1316 = vld [vmem:[%s200 + $0x70] sm:$0xf]
      %v1317 = vld [vmem:[%s200 + $0x74] sm:$0xf]
      %v1318 = vld [vmem:[%s200 + $0x78] sm:$0xf]
      %v1319 = vld [vmem:[%s200 + $0x7c] sm:$0xf]
      %v1320 = vld [vmem:[%s200 + $0x80] sm:$0xf]
      %v1321 = vld [vmem:[%s200 + $0x84] sm:$0xf]
      %v1322 = vld [vmem:[%s200 + $0x88] sm:$0xf]
      %v1323 = vld [vmem:[%s200 + $0x8c] sm:$0xf]
      %s1324 = scalar_lea.vmem %s1, 448
      %v1325 = vld [vmem:[%s1324] sm:$0xf]
      %v1326 = vld [vmem:[%s1324 + $0x4] sm:$0xf]
      %v1327 = vld [vmem:[%s1324 + $0x8] sm:$0xf]
      %v1328 = vld [vmem:[%s1324 + $0xc] sm:$0xf]
      %v1329 = vld [vmem:[%s1324 + $0x10] sm:$0xf]
      %v1330 = vld [vmem:[%s1324 + $0x14] sm:$0xf]
      %v1331 = vld [vmem:[%s1324 + $0x18] sm:$0xf]
      %v1332 = vld [vmem:[%s1324 + $0x1c] sm:$0xf]
      %v1333 = vld [vmem:[%s1324 + $0x20] sm:$0xf]
      %v1334 = vld [vmem:[%s1324 + $0x24] sm:$0xf]
      %v1335 = vld [vmem:[%s1324 + $0x28] sm:$0xf]
      %v1336 = vld [vmem:[%s1324 + $0x2c] sm:$0xf]
      %v1337 = vld [vmem:[%s1324 + $0x30] sm:$0xf]
      %v1338 = vld [vmem:[%s1324 + $0x34] sm:$0xf]
      %v1339 = vld [vmem:[%s1324 + $0x38] sm:$0xf]
      %v1340 = vld [vmem:[%s1324 + $0x3c] sm:$0xf]
      %v1357 = vunpack.c.l.b16 %v1308
      %v1358 = vunpack.c.l.b16 %v1309
      %v1359 = vunpack.c.l.b16 %v1310
      %v1360 = vunpack.c.l.b16 %v1311
      %v1361 = vunpack.c.l.b16 %v1312
      %v1362 = vunpack.c.l.b16 %v1313
      %v1363 = vunpack.c.l.b16 %v1314
      %v1364 = vunpack.c.l.b16 %v1315
      %v1365 = vunpack.c.l.b16 %v1316
      %v1366 = vunpack.c.l.b16 %v1317
      %v1367 = vunpack.c.l.b16 %v1318
      %v1368 = vunpack.c.l.b16 %v1319
      %v1369 = vunpack.c.l.b16 %v1320
      %v1370 = vunpack.c.l.b16 %v1321
      %v1371 = vunpack.c.l.b16 %v1322
      %v1372 = vunpack.c.l.b16 %v1323
      %v1373 = vpack.c.b16 %v1358, %v1357
      %v1374 = vpack.c.b16 %v1360, %v1359
      %v1375 = vpack.c.b16 %v1362, %v1361
      %v1376 = vpack.c.b16 %v1364, %v1363
      %v1377 = vpack.c.b16 %v1366, %v1365
      %v1378 = vpack.c.b16 %v1368, %v1367
      %v1379 = vpack.c.b16 %v1370, %v1369
      %v1380 = vpack.c.b16 %v1372, %v1371
      %v1405 = vunpack.c.l.b16 %v1325
      %v1406 = vunpack.c.l.b16 %v1326
      %v1407 = vunpack.c.l.b16 %v1327
      %v1408 = vunpack.c.l.b16 %v1328
      %v1409 = vunpack.c.l.b16 %v1329
      %v1410 = vunpack.c.l.b16 %v1330
      %v1411 = vunpack.c.l.b16 %v1331
      %v1412 = vunpack.c.l.b16 %v1332
      %v1413 = vunpack.c.l.b16 %v1333
      %v1414 = vunpack.c.l.b16 %v1334
      %v1415 = vunpack.c.l.b16 %v1335
      %v1416 = vunpack.c.l.b16 %v1336
      %v1417 = vunpack.c.l.b16 %v1337
      %v1418 = vunpack.c.l.b16 %v1338
      %v1419 = vunpack.c.l.b16 %v1339
      %v1420 = vunpack.c.l.b16 %v1340
      %v1421 = vpack.c.b16 %v1406, %v1405
      %v1422 = vpack.c.b16 %v1408, %v1407
      %v1423 = vpack.c.b16 %v1410, %v1409
      %v1424 = vpack.c.b16 %v1412, %v1411
      %v1425 = vpack.c.b16 %v1414, %v1413
      %v1426 = vpack.c.b16 %v1416, %v1415
      %v1427 = vpack.c.b16 %v1418, %v1417
      %v1428 = vpack.c.b16 %v1420, %v1419
      %1437 = vmatpush.bf16.msra.mxu0 %v1428
      %1438 = vmatpush.bf16.msra.mxu0 %v1427
      %1439 = vmatpush.bf16.msra.mxu0 %v1426
      %1440 = vmatpush.bf16.msra.mxu0 %v1425
      %1441 = vmatpush.bf16.msra.mxu0 %v1424
      %1442 = vmatpush.bf16.msra.mxu0 %v1423
      %1443 = vmatpush.bf16.msra.mxu0 %v1422
      %1444 = vmatpush.bf16.msra.mxu0 %v1421
      %1445 = vmatmul.bf16.gmra.mxu0 %v1373
      %v1446 = vpop.f32.mrf.mxu0
      %v1447 = vadd.f32 0.0, %v1446
      %v1448 = vpop.f32.mrf.mxu0
      %v1449 = vadd.f32 0.0, %v1448
      %1450 = vmatmul.bf16.gmra.mxu0 %v1374
      %v1451 = vpop.f32.mrf.mxu0
      %v1452 = vadd.f32 0.0, %v1451
      %v1453 = vpop.f32.mrf.mxu0
      %v1454 = vadd.f32 0.0, %v1453
      %1455 = vmatmul.bf16.gmra.mxu0 %v1375
      %v1456 = vpop.f32.mrf.mxu0
      %v1457 = vadd.f32 0.0, %v1456
      %v1458 = vpop.f32.mrf.mxu0
      %v1459 = vadd.f32 0.0, %v1458
      %1460 = vmatmul.bf16.gmra.mxu0 %v1376
      %v1461 = vpop.f32.mrf.mxu0
      %v1462 = vadd.f32 0.0, %v1461
      %v1463 = vpop.f32.mrf.mxu0
      %v1464 = vadd.f32 0.0, %v1463
      %1465 = vmatmul.bf16.gmra.mxu0 %v1377
      %v1466 = vpop.f32.mrf.mxu0
      %v1467 = vadd.f32 0.0, %v1466
      %v1468 = vpop.f32.mrf.mxu0
      %v1469 = vadd.f32 0.0, %v1468
      %1470 = vmatmul.bf16.gmra.mxu0 %v1378
      %v1471 = vpop.f32.mrf.mxu0
      %v1472 = vadd.f32 0.0, %v1471
      %v1473 = vpop.f32.mrf.mxu0
      %v1474 = vadd.f32 0.0, %v1473
      %1475 = vmatmul.bf16.gmra.mxu0 %v1379
      %v1476 = vpop.f32.mrf.mxu0
      %v1477 = vadd.f32 0.0, %v1476
      %v1478 = vpop.f32.mrf.mxu0
      %v1479 = vadd.f32 0.0, %v1478
      %1480 = vmatmul.bf16.gmra.mxu0 %v1380
      %v1481 = vpop.f32.mrf.mxu0
      %v1482 = vadd.f32 0.0, %v1481
      %v1483 = vpop.f32.mrf.mxu0
      %v1484 = vadd.f32 0.0, %v1483
      %1485 = vdwg.mxu0
      %v1486 = vld [vmem:[#allocation2] sm:$0xff]
      %v1487 = vld [vmem:[#allocation2 + $0x8] sm:$0xff]
      %v1488 = vld [vmem:[#allocation2 + $0x10] sm:$0xff]
      %v1489 = vld [vmem:[#allocation2 + $0x18] sm:$0xff]
      %v1490 = vld [vmem:[#allocation2 + $0x20] sm:$0xff]
      %v1491 = vld [vmem:[#allocation2 + $0x28] sm:$0xff]
      %v1492 = vld [vmem:[#allocation2 + $0x30] sm:$0xff]
      %v1493 = vld [vmem:[#allocation2 + $0x38] sm:$0xff]
      %v1494 = vld [vmem:[#allocation2 + $0x40] sm:$0xff]
      %v1495 = vld [vmem:[#allocation2 + $0x48] sm:$0xff]
      %v1496 = vld [vmem:[#allocation2 + $0x50] sm:$0xff]
      %v1497 = vld [vmem:[#allocation2 + $0x58] sm:$0xff]
      %v1498 = vld [vmem:[#allocation2 + $0x60] sm:$0xff]
      %v1499 = vld [vmem:[#allocation2 + $0x68] sm:$0xff]
      %v1500 = vld [vmem:[#allocation2 + $0x70] sm:$0xff]
      %v1501 = vld [vmem:[#allocation2 + $0x78] sm:$0xff]
      %v1502 = vadd.f32 %v1486, %v1447
      %v1503 = vadd.f32 %v1487, %v1449
      %v1504 = vadd.f32 %v1488, %v1452
      %v1505 = vadd.f32 %v1489, %v1454
      %v1506 = vadd.f32 %v1490, %v1457
      %v1507 = vadd.f32 %v1491, %v1459
      %v1508 = vadd.f32 %v1492, %v1462
      %v1509 = vadd.f32 %v1493, %v1464
      %v1510 = vadd.f32 %v1494, %v1467
      %v1511 = vadd.f32 %v1495, %v1469
      %v1512 = vadd.f32 %v1496, %v1472
      %v1513 = vadd.f32 %v1497, %v1474
      %v1514 = vadd.f32 %v1498, %v1477
      %v1515 = vadd.f32 %v1499, %v1479
      %v1516 = vadd.f32 %v1500, %v1482
      %v1517 = vadd.f32 %v1501, %v1484
      %1518 = vst [vmem:[#allocation2] sm:$0xff] %v1502
      %1519 = vst [vmem:[#allocation2 + $0x8] sm:$0xff] %v1503
      %1520 = vst [vmem:[#allocation2 + $0x10] sm:$0xff] %v1504
      %1521 = vst [vmem:[#allocation2 + $0x18] sm:$0xff] %v1505
      %1522 = vst [vmem:[#allocation2 + $0x20] sm:$0xff] %v1506
      %1523 = vst [vmem:[#allocation2 + $0x28] sm:$0xff] %v1507
      %1524 = vst [vmem:[#allocation2 + $0x30] sm:$0xff] %v1508
      %1525 = vst [vmem:[#allocation2 + $0x38] sm:$0xff] %v1509
      %1526 = vst [vmem:[#allocation2 + $0x40] sm:$0xff] %v1510
      %1527 = vst [vmem:[#allocation2 + $0x48] sm:$0xff] %v1511
      %1528 = vst [vmem:[#allocation2 + $0x50] sm:$0xff] %v1512
      %1529 = vst [vmem:[#allocation2 + $0x58] sm:$0xff] %v1513
      %1530 = vst [vmem:[#allocation2 + $0x60] sm:$0xff] %v1514
      %1531 = vst [vmem:[#allocation2 + $0x68] sm:$0xff] %v1515
      %1532 = vst [vmem:[#allocation2 + $0x70] sm:$0xff] %v1516
      %1533 = vst [vmem:[#allocation2 + $0x78] sm:$0xff] %v1517
      %v1534 = vld [vmem:[%s200 + $0xd8] sm:$0xf]
      %v1535 = vld [vmem:[%s200 + $0xdc] sm:$0xf]
      %v1536 = vld [vmem:[%s200 + $0xe0] sm:$0xf]
      %v1537 = vld [vmem:[%s200 + $0xe4] sm:$0xf]
      %v1538 = vld [vmem:[%s200 + $0xe8] sm:$0xf]
      %v1539 = vld [vmem:[%s200 + $0xec] sm:$0xf]
      %v1540 = vld [vmem:[%s200 + $0xf0] sm:$0xf]
      %v1541 = vld [vmem:[%s200 + $0xf4] sm:$0xf]
      %v1542 = vld [vmem:[%s200 + $0xf8] sm:$0xf]
      %v1543 = vld [vmem:[%s200 + $0xfc] sm:$0xf]
      %v1544 = vld [vmem:[%s200 + $0x100] sm:$0xf]
      %v1545 = vld [vmem:[%s200 + $0x104] sm:$0xf]
      %v1546 = vld [vmem:[%s200 + $0x108] sm:$0xf]
      %v1547 = vld [vmem:[%s200 + $0x10c] sm:$0xf]
      %v1548 = vld [vmem:[%s200 + $0x110] sm:$0xf]
      %v1549 = vld [vmem:[%s200 + $0x114] sm:$0xf]
      %s1550 = scalar_lea.vmem %s1, 576
      %v1551 = vld [vmem:[%s1550] sm:$0xf]
      %v1552 = vld [vmem:[%s1550 + $0x4] sm:$0xf]
      %v1553 = vld [vmem:[%s1550 + $0x8] sm:$0xf]
      %v1554 = vld [vmem:[%s1550 + $0xc] sm:$0xf]
      %v1555 = vld [vmem:[%s1550 + $0x10] sm:$0xf]
      %v1556 = vld [vmem:[%s1550 + $0x14] sm:$0xf]
      %v1557 = vld [vmem:[%s1550 + $0x18] sm:$0xf]
      %v1558 = vld [vmem:[%s1550 + $0x1c] sm:$0xf]
      %v1559 = vld [vmem:[%s1550 + $0x20] sm:$0xf]
      %v1560 = vld [vmem:[%s1550 + $0x24] sm:$0xf]
      %v1561 = vld [vmem:[%s1550 + $0x28] sm:$0xf]
      %v1562 = vld [vmem:[%s1550 + $0x2c] sm:$0xf]
      %v1563 = vld [vmem:[%s1550 + $0x30] sm:$0xf]
      %v1564 = vld [vmem:[%s1550 + $0x34] sm:$0xf]
      %v1565 = vld [vmem:[%s1550 + $0x38] sm:$0xf]
      %v1566 = vld [vmem:[%s1550 + $0x3c] sm:$0xf]
      %v1567 = vld [vmem:[%s2 + $0x1] sm:$0x1]
      %v1568 = vperm.slane %v1567, 0
      %v1585 = vunpack.c.l.b16 %v1534
      %v1586 = vunpack.c.l.b16 %v1535
      %v1587 = vunpack.c.l.b16 %v1536
      %v1588 = vunpack.c.l.b16 %v1537
      %v1589 = vunpack.c.l.b16 %v1538
      %v1590 = vunpack.c.l.b16 %v1539
      %v1591 = vunpack.c.l.b16 %v1540
      %v1592 = vunpack.c.l.b16 %v1541
      %v1593 = vunpack.c.l.b16 %v1542
      %v1594 = vunpack.c.l.b16 %v1543
      %v1595 = vunpack.c.l.b16 %v1544
      %v1596 = vunpack.c.l.b16 %v1545
      %v1597 = vunpack.c.l.b16 %v1546
      %v1598 = vunpack.c.l.b16 %v1547
      %v1599 = vunpack.c.l.b16 %v1548
      %v1600 = vunpack.c.l.b16 %v1549
      %v1601 = vpack.c.b16 %v1586, %v1585
      %v1602 = vpack.c.b16 %v1588, %v1587
      %v1603 = vpack.c.b16 %v1590, %v1589
      %v1604 = vpack.c.b16 %v1592, %v1591
      %v1605 = vpack.c.b16 %v1594, %v1593
      %v1606 = vpack.c.b16 %v1596, %v1595
      %v1607 = vpack.c.b16 %v1598, %v1597
      %v1608 = vpack.c.b16 %v1600, %v1599
      %v1633 = vunpack.c.l.b16 %v1551
      %v1634 = vunpack.c.l.b16 %v1552
      %v1635 = vunpack.c.l.b16 %v1553
      %v1636 = vunpack.c.l.b16 %v1554
      %v1637 = vunpack.c.l.b16 %v1555
      %v1638 = vunpack.c.l.b16 %v1556
      %v1639 = vunpack.c.l.b16 %v1557
      %v1640 = vunpack.c.l.b16 %v1558
      %v1641 = vunpack.c.l.b16 %v1559
      %v1642 = vunpack.c.l.b16 %v1560
      %v1643 = vunpack.c.l.b16 %v1561
      %v1644 = vunpack.c.l.b16 %v1562
      %v1645 = vunpack.c.l.b16 %v1563
      %v1646 = vunpack.c.l.b16 %v1564
      %v1647 = vunpack.c.l.b16 %v1565
      %v1648 = vunpack.c.l.b16 %v1566
      %v1649 = vpack.c.b16 %v1634, %v1633
      %v1650 = vpack.c.b16 %v1636, %v1635
      %v1651 = vpack.c.b16 %v1638, %v1637
      %v1652 = vpack.c.b16 %v1640, %v1639
      %v1653 = vpack.c.b16 %v1642, %v1641
      %v1654 = vpack.c.b16 %v1644, %v1643
      %v1655 = vpack.c.b16 %v1646, %v1645
      %v1656 = vpack.c.b16 %v1648, %v1647
      %1665 = vmatpush.bf16.msra.mxu0 %v1656
      %1666 = vmatpush.bf16.msra.mxu0 %v1655
      %1667 = vmatpush.bf16.msra.mxu0 %v1654
      %1668 = vmatpush.bf16.msra.mxu0 %v1653
      %1669 = vmatpush.bf16.msra.mxu0 %v1652
      %1670 = vmatpush.bf16.msra.mxu0 %v1651
      %1671 = vmatpush.bf16.msra.mxu0 %v1650
      %1672 = vmatpush.bf16.msra.mxu0 %v1649
      %1673 = vmatmul.bf16.gmra.mxu0 %v1601
      %v1674 = vpop.f32.mrf.mxu0
      %v1675 = vadd.f32 %v1568, %v1674
      %v1676 = vpop.f32.mrf.mxu0
      %v1677 = vadd.f32 %v1568, %v1676
      %1678 = vmatmul.bf16.gmra.mxu0 %v1602
      %v1679 = vpop.f32.mrf.mxu0
      %v1680 = vadd.f32 %v1568, %v1679
      %v1681 = vpop.f32.mrf.mxu0
      %v1682 = vadd.f32 %v1568, %v1681
      %1683 = vmatmul.bf16.gmra.mxu0 %v1603
      %v1684 = vpop.f32.mrf.mxu0
      %v1685 = vadd.f32 %v1568, %v1684
      %v1686 = vpop.f32.mrf.mxu0
      %v1687 = vadd.f32 %v1568, %v1686
      %1688 = vmatmul.bf16.gmra.mxu0 %v1604
      %v1689 = vpop.f32.mrf.mxu0
      %v1690 = vadd.f32 %v1568, %v1689
      %v1691 = vpop.f32.mrf.mxu0
      %v1692 = vadd.f32 %v1568, %v1691
      %1693 = vmatmul.bf16.gmra.mxu0 %v1605
      %v1694 = vpop.f32.mrf.mxu0
      %v1695 = vadd.f32 %v1568, %v1694
      %v1696 = vpop.f32.mrf.mxu0
      %v1697 = vadd.f32 %v1568, %v1696
      %1698 = vmatmul.bf16.gmra.mxu0 %v1606
      %v1699 = vpop.f32.mrf.mxu0
      %v1700 = vadd.f32 %v1568, %v1699
      %v1701 = vpop.f32.mrf.mxu0
      %v1702 = vadd.f32 %v1568, %v1701
      %1703 = vmatmul.bf16.gmra.mxu0 %v1607
      %v1704 = vpop.f32.mrf.mxu0
      %v1705 = vadd.f32 %v1568, %v1704
      %v1706 = vpop.f32.mrf.mxu0
      %v1707 = vadd.f32 %v1568, %v1706
      %1708 = vmatmul.bf16.gmra.mxu0 %v1608
      %v1709 = vpop.f32.mrf.mxu0
      %v1710 = vadd.f32 %v1568, %v1709
      %v1711 = vpop.f32.mrf.mxu0
      %v1712 = vadd.f32 %v1568, %v1711
      %1713 = vdwg.mxu0
      %v1714 = vpack.c.bf16 %v1675, %v1675
      %v1715 = vpack.c.bf16 %v1677, %v1677
      %v1716 = vpack.c.bf16 %v1680, %v1680
      %v1717 = vpack.c.bf16 %v1682, %v1682
      %v1718 = vpack.c.bf16 %v1685, %v1685
      %v1719 = vpack.c.bf16 %v1687, %v1687
      %v1720 = vpack.c.bf16 %v1690, %v1690
      %v1721 = vpack.c.bf16 %v1692, %v1692
      %v1722 = vpack.c.bf16 %v1695, %v1695
      %v1723 = vpack.c.bf16 %v1697, %v1697
      %v1724 = vpack.c.bf16 %v1700, %v1700
      %v1725 = vpack.c.bf16 %v1702, %v1702
      %v1726 = vpack.c.bf16 %v1705, %v1705
      %v1727 = vpack.c.bf16 %v1707, %v1707
      %v1728 = vpack.c.bf16 %v1710, %v1710
      %v1729 = vpack.c.bf16 %v1712, %v1712
      %1730 = vst [vmem:[%s210] sm:$0xf] %v1714
      %1731 = vst [vmem:[%s210 + $0x4] sm:$0xf] %v1715
      %1732 = vst [vmem:[%s210 + $0x8] sm:$0xf] %v1716
      %1733 = vst [vmem:[%s210 + $0xc] sm:$0xf] %v1717
      %1734 = vst [vmem:[%s210 + $0x10] sm:$0xf] %v1718
      %1735 = vst [vmem:[%s210 + $0x14] sm:$0xf] %v1719
      %1736 = vst [vmem:[%s210 + $0x18] sm:$0xf] %v1720
      %1737 = vst [vmem:[%s210 + $0x1c] sm:$0xf] %v1721
      %1738 = vst [vmem:[%s210 + $0x20] sm:$0xf] %v1722
      %1739 = vst [vmem:[%s210 + $0x24] sm:$0xf] %v1723
      %1740 = vst [vmem:[%s210 + $0x28] sm:$0xf] %v1724
      %1741 = vst [vmem:[%s210 + $0x2c] sm:$0xf] %v1725
      %1742 = vst [vmem:[%s210 + $0x30] sm:$0xf] %v1726
      %1743 = vst [vmem:[%s210 + $0x34] sm:$0xf] %v1727
      %1744 = vst [vmem:[%s210 + $0x38] sm:$0xf] %v1728
      %1745 = vst [vmem:[%s210 + $0x3c] sm:$0xf] %v1729
      %v1746 = vld [vmem:[%s200] sm:$0xf]
      %v1747 = vld [vmem:[%s200 + $0x4] sm:$0xf]
      %v1748 = vld [vmem:[%s200 + $0x8] sm:$0xf]
      %v1749 = vld [vmem:[%s200 + $0xc] sm:$0xf]
      %v1750 = vld [vmem:[%s200 + $0x10] sm:$0xf]
      %v1751 = vld [vmem:[%s200 + $0x14] sm:$0xf]
      %v1752 = vld [vmem:[%s200 + $0x18] sm:$0xf]
      %v1753 = vld [vmem:[%s200 + $0x1c] sm:$0xf]
      %v1754 = vld [vmem:[%s200 + $0x20] sm:$0xf]
      %v1755 = vld [vmem:[%s200 + $0x24] sm:$0xf]
      %v1756 = vld [vmem:[%s200 + $0x28] sm:$0xf]
      %v1757 = vld [vmem:[%s200 + $0x2c] sm:$0xf]
      %v1758 = vld [vmem:[%s200 + $0x30] sm:$0xf]
      %v1759 = vld [vmem:[%s200 + $0x34] sm:$0xf]
      %v1760 = vld [vmem:[%s200 + $0x38] sm:$0xf]
      %v1761 = vld [vmem:[%s200 + $0x3c] sm:$0xf]
      %v1762 = vld [vmem:[%s200 + $0x40] sm:$0xf]
      %v1763 = vld [vmem:[%s200 + $0x44] sm:$0xf]
      %v1764 = vld [vmem:[%s200 + $0x48] sm:$0xf]
      %v1765 = vld [vmem:[%s200 + $0x4c] sm:$0xf]
      %v1766 = vld [vmem:[%s200 + $0x50] sm:$0xf]
      %v1767 = vld [vmem:[%s200 + $0x54] sm:$0xf]
      %v1768 = vld [vmem:[%s200 + $0x58] sm:$0xf]
      %v1769 = vld [vmem:[%s200 + $0x5c] sm:$0xf]
      %v1770 = vld [vmem:[%s200 + $0x60] sm:$0xf]
      %v1771 = vld [vmem:[%s200 + $0x64] sm:$0xf]
      %v1772 = vld [vmem:[%s200 + $0x68] sm:$0xf]
      %v1773 = vld [vmem:[%s200 + $0x6c] sm:$0xf]
      %v1774 = vld [vmem:[%s200 + $0x70] sm:$0xf]
      %v1775 = vld [vmem:[%s200 + $0x74] sm:$0xf]
      %v1776 = vld [vmem:[%s200 + $0x78] sm:$0xf]
      %v1777 = vld [vmem:[%s200 + $0x7c] sm:$0xf]
      %v1778 = vld [vmem:[%s200 + $0x80] sm:$0xf]
      %v1779 = vld [vmem:[%s200 + $0x84] sm:$0xf]
      %v1780 = vld [vmem:[%s200 + $0x88] sm:$0xf]
      %v1781 = vld [vmem:[%s200 + $0x8c] sm:$0xf]
      %v1782 = vld [vmem:[%s200 + $0x90] sm:$0xf]
      %v1783 = vld [vmem:[%s200 + $0x94] sm:$0xf]
      %v1784 = vld [vmem:[%s200 + $0x98] sm:$0xf]
      %v1785 = vld [vmem:[%s200 + $0x9c] sm:$0xf]
      %v1786 = vld [vmem:[%s200 + $0xa0] sm:$0xf]
      %v1787 = vld [vmem:[%s200 + $0xa4] sm:$0xf]
      %v1788 = vld [vmem:[%s200 + $0xa8] sm:$0xf]
      %v1789 = vld [vmem:[%s200 + $0xac] sm:$0xf]
      %v1790 = vld [vmem:[%s200 + $0xb0] sm:$0xf]
      %v1791 = vld [vmem:[%s200 + $0xb4] sm:$0xf]
      %v1792 = vld [vmem:[%s200 + $0xb8] sm:$0xf]
      %v1793 = vld [vmem:[%s200 + $0xbc] sm:$0xf]
      %v1794 = vld [vmem:[%s200 + $0xc0] sm:$0xf]
      %v1795 = vld [vmem:[%s200 + $0xc4] sm:$0xf]
      %v1796 = vld [vmem:[%s200 + $0xc8] sm:$0xf]
      %v1797 = vld [vmem:[%s200 + $0xcc] sm:$0xf]
      %v1798 = vld [vmem:[%s200 + $0xd0] sm:$0xf]
      %v1799 = vld [vmem:[%s200 + $0xd4] sm:$0xf]
      %v1800 = vld [vmem:[%s200 + $0xd8] sm:$0xf]
      %v1801 = vld [vmem:[%s200 + $0xdc] sm:$0xf]
      %v1802 = vld [vmem:[%s200 + $0xe0] sm:$0xf]
      %v1803 = vld [vmem:[%s200 + $0xe4] sm:$0xf]
      %v1804 = vld [vmem:[%s200 + $0xe8] sm:$0xf]
      %v1805 = vld [vmem:[%s200 + $0xec] sm:$0xf]
      %v1806 = vld [vmem:[%s200 + $0xf0] sm:$0xf]
      %v1807 = vld [vmem:[%s200 + $0xf4] sm:$0xf]
      %v1808 = vld [vmem:[%s200 + $0xf8] sm:$0xf]
      %v1809 = vld [vmem:[%s200 + $0xfc] sm:$0xf]
      %v1810 = vld [vmem:[%s200 + $0x100] sm:$0xf]
      %v1811 = vld [vmem:[%s200 + $0x104] sm:$0xf]
      %v1812 = vld [vmem:[%s200 + $0x108] sm:$0xf]
      %v1813 = vld [vmem:[%s200 + $0x10c] sm:$0xf]
      %v1814 = vld [vmem:[%s200 + $0x110] sm:$0xf]
      %v1815 = vld [vmem:[%s200 + $0x114] sm:$0xf]
      %v1816 = vld [vmem:[%s200 + $0x118] sm:$0xf]
      %v1817 = vld [vmem:[%s200 + $0x11c] sm:$0xf]
      %v1818 = vld [vmem:[%s200 + $0x120] sm:$0x1]
      %vm1819 = vsmask.f32 3328
      %vm1820 = vsmask.f32 7440
      %vm1821 = vmor %vm1819, %vm1820
      %v1823 = vshrl.u32 %v1746, 16
      %v1825 = vrot.slane %v1823, 4
      %v1826 = vshll.u32 %v1746, 16
      %v1828 = vrot.slane %v1826, 5
      %v1829 = vor.u32 %v1825, %v1828
      %v1830 = vrot.slane %v1829, 4
      %v1832 = vshll.u32 %v1747, 16
      %v1834 = vrot.slane %v1832, 5
      %v1835 = vsel %vm1821, %v1830, %v1834
      %v1836 = vshrl.u32 %v1747, 16
      %v1838 = vrot.slane %v1836, 4
      %v1839 = vor.u32 %v1838, %v1834
      %v1840 = vrot.slane %v1839, 4
      %v1842 = vshll.u32 %v1748, 16
      %v1844 = vrot.slane %v1842, 5
      %v1845 = vsel %vm1821, %v1840, %v1844
      %v1846 = vshrl.u32 %v1748, 16
      %v1848 = vrot.slane %v1846, 4
      %v1849 = vor.u32 %v1848, %v1844
      %v1850 = vrot.slane %v1849, 4
      %v1852 = vshll.u32 %v1749, 16
      %v1854 = vrot.slane %v1852, 5
      %v1855 = vsel %vm1821, %v1850, %v1854
      %v1856 = vshrl.u32 %v1749, 16
      %v1858 = vrot.slane %v1856, 4
      %v1859 = vor.u32 %v1858, %v1854
      %v1860 = vrot.slane %v1859, 4
      %v1862 = vshll.u32 %v1750, 16
      %v1864 = vrot.slane %v1862, 5
      %v1865 = vsel %vm1821, %v1860, %v1864
      %v1866 = vshrl.u32 %v1750, 16
      %v1868 = vrot.slane %v1866, 4
      %v1869 = vor.u32 %v1868, %v1864
      %v1870 = vrot.slane %v1869, 4
      %v1872 = vshll.u32 %v1751, 16
      %v1874 = vrot.slane %v1872, 5
      %v1875 = vsel %vm1821, %v1870, %v1874
      %v1876 = vshrl.u32 %v1751, 16
      %v1878 = vrot.slane %v1876, 4
      %v1879 = vor.u32 %v1878, %v1874
      %v1880 = vrot.slane %v1879, 4
      %v1882 = vshll.u32 %v1752, 16
      %v1884 = vrot.slane %v1882, 5
      %v1885 = vsel %vm1821, %v1880, %v1884
      %v1886 = vshrl.u32 %v1752, 16
      %v1888 = vrot.slane %v1886, 4
      %v1889 = vor.u32 %v1888, %v1884
      %v1890 = vrot.slane %v1889, 4
      %v1892 = vshll.u32 %v1753, 16
      %v1894 = vrot.slane %v1892, 5
      %v1895 = vsel %vm1821, %v1890, %v1894
      %v1896 = vshrl.u32 %v1753, 16
      %v1898 = vrot.slane %v1896, 4
      %v1899 = vor.u32 %v1898, %v1894
      %v1900 = vrot.slane %v1899, 4
      %v1902 = vshll.u32 %v1754, 16
      %v1904 = vrot.slane %v1902, 5
      %v1905 = vsel %vm1821, %v1900, %v1904
      %v1906 = vshrl.u32 %v1754, 16
      %v1908 = vrot.slane %v1906, 4
      %v1909 = vor.u32 %v1908, %v1904
      %v1910 = vrot.slane %v1909, 4
      %v1912 = vshll.u32 %v1755, 16
      %v1914 = vrot.slane %v1912, 5
      %v1915 = vsel %vm1821, %v1910, %v1914
      %v1916 = vshrl.u32 %v1755, 16
      %v1918 = vrot.slane %v1916, 4
      %v1919 = vor.u32 %v1918, %v1914
      %v1920 = vrot.slane %v1919, 4
      %v1922 = vshll.u32 %v1756, 16
      %v1924 = vrot.slane %v1922, 5
      %v1925 = vsel %vm1821, %v1920, %v1924
      %v1926 = vshrl.u32 %v1756, 16
      %v1928 = vrot.slane %v1926, 4
      %v1929 = vor.u32 %v1928, %v1924
      %v1930 = vrot.slane %v1929, 4
      %v1932 = vshll.u32 %v1757, 16
      %v1934 = vrot.slane %v1932, 5
      %v1935 = vsel %vm1821, %v1930, %v1934
      %v1936 = vshrl.u32 %v1757, 16
      %v1938 = vrot.slane %v1936, 4
      %v1939 = vor.u32 %v1938, %v1934
      %v1940 = vrot.slane %v1939, 4
      %v1942 = vshll.u32 %v1758, 16
      %v1944 = vrot.slane %v1942, 5
      %v1945 = vsel %vm1821, %v1940, %v1944
      %v1946 = vshrl.u32 %v1758, 16
      %v1948 = vrot.slane %v1946, 4
      %v1949 = vor.u32 %v1948, %v1944
      %v1950 = vrot.slane %v1949, 4
      %v1952 = vshll.u32 %v1759, 16
      %v1954 = vrot.slane %v1952, 5
      %v1955 = vsel %vm1821, %v1950, %v1954
      %v1956 = vshrl.u32 %v1759, 16
      %v1958 = vrot.slane %v1956, 4
      %v1959 = vor.u32 %v1958, %v1954
      %v1960 = vrot.slane %v1959, 4
      %v1962 = vshll.u32 %v1760, 16
      %v1964 = vrot.slane %v1962, 5
      %v1965 = vsel %vm1821, %v1960, %v1964
      %v1966 = vshrl.u32 %v1760, 16
      %v1968 = vrot.slane %v1966, 4
      %v1969 = vor.u32 %v1968, %v1964
      %v1970 = vrot.slane %v1969, 4
      %v1972 = vshll.u32 %v1761, 16
      %v1974 = vrot.slane %v1972, 5
      %v1975 = vsel %vm1821, %v1970, %v1974
      %v1976 = vshrl.u32 %v1761, 16
      %v1978 = vrot.slane %v1976, 4
      %v1979 = vor.u32 %v1978, %v1974
      %v1980 = vrot.slane %v1979, 4
      %v1982 = vshll.u32 %v1762, 16
      %v1984 = vrot.slane %v1982, 5
      %v1985 = vsel %vm1821, %v1980, %v1984
      %v1986 = vshrl.u32 %v1762, 16
      %v1988 = vrot.slane %v1986, 4
      %v1989 = vor.u32 %v1988, %v1984
      %v1990 = vrot.slane %v1989, 4
      %v1992 = vshll.u32 %v1763, 16
      %v1994 = vrot.slane %v1992, 5
      %v1995 = vsel %vm1821, %v1990, %v1994
      %v1996 = vshrl.u32 %v1763, 16
      %v1998 = vrot.slane %v1996, 4
      %v1999 = vor.u32 %v1998, %v1994
      %v2000 = vrot.slane %v1999, 4
      %v2002 = vshll.u32 %v1764, 16
      %v2004 = vrot.slane %v2002, 5
      %v2005 = vsel %vm1821, %v2000, %v2004
      %v2006 = vshrl.u32 %v1764, 16
      %v2008 = vrot.slane %v2006, 4
      %v2009 = vor.u32 %v2008, %v2004
      %v2010 = vrot.slane %v2009, 4
      %v2012 = vshll.u32 %v1765, 16
      %v2014 = vrot.slane %v2012, 5
      %v2015 = vsel %vm1821, %v2010, %v2014
      %v2016 = vshrl.u32 %v1765, 16
      %v2018 = vrot.slane %v2016, 4
      %v2019 = vor.u32 %v2018, %v2014
      %v2020 = vrot.slane %v2019, 4
      %v2022 = vshll.u32 %v1766, 16
      %v2024 = vrot.slane %v2022, 5
      %v2025 = vsel %vm1821, %v2020, %v2024
      %v2026 = vshrl.u32 %v1766, 16
      %v2028 = vrot.slane %v2026, 4
      %v2029 = vor.u32 %v2028, %v2024
      %v2030 = vrot.slane %v2029, 4
      %v2032 = vshll.u32 %v1767, 16
      %v2034 = vrot.slane %v2032, 5
      %v2035 = vsel %vm1821, %v2030, %v2034
      %v2036 = vshrl.u32 %v1767, 16
      %v2038 = vrot.slane %v2036, 4
      %v2039 = vor.u32 %v2038, %v2034
      %v2040 = vrot.slane %v2039, 4
      %v2042 = vshll.u32 %v1768, 16
      %v2044 = vrot.slane %v2042, 5
      %v2045 = vsel %vm1821, %v2040, %v2044
      %v2046 = vshrl.u32 %v1768, 16
      %v2048 = vrot.slane %v2046, 4
      %v2049 = vor.u32 %v2048, %v2044
      %v2050 = vrot.slane %v2049, 4
      %v2052 = vshll.u32 %v1769, 16
      %v2054 = vrot.slane %v2052, 5
      %v2055 = vsel %vm1821, %v2050, %v2054
      %v2056 = vshrl.u32 %v1769, 16
      %v2058 = vrot.slane %v2056, 4
      %v2059 = vor.u32 %v2058, %v2054
      %v2060 = vrot.slane %v2059, 4
      %v2062 = vshll.u32 %v1770, 16
      %v2064 = vrot.slane %v2062, 5
      %v2065 = vsel %vm1821, %v2060, %v2064
      %v2066 = vshrl.u32 %v1770, 16
      %v2068 = vrot.slane %v2066, 4
      %v2069 = vor.u32 %v2068, %v2064
      %v2070 = vrot.slane %v2069, 4
      %v2072 = vshll.u32 %v1771, 16
      %v2074 = vrot.slane %v2072, 5
      %v2075 = vsel %vm1821, %v2070, %v2074
      %v2076 = vshrl.u32 %v1771, 16
      %v2078 = vrot.slane %v2076, 4
      %v2079 = vor.u32 %v2078, %v2074
      %v2080 = vrot.slane %v2079, 4
      %v2082 = vshll.u32 %v1772, 16
      %v2084 = vrot.slane %v2082, 5
      %v2085 = vsel %vm1821, %v2080, %v2084
      %v2086 = vshrl.u32 %v1772, 16
      %v2088 = vrot.slane %v2086, 4
      %v2089 = vor.u32 %v2088, %v2084
      %v2090 = vrot.slane %v2089, 4
      %v2092 = vshll.u32 %v1773, 16
      %v2094 = vrot.slane %v2092, 5
      %v2095 = vsel %vm1821, %v2090, %v2094
      %v2096 = vshrl.u32 %v1773, 16
      %v2098 = vrot.slane %v2096, 4
      %v2099 = vor.u32 %v2098, %v2094
      %v2100 = vrot.slane %v2099, 4
      %v2102 = vshll.u32 %v1774, 16
      %v2104 = vrot.slane %v2102, 5
      %v2105 = vsel %vm1821, %v2100, %v2104
      %v2106 = vshrl.u32 %v1774, 16
      %v2108 = vrot.slane %v2106, 4
      %v2109 = vor.u32 %v2108, %v2104
      %v2110 = vrot.slane %v2109, 4
      %v2112 = vshll.u32 %v1775, 16
      %v2114 = vrot.slane %v2112, 5
      %v2115 = vsel %vm1821, %v2110, %v2114
      %v2116 = vshrl.u32 %v1775, 16
      %v2118 = vrot.slane %v2116, 4
      %v2119 = vor.u32 %v2118, %v2114
      %v2120 = vrot.slane %v2119, 4
      %v2122 = vshll.u32 %v1776, 16
      %v2124 = vrot.slane %v2122, 5
      %v2125 = vsel %vm1821, %v2120, %v2124
      %v2126 = vshrl.u32 %v1776, 16
      %v2128 = vrot.slane %v2126, 4
      %v2129 = vor.u32 %v2128, %v2124
      %v2130 = vrot.slane %v2129, 4
      %v2132 = vshll.u32 %v1777, 16
      %v2134 = vrot.slane %v2132, 5
      %v2135 = vsel %vm1821, %v2130, %v2134
      %v2136 = vshrl.u32 %v1777, 16
      %v2138 = vrot.slane %v2136, 4
      %v2139 = vor.u32 %v2138, %v2134
      %v2140 = vrot.slane %v2139, 4
      %v2142 = vshll.u32 %v1778, 16
      %v2144 = vrot.slane %v2142, 5
      %v2145 = vsel %vm1821, %v2140, %v2144
      %v2146 = vshrl.u32 %v1778, 16
      %v2148 = vrot.slane %v2146, 4
      %v2149 = vor.u32 %v2148, %v2144
      %v2150 = vrot.slane %v2149, 4
      %v2152 = vshll.u32 %v1779, 16
      %v2154 = vrot.slane %v2152, 5
      %v2155 = vsel %vm1821, %v2150, %v2154
      %v2156 = vshrl.u32 %v1779, 16
      %v2158 = vrot.slane %v2156, 4
      %v2159 = vor.u32 %v2158, %v2154
      %v2160 = vrot.slane %v2159, 4
      %v2162 = vshll.u32 %v1780, 16
      %v2164 = vrot.slane %v2162, 5
      %v2165 = vsel %vm1821, %v2160, %v2164
      %v2166 = vshrl.u32 %v1780, 16
      %v2168 = vrot.slane %v2166, 4
      %v2169 = vor.u32 %v2168, %v2164
      %v2170 = vrot.slane %v2169, 4
      %v2172 = vshll.u32 %v1781, 16
      %v2174 = vrot.slane %v2172, 5
      %v2175 = vsel %vm1821, %v2170, %v2174
      %v2176 = vshrl.u32 %v1781, 16
      %v2178 = vrot.slane %v2176, 4
      %v2179 = vor.u32 %v2178, %v2174
      %v2180 = vrot.slane %v2179, 4
      %v2182 = vshll.u32 %v1782, 16
      %v2184 = vrot.slane %v2182, 5
      %v2185 = vsel %vm1821, %v2180, %v2184
      %v2186 = vshrl.u32 %v1782, 16
      %v2188 = vrot.slane %v2186, 4
      %v2189 = vor.u32 %v2188, %v2184
      %v2190 = vrot.slane %v2189, 4
      %v2192 = vshll.u32 %v1783, 16
      %v2194 = vrot.slane %v2192, 5
      %v2195 = vsel %vm1821, %v2190, %v2194
      %v2196 = vshrl.u32 %v1783, 16
      %v2198 = vrot.slane %v2196, 4
      %v2199 = vor.u32 %v2198, %v2194
      %v2200 = vrot.slane %v2199, 4
      %v2202 = vshll.u32 %v1784, 16
      %v2204 = vrot.slane %v2202, 5
      %v2205 = vsel %vm1821, %v2200, %v2204
      %v2206 = vshrl.u32 %v1784, 16
      %v2208 = vrot.slane %v2206, 4
      %v2209 = vor.u32 %v2208, %v2204
      %v2210 = vrot.slane %v2209, 4
      %v2212 = vshll.u32 %v1785, 16
      %v2214 = vrot.slane %v2212, 5
      %v2215 = vsel %vm1821, %v2210, %v2214
      %v2216 = vshrl.u32 %v1785, 16
      %v2218 = vrot.slane %v2216, 4
      %v2219 = vor.u32 %v2218, %v2214
      %v2220 = vrot.slane %v2219, 4
      %v2222 = vshll.u32 %v1786, 16
      %v2224 = vrot.slane %v2222, 5
      %v2225 = vsel %vm1821, %v2220, %v2224
      %v2226 = vshrl.u32 %v1786, 16
      %v2228 = vrot.slane %v2226, 4
      %v2229 = vor.u32 %v2228, %v2224
      %v2230 = vrot.slane %v2229, 4
      %v2232 = vshll.u32 %v1787, 16
      %v2234 = vrot.slane %v2232, 5
      %v2235 = vsel %vm1821, %v2230, %v2234
      %v2236 = vshrl.u32 %v1787, 16
      %v2238 = vrot.slane %v2236, 4
      %v2239 = vor.u32 %v2238, %v2234
      %v2240 = vrot.slane %v2239, 4
      %v2242 = vshll.u32 %v1788, 16
      %v2244 = vrot.slane %v2242, 5
      %v2245 = vsel %vm1821, %v2240, %v2244
      %v2246 = vshrl.u32 %v1788, 16
      %v2248 = vrot.slane %v2246, 4
      %v2249 = vor.u32 %v2248, %v2244
      %v2250 = vrot.slane %v2249, 4
      %v2252 = vshll.u32 %v1789, 16
      %v2254 = vrot.slane %v2252, 5
      %v2255 = vsel %vm1821, %v2250, %v2254
      %v2256 = vshrl.u32 %v1789, 16
      %v2258 = vrot.slane %v2256, 4
      %v2259 = vor.u32 %v2258, %v2254
      %v2260 = vrot.slane %v2259, 4
      %v2262 = vshll.u32 %v1790, 16
      %v2264 = vrot.slane %v2262, 5
      %v2265 = vsel %vm1821, %v2260, %v2264
      %v2266 = vshrl.u32 %v1790, 16
      %v2268 = vrot.slane %v2266, 4
      %v2269 = vor.u32 %v2268, %v2264
      %v2270 = vrot.slane %v2269, 4
      %v2272 = vshll.u32 %v1791, 16
      %v2274 = vrot.slane %v2272, 5
      %v2275 = vsel %vm1821, %v2270, %v2274
      %v2276 = vshrl.u32 %v1791, 16
      %v2278 = vrot.slane %v2276, 4
      %v2279 = vor.u32 %v2278, %v2274
      %v2280 = vrot.slane %v2279, 4
      %v2282 = vshll.u32 %v1792, 16
      %v2284 = vrot.slane %v2282, 5
      %v2285 = vsel %vm1821, %v2280, %v2284
      %v2286 = vshrl.u32 %v1792, 16
      %v2288 = vrot.slane %v2286, 4
      %v2289 = vor.u32 %v2288, %v2284
      %v2290 = vrot.slane %v2289, 4
      %v2292 = vshll.u32 %v1793, 16
      %v2294 = vrot.slane %v2292, 5
      %v2295 = vsel %vm1821, %v2290, %v2294
      %v2296 = vshrl.u32 %v1793, 16
      %v2298 = vrot.slane %v2296, 4
      %v2299 = vor.u32 %v2298, %v2294
      %v2300 = vrot.slane %v2299, 4
      %v2302 = vshll.u32 %v1794, 16
      %v2304 = vrot.slane %v2302, 5
      %v2305 = vsel %vm1821, %v2300, %v2304
      %v2306 = vshrl.u32 %v1794, 16
      %v2308 = vrot.slane %v2306, 4
      %v2309 = vor.u32 %v2308, %v2304
      %v2310 = vrot.slane %v2309, 4
      %v2312 = vshll.u32 %v1795, 16
      %v2314 = vrot.slane %v2312, 5
      %v2315 = vsel %vm1821, %v2310, %v2314
      %v2316 = vshrl.u32 %v1795, 16
      %v2318 = vrot.slane %v2316, 4
      %v2319 = vor.u32 %v2318, %v2314
      %v2320 = vrot.slane %v2319, 4
      %v2322 = vshll.u32 %v1796, 16
      %v2324 = vrot.slane %v2322, 5
      %v2325 = vsel %vm1821, %v2320, %v2324
      %v2326 = vshrl.u32 %v1796, 16
      %v2328 = vrot.slane %v2326, 4
      %v2329 = vor.u32 %v2328, %v2324
      %v2330 = vrot.slane %v2329, 4
      %v2332 = vshll.u32 %v1797, 16
      %v2334 = vrot.slane %v2332, 5
      %v2335 = vsel %vm1821, %v2330, %v2334
      %v2336 = vshrl.u32 %v1797, 16
      %v2338 = vrot.slane %v2336, 4
      %v2339 = vor.u32 %v2338, %v2334
      %v2340 = vrot.slane %v2339, 4
      %v2342 = vshll.u32 %v1798, 16
      %v2344 = vrot.slane %v2342, 5
      %v2345 = vsel %vm1821, %v2340, %v2344
      %v2346 = vshrl.u32 %v1798, 16
      %v2348 = vrot.slane %v2346, 4
      %v2349 = vor.u32 %v2348, %v2344
      %v2350 = vrot.slane %v2349, 4
      %v2352 = vshll.u32 %v1799, 16
      %v2354 = vrot.slane %v2352, 5
      %v2355 = vsel %vm1821, %v2350, %v2354
      %v2356 = vshrl.u32 %v1799, 16
      %v2358 = vrot.slane %v2356, 4
      %v2359 = vor.u32 %v2358, %v2354
      %v2360 = vrot.slane %v2359, 4
      %v2362 = vshll.u32 %v1800, 16
      %v2364 = vrot.slane %v2362, 5
      %v2365 = vsel %vm1821, %v2360, %v2364
      %v2366 = vshrl.u32 %v1800, 16
      %v2368 = vrot.slane %v2366, 4
      %v2369 = vor.u32 %v2368, %v2364
      %v2370 = vrot.slane %v2369, 4
      %v2372 = vshll.u32 %v1801, 16
      %v2374 = vrot.slane %v2372, 5
      %v2375 = vsel %vm1821, %v2370, %v2374
      %v2376 = vshrl.u32 %v1801, 16
      %v2378 = vrot.slane %v2376, 4
      %v2379 = vor.u32 %v2378, %v2374
      %v2380 = vrot.slane %v2379, 4
      %v2382 = vshll.u32 %v1802, 16
      %v2384 = vrot.slane %v2382, 5
      %v2385 = vsel %vm1821, %v2380, %v2384
      %v2386 = vshrl.u32 %v1802, 16
      %v2388 = vrot.slane %v2386, 4
      %v2389 = vor.u32 %v2388, %v2384
      %v2390 = vrot.slane %v2389, 4
      %v2392 = vshll.u32 %v1803, 16
      %v2394 = vrot.slane %v2392, 5
      %v2395 = vsel %vm1821, %v2390, %v2394
      %v2396 = vshrl.u32 %v1803, 16
      %v2398 = vrot.slane %v2396, 4
      %v2399 = vor.u32 %v2398, %v2394
      %v2400 = vrot.slane %v2399, 4
      %v2402 = vshll.u32 %v1804, 16
      %v2404 = vrot.slane %v2402, 5
      %v2405 = vsel %vm1821, %v2400, %v2404
      %v2406 = vshrl.u32 %v1804, 16
      %v2408 = vrot.slane %v2406, 4
      %v2409 = vor.u32 %v2408, %v2404
      %v2410 = vrot.slane %v2409, 4
      %v2412 = vshll.u32 %v1805, 16
      %v2414 = vrot.slane %v2412, 5
      %v2415 = vsel %vm1821, %v2410, %v2414
      %v2416 = vshrl.u32 %v1805, 16
      %v2418 = vrot.slane %v2416, 4
      %v2419 = vor.u32 %v2418, %v2414
      %v2420 = vrot.slane %v2419, 4
      %v2422 = vshll.u32 %v1806, 16
      %v2424 = vrot.slane %v2422, 5
      %v2425 = vsel %vm1821, %v2420, %v2424
      %v2426 = vshrl.u32 %v1806, 16
      %v2428 = vrot.slane %v2426, 4
      %v2429 = vor.u32 %v2428, %v2424
      %v2430 = vrot.slane %v2429, 4
      %v2432 = vshll.u32 %v1807, 16
      %v2434 = vrot.slane %v2432, 5
      %v2435 = vsel %vm1821, %v2430, %v2434
      %v2436 = vshrl.u32 %v1807, 16
      %v2438 = vrot.slane %v2436, 4
      %v2439 = vor.u32 %v2438, %v2434
      %v2440 = vrot.slane %v2439, 4
      %v2442 = vshll.u32 %v1808, 16
      %v2444 = vrot.slane %v2442, 5
      %v2445 = vsel %vm1821, %v2440, %v2444
      %v2446 = vshrl.u32 %v1808, 16
      %v2448 = vrot.slane %v2446, 4
      %v2449 = vor.u32 %v2448, %v2444
      %v2450 = vrot.slane %v2449, 4
      %v2452 = vshll.u32 %v1809, 16
      %v2454 = vrot.slane %v2452, 5
      %v2455 = vsel %vm1821, %v2450, %v2454
      %v2456 = vshrl.u32 %v1809, 16
      %v2458 = vrot.slane %v2456, 4
      %v2459 = vor.u32 %v2458, %v2454
      %v2460 = vrot.slane %v2459, 4
      %v2462 = vshll.u32 %v1810, 16
      %v2464 = vrot.slane %v2462, 5
      %v2465 = vsel %vm1821, %v2460, %v2464
      %v2466 = vshrl.u32 %v1810, 16
      %v2468 = vrot.slane %v2466, 4
      %v2469 = vor.u32 %v2468, %v2464
      %v2470 = vrot.slane %v2469, 4
      %v2472 = vshll.u32 %v1811, 16
      %v2474 = vrot.slane %v2472, 5
      %v2475 = vsel %vm1821, %v2470, %v2474
      %v2476 = vshrl.u32 %v1811, 16
      %v2478 = vrot.slane %v2476, 4
      %v2479 = vor.u32 %v2478, %v2474
      %v2480 = vrot.slane %v2479, 4
      %v2482 = vshll.u32 %v1812, 16
      %v2484 = vrot.slane %v2482, 5
      %v2485 = vsel %vm1821, %v2480, %v2484
      %v2486 = vshrl.u32 %v1812, 16
      %v2488 = vrot.slane %v2486, 4
      %v2489 = vor.u32 %v2488, %v2484
      %v2490 = vrot.slane %v2489, 4
      %v2492 = vshll.u32 %v1813, 16
      %v2494 = vrot.slane %v2492, 5
      %v2495 = vsel %vm1821, %v2490, %v2494
      %v2496 = vshrl.u32 %v1813, 16
      %v2498 = vrot.slane %v2496, 4
      %v2499 = vor.u32 %v2498, %v2494
      %v2500 = vrot.slane %v2499, 4
      %v2502 = vshll.u32 %v1814, 16
      %v2504 = vrot.slane %v2502, 5
      %v2505 = vsel %vm1821, %v2500, %v2504
      %v2506 = vshrl.u32 %v1814, 16
      %v2508 = vrot.slane %v2506, 4
      %v2509 = vor.u32 %v2508, %v2504
      %v2510 = vrot.slane %v2509, 4
      %v2512 = vshll.u32 %v1815, 16
      %v2514 = vrot.slane %v2512, 5
      %v2515 = vsel %vm1821, %v2510, %v2514
      %v2516 = vshrl.u32 %v1815, 16
      %v2518 = vrot.slane %v2516, 4
      %v2519 = vor.u32 %v2518, %v2514
      %v2520 = vrot.slane %v2519, 4
      %v2522 = vshll.u32 %v1816, 16
      %v2524 = vrot.slane %v2522, 5
      %v2525 = vsel %vm1821, %v2520, %v2524
      %v2526 = vshrl.u32 %v1816, 16
      %v2528 = vrot.slane %v2526, 4
      %v2529 = vor.u32 %v2528, %v2524
      %v2530 = vrot.slane %v2529, 4
      %v2532 = vshll.u32 %v1817, 16
      %v2534 = vrot.slane %v2532, 5
      %v2535 = vsel %vm1821, %v2530, %v2534
      %v2536 = vshrl.u32 %v1817, 16
      %v2538 = vrot.slane %v2536, 4
      %v2539 = vor.u32 %v2538, %v2534
      %v2540 = vrot.slane %v2539, 4
      %v2542 = vshll.u32 %v1818, 16
      %v2544 = vrot.slane %v2542, 5
      %v2545 = vsel %vm1821, %v2540, %v2544
      %2618 = vst [vmem:[#allocation3] sm:$0xf] %v1835
      %2619 = vst [vmem:[#allocation3 + $0x4] sm:$0xf] %v1845
      %2620 = vst [vmem:[#allocation3 + $0x8] sm:$0xf] %v1855
      %2621 = vst [vmem:[#allocation3 + $0xc] sm:$0xf] %v1865
      %2622 = vst [vmem:[#allocation3 + $0x10] sm:$0xf] %v1875
      %2623 = vst [vmem:[#allocation3 + $0x14] sm:$0xf] %v1885
      %2624 = vst [vmem:[#allocation3 + $0x18] sm:$0xf] %v1895
      %2625 = vst [vmem:[#allocation3 + $0x1c] sm:$0xf] %v1905
      %2626 = vst [vmem:[#allocation3 + $0x20] sm:$0xf] %v1915
      %2627 = vst [vmem:[#allocation3 + $0x24] sm:$0xf] %v1925
      %2628 = vst [vmem:[#allocation3 + $0x28] sm:$0xf] %v1935
      %2629 = vst [vmem:[#allocation3 + $0x2c] sm:$0xf] %v1945
      %2630 = vst [vmem:[#allocation3 + $0x30] sm:$0xf] %v1955
      %2631 = vst [vmem:[#allocation3 + $0x34] sm:$0xf] %v1965
      %2632 = vst [vmem:[#allocation3 + $0x38] sm:$0xf] %v1975
      %2633 = vst [vmem:[#allocation3 + $0x3c] sm:$0xf] %v1985
      %2634 = vst [vmem:[#allocation3 + $0x40] sm:$0xf] %v1995
      %2635 = vst [vmem:[#allocation3 + $0x44] sm:$0xf] %v2005
      %2636 = vst [vmem:[#allocation3 + $0x48] sm:$0xf] %v2015
      %2637 = vst [vmem:[#allocation3 + $0x4c] sm:$0xf] %v2025
      %2638 = vst [vmem:[#allocation3 + $0x50] sm:$0xf] %v2035
      %2639 = vst [vmem:[#allocation3 + $0x54] sm:$0xf] %v2045
      %2640 = vst [vmem:[#allocation3 + $0x58] sm:$0xf] %v2055
      %2641 = vst [vmem:[#allocation3 + $0x5c] sm:$0xf] %v2065
      %2642 = vst [vmem:[#allocation3 + $0x60] sm:$0xf] %v2075
      %2643 = vst [vmem:[#allocation3 + $0x64] sm:$0xf] %v2085
      %2644 = vst [vmem:[#allocation3 + $0x68] sm:$0xf] %v2095
      %2645 = vst [vmem:[#allocation3 + $0x6c] sm:$0xf] %v2105
      %2646 = vst [vmem:[#allocation3 + $0x70] sm:$0xf] %v2115
      %2647 = vst [vmem:[#allocation3 + $0x74] sm:$0xf] %v2125
      %2648 = vst [vmem:[#allocation3 + $0x78] sm:$0xf] %v2135
      %2649 = vst [vmem:[#allocation3 + $0x7c] sm:$0xf] %v2145
      %2650 = vst [vmem:[#allocation3 + $0x80] sm:$0xf] %v2155
      %2651 = vst [vmem:[#allocation3 + $0x84] sm:$0xf] %v2165
      %2652 = vst [vmem:[#allocation3 + $0x88] sm:$0xf] %v2175
      %2653 = vst [vmem:[#allocation3 + $0x8c] sm:$0xf] %v2185
      %2654 = vst [vmem:[#allocation3 + $0x90] sm:$0xf] %v2195
      %2655 = vst [vmem:[#allocation3 + $0x94] sm:$0xf] %v2205
      %2656 = vst [vmem:[#allocation3 + $0x98] sm:$0xf] %v2215
      %2657 = vst [vmem:[#allocation3 + $0x9c] sm:$0xf] %v2225
      %2658 = vst [vmem:[#allocation3 + $0xa0] sm:$0xf] %v2235
      %2659 = vst [vmem:[#allocation3 + $0xa4] sm:$0xf] %v2245
      %2660 = vst [vmem:[#allocation3 + $0xa8] sm:$0xf] %v2255
      %2661 = vst [vmem:[#allocation3 + $0xac] sm:$0xf] %v2265
      %2662 = vst [vmem:[#allocation3 + $0xb0] sm:$0xf] %v2275
      %2663 = vst [vmem:[#allocation3 + $0xb4] sm:$0xf] %v2285
      %2664 = vst [vmem:[#allocation3 + $0xb8] sm:$0xf] %v2295
      %2665 = vst [vmem:[#allocation3 + $0xbc] sm:$0xf] %v2305
      %2666 = vst [vmem:[#allocation3 + $0xc0] sm:$0xf] %v2315
      %2667 = vst [vmem:[#allocation3 + $0xc4] sm:$0xf] %v2325
      %2668 = vst [vmem:[#allocation3 + $0xc8] sm:$0xf] %v2335
      %2669 = vst [vmem:[#allocation3 + $0xcc] sm:$0xf] %v2345
      %2670 = vst [vmem:[#allocation3 + $0xd0] sm:$0xf] %v2355
      %2671 = vst [vmem:[#allocation3 + $0xd4] sm:$0xf] %v2365
      %2672 = vst [vmem:[#allocation3 + $0xd8] sm:$0xf] %v2375
      %2673 = vst [vmem:[#allocation3 + $0xdc] sm:$0xf] %v2385
      %2674 = vst [vmem:[#allocation3 + $0xe0] sm:$0xf] %v2395
      %2675 = vst [vmem:[#allocation3 + $0xe4] sm:$0xf] %v2405
      %2676 = vst [vmem:[#allocation3 + $0xe8] sm:$0xf] %v2415
      %2677 = vst [vmem:[#allocation3 + $0xec] sm:$0xf] %v2425
      %2678 = vst [vmem:[#allocation3 + $0xf0] sm:$0xf] %v2435
      %2679 = vst [vmem:[#allocation3 + $0xf4] sm:$0xf] %v2445
      %2680 = vst [vmem:[#allocation3 + $0xf8] sm:$0xf] %v2455
      %2681 = vst [vmem:[#allocation3 + $0xfc] sm:$0xf] %v2465
      %2682 = vst [vmem:[#allocation3 + $0x100] sm:$0xf] %v2475
      %2683 = vst [vmem:[#allocation3 + $0x104] sm:$0xf] %v2485
      %2684 = vst [vmem:[#allocation3 + $0x108] sm:$0xf] %v2495
      %2685 = vst [vmem:[#allocation3 + $0x10c] sm:$0xf] %v2505
      %2686 = vst [vmem:[#allocation3 + $0x110] sm:$0xf] %v2515
      %2687 = vst [vmem:[#allocation3 + $0x114] sm:$0xf] %v2525
      %2688 = vst [vmem:[#allocation3 + $0x118] sm:$0xf] %v2535
      %2689 = vst [vmem:[#allocation3 + $0x11c] sm:$0xf] %v2545
      %v2690 = vld [vmem:[#allocation3] sm:$0xf]
      %v2691 = vld [vmem:[#allocation3 + $0x4] sm:$0xf]
      %v2692 = vld [vmem:[#allocation3 + $0x8] sm:$0xf]
      %v2693 = vld [vmem:[#allocation3 + $0xc] sm:$0xf]
      %v2694 = vld [vmem:[#allocation3 + $0x10] sm:$0xf]
      %v2695 = vld [vmem:[#allocation3 + $0x14] sm:$0xf]
      %v2696 = vld [vmem:[#allocation3 + $0x18] sm:$0xf]
      %v2697 = vld [vmem:[#allocation3 + $0x1c] sm:$0xf]
      %v2698 = vld [vmem:[#allocation3 + $0x20] sm:$0xf]
      %v2699 = vld [vmem:[#allocation3 + $0x24] sm:$0xf]
      %v2700 = vld [vmem:[#allocation3 + $0x28] sm:$0xf]
      %v2701 = vld [vmem:[#allocation3 + $0x2c] sm:$0xf]
      %v2702 = vld [vmem:[#allocation3 + $0x30] sm:$0xf]
      %v2703 = vld [vmem:[#allocation3 + $0x34] sm:$0xf]
      %v2704 = vld [vmem:[#allocation3 + $0x38] sm:$0xf]
      %v2705 = vld [vmem:[#allocation3 + $0x3c] sm:$0xf]
      %s2706 = scalar_lea.vmem %s1, 128
      %v2707 = vld [vmem:[%s2706] sm:$0xf]
      %v2708 = vld [vmem:[%s2706 + $0x4] sm:$0xf]
      %v2709 = vld [vmem:[%s2706 + $0x8] sm:$0xf]
      %v2710 = vld [vmem:[%s2706 + $0xc] sm:$0xf]
      %v2711 = vld [vmem:[%s2706 + $0x10] sm:$0xf]
      %v2712 = vld [vmem:[%s2706 + $0x14] sm:$0xf]
      %v2713 = vld [vmem:[%s2706 + $0x18] sm:$0xf]
      %v2714 = vld [vmem:[%s2706 + $0x1c] sm:$0xf]
      %v2715 = vld [vmem:[%s2706 + $0x20] sm:$0xf]
      %v2716 = vld [vmem:[%s2706 + $0x24] sm:$0xf]
      %v2717 = vld [vmem:[%s2706 + $0x28] sm:$0xf]
      %v2718 = vld [vmem:[%s2706 + $0x2c] sm:$0xf]
      %v2719 = vld [vmem:[%s2706 + $0x30] sm:$0xf]
      %v2720 = vld [vmem:[%s2706 + $0x34] sm:$0xf]
      %v2721 = vld [vmem:[%s2706 + $0x38] sm:$0xf]
      %v2722 = vld [vmem:[%s2706 + $0x3c] sm:$0xf]
      %v2739 = vunpack.c.l.b16 %v2690
      %v2740 = vunpack.c.l.b16 %v2691
      %v2741 = vunpack.c.l.b16 %v2692
      %v2742 = vunpack.c.l.b16 %v2693
      %v2743 = vunpack.c.l.b16 %v2694
      %v2744 = vunpack.c.l.b16 %v2695
      %v2745 = vunpack.c.l.b16 %v2696
      %v2746 = vunpack.c.l.b16 %v2697
      %v2747 = vunpack.c.l.b16 %v2698
      %v2748 = vunpack.c.l.b16 %v2699
      %v2749 = vunpack.c.l.b16 %v2700
      %v2750 = vunpack.c.l.b16 %v2701
      %v2751 = vunpack.c.l.b16 %v2702
      %v2752 = vunpack.c.l.b16 %v2703
      %v2753 = vunpack.c.l.b16 %v2704
      %v2754 = vunpack.c.l.b16 %v2705
      %v2755 = vpack.c.b16 %v2740, %v2739
      %v2756 = vpack.c.b16 %v2742, %v2741
      %v2757 = vpack.c.b16 %v2744, %v2743
      %v2758 = vpack.c.b16 %v2746, %v2745
      %v2759 = vpack.c.b16 %v2748, %v2747
      %v2760 = vpack.c.b16 %v2750, %v2749
      %v2761 = vpack.c.b16 %v2752, %v2751
      %v2762 = vpack.c.b16 %v2754, %v2753
      %v2787 = vunpack.c.l.b16 %v2707
      %v2788 = vunpack.c.l.b16 %v2708
      %v2789 = vunpack.c.l.b16 %v2709
      %v2790 = vunpack.c.l.b16 %v2710
      %v2791 = vunpack.c.l.b16 %v2711
      %v2792 = vunpack.c.l.b16 %v2712
      %v2793 = vunpack.c.l.b16 %v2713
      %v2794 = vunpack.c.l.b16 %v2714
      %v2795 = vunpack.c.l.b16 %v2715
      %v2796 = vunpack.c.l.b16 %v2716
      %v2797 = vunpack.c.l.b16 %v2717
      %v2798 = vunpack.c.l.b16 %v2718
      %v2799 = vunpack.c.l.b16 %v2719
      %v2800 = vunpack.c.l.b16 %v2720
      %v2801 = vunpack.c.l.b16 %v2721
      %v2802 = vunpack.c.l.b16 %v2722
      %v2803 = vpack.c.b16 %v2788, %v2787
      %v2804 = vpack.c.b16 %v2790, %v2789
      %v2805 = vpack.c.b16 %v2792, %v2791
      %v2806 = vpack.c.b16 %v2794, %v2793
      %v2807 = vpack.c.b16 %v2796, %v2795
      %v2808 = vpack.c.b16 %v2798, %v2797
      %v2809 = vpack.c.b16 %v2800, %v2799
      %v2810 = vpack.c.b16 %v2802, %v2801
      %2819 = vmatpush.bf16.msra.mxu0 %v2810
      %2820 = vmatpush.bf16.msra.mxu0 %v2809
      %2821 = vmatpush.bf16.msra.mxu0 %v2808
      %2822 = vmatpush.bf16.msra.mxu0 %v2807
      %2823 = vmatpush.bf16.msra.mxu0 %v2806
      %2824 = vmatpush.bf16.msra.mxu0 %v2805
      %2825 = vmatpush.bf16.msra.mxu0 %v2804
      %2826 = vmatpush.bf16.msra.mxu0 %v2803
      %2827 = vmatmul.bf16.gmra.mxu0 %v2755
      %v2828 = vpop.f32.mrf.mxu0
      %v2829 = vadd.f32 0.0, %v2828
      %v2830 = vpop.f32.mrf.mxu0
      %v2831 = vadd.f32 0.0, %v2830
      %2832 = vmatmul.bf16.gmra.mxu0 %v2756
      %v2833 = vpop.f32.mrf.mxu0
      %v2834 = vadd.f32 0.0, %v2833
      %v2835 = vpop.f32.mrf.mxu0
      %v2836 = vadd.f32 0.0, %v2835
      %2837 = vmatmul.bf16.gmra.mxu0 %v2757
      %v2838 = vpop.f32.mrf.mxu0
      %v2839 = vadd.f32 0.0, %v2838
      %v2840 = vpop.f32.mrf.mxu0
      %v2841 = vadd.f32 0.0, %v2840
      %2842 = vmatmul.bf16.gmra.mxu0 %v2758
      %v2843 = vpop.f32.mrf.mxu0
      %v2844 = vadd.f32 0.0, %v2843
      %v2845 = vpop.f32.mrf.mxu0
      %v2846 = vadd.f32 0.0, %v2845
      %2847 = vmatmul.bf16.gmra.mxu0 %v2759
      %v2848 = vpop.f32.mrf.mxu0
      %v2849 = vadd.f32 0.0, %v2848
      %v2850 = vpop.f32.mrf.mxu0
      %v2851 = vadd.f32 0.0, %v2850
      %2852 = vmatmul.bf16.gmra.mxu0 %v2760
      %v2853 = vpop.f32.mrf.mxu0
      %v2854 = vadd.f32 0.0, %v2853
      %v2855 = vpop.f32.mrf.mxu0
      %v2856 = vadd.f32 0.0, %v2855
      %2857 = vmatmul.bf16.gmra.mxu0 %v2761
      %v2858 = vpop.f32.mrf.mxu0
      %v2859 = vadd.f32 0.0, %v2858
      %v2860 = vpop.f32.mrf.mxu0
      %v2861 = vadd.f32 0.0, %v2860
      %2862 = vmatmul.bf16.gmra.mxu0 %v2762
      %v2863 = vpop.f32.mrf.mxu0
      %v2864 = vadd.f32 0.0, %v2863
      %v2865 = vpop.f32.mrf.mxu0
      %v2866 = vadd.f32 0.0, %v2865
      %2867 = vdwg.mxu0
      %v2868 = vld [vmem:[#allocation2] sm:$0xff]
      %v2869 = vld [vmem:[#allocation2 + $0x8] sm:$0xff]
      %v2870 = vld [vmem:[#allocation2 + $0x10] sm:$0xff]
      %v2871 = vld [vmem:[#allocation2 + $0x18] sm:$0xff]
      %v2872 = vld [vmem:[#allocation2 + $0x20] sm:$0xff]
      %v2873 = vld [vmem:[#allocation2 + $0x28] sm:$0xff]
      %v2874 = vld [vmem:[#allocation2 + $0x30] sm:$0xff]
      %v2875 = vld [vmem:[#allocation2 + $0x38] sm:$0xff]
      %v2876 = vld [vmem:[#allocation2 + $0x40] sm:$0xff]
      %v2877 = vld [vmem:[#allocation2 + $0x48] sm:$0xff]
      %v2878 = vld [vmem:[#allocation2 + $0x50] sm:$0xff]
      %v2879 = vld [vmem:[#allocation2 + $0x58] sm:$0xff]
      %v2880 = vld [vmem:[#allocation2 + $0x60] sm:$0xff]
      %v2881 = vld [vmem:[#allocation2 + $0x68] sm:$0xff]
      %v2882 = vld [vmem:[#allocation2 + $0x70] sm:$0xff]
      %v2883 = vld [vmem:[#allocation2 + $0x78] sm:$0xff]
      %v2884 = vadd.f32 %v2868, %v2829
      %v2885 = vadd.f32 %v2869, %v2831
      %v2886 = vadd.f32 %v2870, %v2834
      %v2887 = vadd.f32 %v2871, %v2836
      %v2888 = vadd.f32 %v2872, %v2839
      %v2889 = vadd.f32 %v2873, %v2841
      %v2890 = vadd.f32 %v2874, %v2844
      %v2891 = vadd.f32 %v2875, %v2846
      %v2892 = vadd.f32 %v2876, %v2849
      %v2893 = vadd.f32 %v2877, %v2851
      %v2894 = vadd.f32 %v2878, %v2854
      %v2895 = vadd.f32 %v2879, %v2856
      %v2896 = vadd.f32 %v2880, %v2859
      %v2897 = vadd.f32 %v2881, %v2861
      %v2898 = vadd.f32 %v2882, %v2864
      %v2899 = vadd.f32 %v2883, %v2866
      %2900 = vst [vmem:[#allocation2] sm:$0xff] %v2884
      %2901 = vst [vmem:[#allocation2 + $0x8] sm:$0xff] %v2885
      %2902 = vst [vmem:[#allocation2 + $0x10] sm:$0xff] %v2886
      %2903 = vst [vmem:[#allocation2 + $0x18] sm:$0xff] %v2887
      %2904 = vst [vmem:[#allocation2 + $0x20] sm:$0xff] %v2888
      %2905 = vst [vmem:[#allocation2 + $0x28] sm:$0xff] %v2889
      %2906 = vst [vmem:[#allocation2 + $0x30] sm:$0xff] %v2890
      %2907 = vst [vmem:[#allocation2 + $0x38] sm:$0xff] %v2891
      %2908 = vst [vmem:[#allocation2 + $0x40] sm:$0xff] %v2892
      %2909 = vst [vmem:[#allocation2 + $0x48] sm:$0xff] %v2893
      %2910 = vst [vmem:[#allocation2 + $0x50] sm:$0xff] %v2894
      %2911 = vst [vmem:[#allocation2 + $0x58] sm:$0xff] %v2895
      %2912 = vst [vmem:[#allocation2 + $0x60] sm:$0xff] %v2896
      %2913 = vst [vmem:[#allocation2 + $0x68] sm:$0xff] %v2897
      %2914 = vst [vmem:[#allocation2 + $0x70] sm:$0xff] %v2898
      %2915 = vst [vmem:[#allocation2 + $0x78] sm:$0xff] %v2899
      %v2916 = vld [vmem:[#allocation3 + $0x90] sm:$0xf]
      %v2917 = vld [vmem:[#allocation3 + $0x94] sm:$0xf]
      %v2918 = vld [vmem:[#allocation3 + $0x98] sm:$0xf]
      %v2919 = vld [vmem:[#allocation3 + $0x9c] sm:$0xf]
      %v2920 = vld [vmem:[#allocation3 + $0xa0] sm:$0xf]
      %v2921 = vld [vmem:[#allocation3 + $0xa4] sm:$0xf]
      %v2922 = vld [vmem:[#allocation3 + $0xa8] sm:$0xf]
      %v2923 = vld [vmem:[#allocation3 + $0xac] sm:$0xf]
      %v2924 = vld [vmem:[#allocation3 + $0xb0] sm:$0xf]
      %v2925 = vld [vmem:[#allocation3 + $0xb4] sm:$0xf]
      %v2926 = vld [vmem:[#allocation3 + $0xb8] sm:$0xf]
      %v2927 = vld [vmem:[#allocation3 + $0xbc] sm:$0xf]
      %v2928 = vld [vmem:[#allocation3 + $0xc0] sm:$0xf]
      %v2929 = vld [vmem:[#allocation3 + $0xc4] sm:$0xf]
      %v2930 = vld [vmem:[#allocation3 + $0xc8] sm:$0xf]
      %v2931 = vld [vmem:[#allocation3 + $0xcc] sm:$0xf]
      %s2932 = scalar_lea.vmem %s1, 320
      %v2933 = vld [vmem:[%s2932] sm:$0xf]
      %v2934 = vld [vmem:[%s2932 + $0x4] sm:$0xf]
      %v2935 = vld [vmem:[%s2932 + $0x8] sm:$0xf]
      %v2936 = vld [vmem:[%s2932 + $0xc] sm:$0xf]
      %v2937 = vld [vmem:[%s2932 + $0x10] sm:$0xf]
      %v2938 = vld [vmem:[%s2932 + $0x14] sm:$0xf]
      %v2939 = vld [vmem:[%s2932 + $0x18] sm:$0xf]
      %v2940 = vld [vmem:[%s2932 + $0x1c] sm:$0xf]
      %v2941 = vld [vmem:[%s2932 + $0x20] sm:$0xf]
      %v2942 = vld [vmem:[%s2932 + $0x24] sm:$0xf]
      %v2943 = vld [vmem:[%s2932 + $0x28] sm:$0xf]
      %v2944 = vld [vmem:[%s2932 + $0x2c] sm:$0xf]
      %v2945 = vld [vmem:[%s2932 + $0x30] sm:$0xf]
      %v2946 = vld [vmem:[%s2932 + $0x34] sm:$0xf]
      %v2947 = vld [vmem:[%s2932 + $0x38] sm:$0xf]
      %v2948 = vld [vmem:[%s2932 + $0x3c] sm:$0xf]
      %v2965 = vunpack.c.l.b16 %v2916
      %v2966 = vunpack.c.l.b16 %v2917
      %v2967 = vunpack.c.l.b16 %v2918
      %v2968 = vunpack.c.l.b16 %v2919
      %v2969 = vunpack.c.l.b16 %v2920
      %v2970 = vunpack.c.l.b16 %v2921
      %v2971 = vunpack.c.l.b16 %v2922
      %v2972 = vunpack.c.l.b16 %v2923
      %v2973 = vunpack.c.l.b16 %v2924
      %v2974 = vunpack.c.l.b16 %v2925
      %v2975 = vunpack.c.l.b16 %v2926
      %v2976 = vunpack.c.l.b16 %v2927
      %v2977 = vunpack.c.l.b16 %v2928
      %v2978 = vunpack.c.l.b16 %v2929
      %v2979 = vunpack.c.l.b16 %v2930
      %v2980 = vunpack.c.l.b16 %v2931
      %v2981 = vpack.c.b16 %v2966, %v2965
      %v2982 = vpack.c.b16 %v2968, %v2967
      %v2983 = vpack.c.b16 %v2970, %v2969
      %v2984 = vpack.c.b16 %v2972, %v2971
      %v2985 = vpack.c.b16 %v2974, %v2973
      %v2986 = vpack.c.b16 %v2976, %v2975
      %v2987 = vpack.c.b16 %v2978, %v2977
      %v2988 = vpack.c.b16 %v2980, %v2979
      %v3013 = vunpack.c.l.b16 %v2933
      %v3014 = vunpack.c.l.b16 %v2934
      %v3015 = vunpack.c.l.b16 %v2935
      %v3016 = vunpack.c.l.b16 %v2936
      %v3017 = vunpack.c.l.b16 %v2937
      %v3018 = vunpack.c.l.b16 %v2938
      %v3019 = vunpack.c.l.b16 %v2939
      %v3020 = vunpack.c.l.b16 %v2940
      %v3021 = vunpack.c.l.b16 %v2941
      %v3022 = vunpack.c.l.b16 %v2942
      %v3023 = vunpack.c.l.b16 %v2943
      %v3024 = vunpack.c.l.b16 %v2944
      %v3025 = vunpack.c.l.b16 %v2945
      %v3026 = vunpack.c.l.b16 %v2946
      %v3027 = vunpack.c.l.b16 %v2947
      %v3028 = vunpack.c.l.b16 %v2948
      %v3029 = vpack.c.b16 %v3014, %v3013
      %v3030 = vpack.c.b16 %v3016, %v3015
      %v3031 = vpack.c.b16 %v3018, %v3017
      %v3032 = vpack.c.b16 %v3020, %v3019
      %v3033 = vpack.c.b16 %v3022, %v3021
      %v3034 = vpack.c.b16 %v3024, %v3023
      %v3035 = vpack.c.b16 %v3026, %v3025
      %v3036 = vpack.c.b16 %v3028, %v3027
      %3045 = vmatpush.bf16.msra.mxu0 %v3036
      %3046 = vmatpush.bf16.msra.mxu0 %v3035
      %3047 = vmatpush.bf16.msra.mxu0 %v3034
      %3048 = vmatpush.bf16.msra.mxu0 %v3033
      %3049 = vmatpush.bf16.msra.mxu0 %v3032
      %3050 = vmatpush.bf16.msra.mxu0 %v3031
      %3051 = vmatpush.bf16.msra.mxu0 %v3030
      %3052 = vmatpush.bf16.msra.mxu0 %v3029
      %3053 = vmatmul.bf16.gmra.mxu0 %v2981
      %v3054 = vpop.f32.mrf.mxu0
      %v3055 = vadd.f32 0.0, %v3054
      %v3056 = vpop.f32.mrf.mxu0
      %v3057 = vadd.f32 0.0, %v3056
      %3058 = vmatmul.bf16.gmra.mxu0 %v2982
      %v3059 = vpop.f32.mrf.mxu0
      %v3060 = vadd.f32 0.0, %v3059
      %v3061 = vpop.f32.mrf.mxu0
      %v3062 = vadd.f32 0.0, %v3061
      %3063 = vmatmul.bf16.gmra.mxu0 %v2983
      %v3064 = vpop.f32.mrf.mxu0
      %v3065 = vadd.f32 0.0, %v3064
      %v3066 = vpop.f32.mrf.mxu0
      %v3067 = vadd.f32 0.0, %v3066
      %3068 = vmatmul.bf16.gmra.mxu0 %v2984
      %v3069 = vpop.f32.mrf.mxu0
      %v3070 = vadd.f32 0.0, %v3069
      %v3071 = vpop.f32.mrf.mxu0
      %v3072 = vadd.f32 0.0, %v3071
      %3073 = vmatmul.bf16.gmra.mxu0 %v2985
      %v3074 = vpop.f32.mrf.mxu0
      %v3075 = vadd.f32 0.0, %v3074
      %v3076 = vpop.f32.mrf.mxu0
      %v3077 = vadd.f32 0.0, %v3076
      %3078 = vmatmul.bf16.gmra.mxu0 %v2986
      %v3079 = vpop.f32.mrf.mxu0
      %v3080 = vadd.f32 0.0, %v3079
      %v3081 = vpop.f32.mrf.mxu0
      %v3082 = vadd.f32 0.0, %v3081
      %3083 = vmatmul.bf16.gmra.mxu0 %v2987
      %v3084 = vpop.f32.mrf.mxu0
      %v3085 = vadd.f32 0.0, %v3084
      %v3086 = vpop.f32.mrf.mxu0
      %v3087 = vadd.f32 0.0, %v3086
      %3088 = vmatmul.bf16.gmra.mxu0 %v2988
      %v3089 = vpop.f32.mrf.mxu0
      %v3090 = vadd.f32 0.0, %v3089
      %v3091 = vpop.f32.mrf.mxu0
      %v3092 = vadd.f32 0.0, %v3091
      %3093 = vdwg.mxu0
      %v3094 = vld [vmem:[#allocation2] sm:$0xff]
      %v3095 = vld [vmem:[#allocation2 + $0x8] sm:$0xff]
      %v3096 = vld [vmem:[#allocation2 + $0x10] sm:$0xff]
      %v3097 = vld [vmem:[#allocation2 + $0x18] sm:$0xff]
      %v3098 = vld [vmem:[#allocation2 + $0x20] sm:$0xff]
      %v3099 = vld [vmem:[#allocation2 + $0x28] sm:$0xff]
      %v3100 = vld [vmem:[#allocation2 + $0x30] sm:$0xff]
      %v3101 = vld [vmem:[#allocation2 + $0x38] sm:$0xff]
      %v3102 = vld [vmem:[#allocation2 + $0x40] sm:$0xff]
      %v3103 = vld [vmem:[#allocation2 + $0x48] sm:$0xff]
      %v3104 = vld [vmem:[#allocation2 + $0x50] sm:$0xff]
      %v3105 = vld [vmem:[#allocation2 + $0x58] sm:$0xff]
      %v3106 = vld [vmem:[#allocation2 + $0x60] sm:$0xff]
      %v3107 = vld [vmem:[#allocation2 + $0x68] sm:$0xff]
      %v3108 = vld [vmem:[#allocation2 + $0x70] sm:$0xff]
      %v3109 = vld [vmem:[#allocation2 + $0x78] sm:$0xff]
      %v3110 = vadd.f32 %v3094, %v3055
      %v3111 = vadd.f32 %v3095, %v3057
      %v3112 = vadd.f32 %v3096, %v3060
      %v3113 = vadd.f32 %v3097, %v3062
      %v3114 = vadd.f32 %v3098, %v3065
      %v3115 = vadd.f32 %v3099, %v3067
      %v3116 = vadd.f32 %v3100, %v3070
      %v3117 = vadd.f32 %v3101, %v3072
      %v3118 = vadd.f32 %v3102, %v3075
      %v3119 = vadd.f32 %v3103, %v3077
      %v3120 = vadd.f32 %v3104, %v3080
      %v3121 = vadd.f32 %v3105, %v3082
      %v3122 = vadd.f32 %v3106, %v3085
      %v3123 = vadd.f32 %v3107, %v3087
      %v3124 = vadd.f32 %v3108, %v3090
      %v3125 = vadd.f32 %v3109, %v3092
      %3126 = vst [vmem:[#allocation2] sm:$0xff] %v3110
      %3127 = vst [vmem:[#allocation2 + $0x8] sm:$0xff] %v3111
      %3128 = vst [vmem:[#allocation2 + $0x10] sm:$0xff] %v3112
      %3129 = vst [vmem:[#allocation2 + $0x18] sm:$0xff] %v3113
      %3130 = vst [vmem:[#allocation2 + $0x20] sm:$0xff] %v3114
      %3131 = vst [vmem:[#allocation2 + $0x28] sm:$0xff] %v3115
      %3132 = vst [vmem:[#allocation2 + $0x30] sm:$0xff] %v3116
      %3133 = vst [vmem:[#allocation2 + $0x38] sm:$0xff] %v3117
      %3134 = vst [vmem:[#allocation2 + $0x40] sm:$0xff] %v3118
      %3135 = vst [vmem:[#allocation2 + $0x48] sm:$0xff] %v3119
      %3136 = vst [vmem:[#allocation2 + $0x50] sm:$0xff] %v3120
      %3137 = vst [vmem:[#allocation2 + $0x58] sm:$0xff] %v3121
      %3138 = vst [vmem:[#allocation2 + $0x60] sm:$0xff] %v3122
      %3139 = vst [vmem:[#allocation2 + $0x68] sm:$0xff] %v3123
      %3140 = vst [vmem:[#allocation2 + $0x70] sm:$0xff] %v3124
      %3141 = vst [vmem:[#allocation2 + $0x78] sm:$0xff] %v3125
      %v3142 = vld [vmem:[#allocation3 + $0x8] sm:$0xf]
      %v3143 = vld [vmem:[#allocation3 + $0xc] sm:$0xf]
      %v3144 = vld [vmem:[#allocation3 + $0x10] sm:$0xf]
      %v3145 = vld [vmem:[#allocation3 + $0x14] sm:$0xf]
      %v3146 = vld [vmem:[#allocation3 + $0x18] sm:$0xf]
      %v3147 = vld [vmem:[#allocation3 + $0x1c] sm:$0xf]
      %v3148 = vld [vmem:[#allocation3 + $0x20] sm:$0xf]
      %v3149 = vld [vmem:[#allocation3 + $0x24] sm:$0xf]
      %v3150 = vld [vmem:[#allocation3 + $0x28] sm:$0xf]
      %v3151 = vld [vmem:[#allocation3 + $0x2c] sm:$0xf]
      %v3152 = vld [vmem:[#allocation3 + $0x30] sm:$0xf]
      %v3153 = vld [vmem:[#allocation3 + $0x34] sm:$0xf]
      %v3154 = vld [vmem:[#allocation3 + $0x38] sm:$0xf]
      %v3155 = vld [vmem:[#allocation3 + $0x3c] sm:$0xf]
      %v3156 = vld [vmem:[#allocation3 + $0x40] sm:$0xf]
      %v3157 = vld [vmem:[#allocation3 + $0x44] sm:$0xf]
      %s3158 = scalar_lea.vmem %s1, 512
      %v3159 = vld [vmem:[%s3158] sm:$0xf]
      %v3160 = vld [vmem:[%s3158 + $0x4] sm:$0xf]
      %v3161 = vld [vmem:[%s3158 + $0x8] sm:$0xf]
      %v3162 = vld [vmem:[%s3158 + $0xc] sm:$0xf]
      %v3163 = vld [vmem:[%s3158 + $0x10] sm:$0xf]
      %v3164 = vld [vmem:[%s3158 + $0x14] sm:$0xf]
      %v3165 = vld [vmem:[%s3158 + $0x18] sm:$0xf]
      %v3166 = vld [vmem:[%s3158 + $0x1c] sm:$0xf]
      %v3167 = vld [vmem:[%s3158 + $0x20] sm:$0xf]
      %v3168 = vld [vmem:[%s3158 + $0x24] sm:$0xf]
      %v3169 = vld [vmem:[%s3158 + $0x28] sm:$0xf]
      %v3170 = vld [vmem:[%s3158 + $0x2c] sm:$0xf]
      %v3171 = vld [vmem:[%s3158 + $0x30] sm:$0xf]
      %v3172 = vld [vmem:[%s3158 + $0x34] sm:$0xf]
      %v3173 = vld [vmem:[%s3158 + $0x38] sm:$0xf]
      %v3174 = vld [vmem:[%s3158 + $0x3c] sm:$0xf]
      %v3191 = vunpack.c.l.b16 %v3142
      %v3192 = vunpack.c.l.b16 %v3143
      %v3193 = vunpack.c.l.b16 %v3144
      %v3194 = vunpack.c.l.b16 %v3145
      %v3195 = vunpack.c.l.b16 %v3146
      %v3196 = vunpack.c.l.b16 %v3147
      %v3197 = vunpack.c.l.b16 %v3148
      %v3198 = vunpack.c.l.b16 %v3149
      %v3199 = vunpack.c.l.b16 %v3150
      %v3200 = vunpack.c.l.b16 %v3151
      %v3201 = vunpack.c.l.b16 %v3152
      %v3202 = vunpack.c.l.b16 %v3153
      %v3203 = vunpack.c.l.b16 %v3154
      %v3204 = vunpack.c.l.b16 %v3155
      %v3205 = vunpack.c.l.b16 %v3156
      %v3206 = vunpack.c.l.b16 %v3157
      %v3207 = vpack.c.b16 %v3192, %v3191
      %v3208 = vpack.c.b16 %v3194, %v3193
      %v3209 = vpack.c.b16 %v3196, %v3195
      %v3210 = vpack.c.b16 %v3198, %v3197
      %v3211 = vpack.c.b16 %v3200, %v3199
      %v3212 = vpack.c.b16 %v3202, %v3201
      %v3213 = vpack.c.b16 %v3204, %v3203
      %v3214 = vpack.c.b16 %v3206, %v3205
      %v3239 = vunpack.c.l.b16 %v3159
      %v3240 = vunpack.c.l.b16 %v3160
      %v3241 = vunpack.c.l.b16 %v3161
      %v3242 = vunpack.c.l.b16 %v3162
      %v3243 = vunpack.c.l.b16 %v3163
      %v3244 = vunpack.c.l.b16 %v3164
      %v3245 = vunpack.c.l.b16 %v3165
      %v3246 = vunpack.c.l.b16 %v3166
      %v3247 = vunpack.c.l.b16 %v3167
      %v3248 = vunpack.c.l.b16 %v3168
      %v3249 = vunpack.c.l.b16 %v3169
      %v3250 = vunpack.c.l.b16 %v3170
      %v3251 = vunpack.c.l.b16 %v3171
      %v3252 = vunpack.c.l.b16 %v3172
      %v3253 = vunpack.c.l.b16 %v3173
      %v3254 = vunpack.c.l.b16 %v3174
      %v3255 = vpack.c.b16 %v3240, %v3239
      %v3256 = vpack.c.b16 %v3242, %v3241
      %v3257 = vpack.c.b16 %v3244, %v3243
      %v3258 = vpack.c.b16 %v3246, %v3245
      %v3259 = vpack.c.b16 %v3248, %v3247
      %v3260 = vpack.c.b16 %v3250, %v3249
      %v3261 = vpack.c.b16 %v3252, %v3251
      %v3262 = vpack.c.b16 %v3254, %v3253
      %3271 = vmatpush.bf16.msra.mxu0 %v3262
      %3272 = vmatpush.bf16.msra.mxu0 %v3261
      %3273 = vmatpush.bf16.msra.mxu0 %v3260
      %3274 = vmatpush.bf16.msra.mxu0 %v3259
      %3275 = vmatpush.bf16.msra.mxu0 %v3258
      %3276 = vmatpush.bf16.msra.mxu0 %v3257
      %3277 = vmatpush.bf16.msra.mxu0 %v3256
      %3278 = vmatpush.bf16.msra.mxu0 %v3255
      %3279 = vmatmul.bf16.gmra.mxu0 %v3207
      %v3280 = vpop.f32.mrf.mxu0
      %v3281 = vadd.f32 0.0, %v3280
      %v3282 = vpop.f32.mrf.mxu0
      %v3283 = vadd.f32 0.0, %v3282
      %3284 = vmatmul.bf16.gmra.mxu0 %v3208
      %v3285 = vpop.f32.mrf.mxu0
      %v3286 = vadd.f32 0.0, %v3285
      %v3287 = vpop.f32.mrf.mxu0
      %v3288 = vadd.f32 0.0, %v3287
      %3289 = vmatmul.bf16.gmra.mxu0 %v3209
      %v3290 = vpop.f32.mrf.mxu0
      %v3291 = vadd.f32 0.0, %v3290
      %v3292 = vpop.f32.mrf.mxu0
      %v3293 = vadd.f32 0.0, %v3292
      %3294 = vmatmul.bf16.gmra.mxu0 %v3210
      %v3295 = vpop.f32.mrf.mxu0
      %v3296 = vadd.f32 0.0, %v3295
      %v3297 = vpop.f32.mrf.mxu0
      %v3298 = vadd.f32 0.0, %v3297
      %3299 = vmatmul.bf16.gmra.mxu0 %v3211
      %v3300 = vpop.f32.mrf.mxu0
      %v3301 = vadd.f32 0.0, %v3300
      %v3302 = vpop.f32.mrf.mxu0
      %v3303 = vadd.f32 0.0, %v3302
      %3304 = vmatmul.bf16.gmra.mxu0 %v3212
      %v3305 = vpop.f32.mrf.mxu0
      %v3306 = vadd.f32 0.0, %v3305
      %v3307 = vpop.f32.mrf.mxu0
      %v3308 = vadd.f32 0.0, %v3307
      %3309 = vmatmul.bf16.gmra.mxu0 %v3213
      %v3310 = vpop.f32.mrf.mxu0
      %v3311 = vadd.f32 0.0, %v3310
      %v3312 = vpop.f32.mrf.mxu0
      %v3313 = vadd.f32 0.0, %v3312
      %3314 = vmatmul.bf16.gmra.mxu0 %v3214
      %v3315 = vpop.f32.mrf.mxu0
      %v3316 = vadd.f32 0.0, %v3315
      %v3317 = vpop.f32.mrf.mxu0
      %v3318 = vadd.f32 0.0, %v3317
      %3319 = vdwg.mxu0
      %v3320 = vld [vmem:[#allocation2] sm:$0xff]
      %v3321 = vld [vmem:[#allocation2 + $0x8] sm:$0xff]
      %v3322 = vld [vmem:[#allocation2 + $0x10] sm:$0xff]
      %v3323 = vld [vmem:[#allocation2 + $0x18] sm:$0xff]
      %v3324 = vld [vmem:[#allocation2 + $0x20] sm:$0xff]
      %v3325 = vld [vmem:[#allocation2 + $0x28] sm:$0xff]
      %v3326 = vld [vmem:[#allocation2 + $0x30] sm:$0xff]
      %v3327 = vld [vmem:[#allocation2 + $0x38] sm:$0xff]
      %v3328 = vld [vmem:[#allocation2 + $0x40] sm:$0xff]
      %v3329 = vld [vmem:[#allocation2 + $0x48] sm:$0xff]
      %v3330 = vld [vmem:[#allocation2 + $0x50] sm:$0xff]
      %v3331 = vld [vmem:[#allocation2 + $0x58] sm:$0xff]
      %v3332 = vld [vmem:[#allocation2 + $0x60] sm:$0xff]
      %v3333 = vld [vmem:[#allocation2 + $0x68] sm:$0xff]
      %v3334 = vld [vmem:[#allocation2 + $0x70] sm:$0xff]
      %v3335 = vld [vmem:[#allocation2 + $0x78] sm:$0xff]
      %v3336 = vadd.f32 %v3320, %v3281
      %v3337 = vadd.f32 %v3321, %v3283
      %v3338 = vadd.f32 %v3322, %v3286
      %v3339 = vadd.f32 %v3323, %v3288
      %v3340 = vadd.f32 %v3324, %v3291
      %v3341 = vadd.f32 %v3325, %v3293
      %v3342 = vadd.f32 %v3326, %v3296
      %v3343 = vadd.f32 %v3327, %v3298
      %v3344 = vadd.f32 %v3328, %v3301
      %v3345 = vadd.f32 %v3329, %v3303
      %v3346 = vadd.f32 %v3330, %v3306
      %v3347 = vadd.f32 %v3331, %v3308
      %v3348 = vadd.f32 %v3332, %v3311
      %v3349 = vadd.f32 %v3333, %v3313
      %v3350 = vadd.f32 %v3334, %v3316
      %v3351 = vadd.f32 %v3335, %v3318
      %3352 = vst [vmem:[#allocation2] sm:$0xff] %v3336
      %3353 = vst [vmem:[#allocation2 + $0x8] sm:$0xff] %v3337
      %3354 = vst [vmem:[#allocation2 + $0x10] sm:$0xff] %v3338
      %3355 = vst [vmem:[#allocation2 + $0x18] sm:$0xff] %v3339
      %3356 = vst [vmem:[#allocation2 + $0x20] sm:$0xff] %v3340
      %3357 = vst [vmem:[#allocation2 + $0x28] sm:$0xff] %v3341
      %3358 = vst [vmem:[#allocation2 + $0x30] sm:$0xff] %v3342
      %3359 = vst [vmem:[#allocation2 + $0x38] sm:$0xff] %v3343
      %3360 = vst [vmem:[#allocation2 + $0x40] sm:$0xff] %v3344
      %3361 = vst [vmem:[#allocation2 + $0x48] sm:$0xff] %v3345
      %3362 = vst [vmem:[#allocation2 + $0x50] sm:$0xff] %v3346
      %3363 = vst [vmem:[#allocation2 + $0x58] sm:$0xff] %v3347
      %3364 = vst [vmem:[#allocation2 + $0x60] sm:$0xff] %v3348
      %3365 = vst [vmem:[#allocation2 + $0x68] sm:$0xff] %v3349
      %3366 = vst [vmem:[#allocation2 + $0x70] sm:$0xff] %v3350
      %3367 = vst [vmem:[#allocation2 + $0x78] sm:$0xff] %v3351
      %v3368 = vld [vmem:[#allocation2] sm:$0xff]
      %v3369 = vld [vmem:[#allocation2 + $0x8] sm:$0xff]
      %v3370 = vld [vmem:[#allocation2 + $0x10] sm:$0xff]
      %v3371 = vld [vmem:[#allocation2 + $0x18] sm:$0xff]
      %v3372 = vld [vmem:[#allocation2 + $0x20] sm:$0xff]
      %v3373 = vld [vmem:[#allocation2 + $0x28] sm:$0xff]
      %v3374 = vld [vmem:[#allocation2 + $0x30] sm:$0xff]
      %v3375 = vld [vmem:[#allocation2 + $0x38] sm:$0xff]
      %v3376 = vld [vmem:[#allocation2 + $0x40] sm:$0xff]
      %v3377 = vld [vmem:[#allocation2 + $0x48] sm:$0xff]
      %v3378 = vld [vmem:[#allocation2 + $0x50] sm:$0xff]
      %v3379 = vld [vmem:[#allocation2 + $0x58] sm:$0xff]
      %v3380 = vld [vmem:[#allocation2 + $0x60] sm:$0xff]
      %v3381 = vld [vmem:[#allocation2 + $0x68] sm:$0xff]
      %v3382 = vld [vmem:[#allocation2 + $0x70] sm:$0xff]
      %v3383 = vld [vmem:[#allocation2 + $0x78] sm:$0xff]
      %v3384 = vld [vmem:[%s2] sm:$0x1]
      %v3385 = vperm.slane %v3384, 0
      %v3386 = vadd.f32 %v3368, %v3385
      %v3387 = vadd.f32 %v3369, %v3385
      %v3388 = vadd.f32 %v3370, %v3385
      %v3389 = vadd.f32 %v3371, %v3385
      %v3390 = vadd.f32 %v3372, %v3385
      %v3391 = vadd.f32 %v3373, %v3385
      %v3392 = vadd.f32 %v3374, %v3385
      %v3393 = vadd.f32 %v3375, %v3385
      %v3394 = vadd.f32 %v3376, %v3385
      %v3395 = vadd.f32 %v3377, %v3385
      %v3396 = vadd.f32 %v3378, %v3385
      %v3397 = vadd.f32 %v3379, %v3385
      %v3398 = vadd.f32 %v3380, %v3385
      %v3399 = vadd.f32 %v3381, %v3385
      %v3400 = vadd.f32 %v3382, %v3385
      %v3401 = vadd.f32 %v3383, %v3385
      %v3402 = vmax.f32 %v3386, 0.0
      %v3403 = vmax.f32 %v3387, 0.0
      %v3404 = vmax.f32 %v3388, 0.0
      %v3405 = vmax.f32 %v3389, 0.0
      %v3406 = vmax.f32 %v3390, 0.0
      %v3407 = vmax.f32 %v3391, 0.0
      %v3408 = vmax.f32 %v3392, 0.0
      %v3409 = vmax.f32 %v3393, 0.0
      %v3410 = vmax.f32 %v3394, 0.0
      %v3411 = vmax.f32 %v3395, 0.0
      %v3412 = vmax.f32 %v3396, 0.0
      %v3413 = vmax.f32 %v3397, 0.0
      %v3414 = vmax.f32 %v3398, 0.0
      %v3415 = vmax.f32 %v3399, 0.0
      %v3416 = vmax.f32 %v3400, 0.0
      %v3417 = vmax.f32 %v3401, 0.0
      %v3418 = vpack.c.bf16 %v3402, %v3402
      %v3419 = vpack.c.bf16 %v3403, %v3403
      %v3420 = vpack.c.bf16 %v3404, %v3404
      %v3421 = vpack.c.bf16 %v3405, %v3405
      %v3422 = vpack.c.bf16 %v3406, %v3406
      %v3423 = vpack.c.bf16 %v3407, %v3407
      %v3424 = vpack.c.bf16 %v3408, %v3408
      %v3425 = vpack.c.bf16 %v3409, %v3409
      %v3426 = vpack.c.bf16 %v3410, %v3410
      %v3427 = vpack.c.bf16 %v3411, %v3411
      %v3428 = vpack.c.bf16 %v3412, %v3412
      %v3429 = vpack.c.bf16 %v3413, %v3413
      %v3430 = vpack.c.bf16 %v3414, %v3414
      %v3431 = vpack.c.bf16 %v3415, %v3415
      %v3432 = vpack.c.bf16 %v3416, %v3416
      %v3433 = vpack.c.bf16 %v3417, %v3417
      %3434 = vst [vmem:[%s205] sm:$0xf] %v3418
      %3435 = vst [vmem:[%s205 + $0x4] sm:$0xf] %v3419
      %3436 = vst [vmem:[%s205 + $0x8] sm:$0xf] %v3420
      %3437 = vst [vmem:[%s205 + $0xc] sm:$0xf] %v3421
      %3438 = vst [vmem:[%s205 + $0x10] sm:$0xf] %v3422
      %3439 = vst [vmem:[%s205 + $0x14] sm:$0xf] %v3423
      %3440 = vst [vmem:[%s205 + $0x18] sm:$0xf] %v3424
      %3441 = vst [vmem:[%s205 + $0x1c] sm:$0xf] %v3425
      %3442 = vst [vmem:[%s205 + $0x20] sm:$0xf] %v3426
      %3443 = vst [vmem:[%s205 + $0x24] sm:$0xf] %v3427
      %3444 = vst [vmem:[%s205 + $0x28] sm:$0xf] %v3428
      %3445 = vst [vmem:[%s205 + $0x2c] sm:$0xf] %v3429
      %3446 = vst [vmem:[%s205 + $0x30] sm:$0xf] %v3430
      %3447 = vst [vmem:[%s205 + $0x34] sm:$0xf] %v3431
      %3448 = vst [vmem:[%s205 + $0x38] sm:$0xf] %v3432
      %3449 = vst [vmem:[%s205 + $0x3c] sm:$0xf] %v3433
      %p3450 = scmp.lt.s32.totalorder %s16, 1
      %s3451 = scalar_select %p3450, %s16, 1
      %s3452 = smul.addr %s3451, 16
      %s3453 = smul.addr %s3452, 4
      %s3454 = scalar_lea.vmem %s3, %s3453
      %p3455 = scmp.lt.s32.totalorder %s16, 1
      %s3456 = scalar_select %p3455, %s16, 1
      %s3457 = smul.addr %s3456, 16
      %s3458 = smul.addr %s3457, 4
      %s3459 = scalar_lea.vmem %s4, %s3458
      // Predicated region
      $region33: #{_lambda_.2} parent=31 // pred_check
        %p3460 = pneg %p102
      $region34: #{_lambda_.2} parent=31 // pred_check_branch
        %3462 = sbr.rel (%p3460) target = $region36
      $region35: #{_lambda_.2} parent=31 // pred_region
        _
      $region36: #{_lambda_.2} parent=31 // pred_fallthru
        _
      // Predicated region
      $region37: #{_lambda_.2} parent=31 // pred_check
        %p3463 = pneg %p128
      $region38: #{_lambda_.2} parent=31 // pred_check_branch
        %3465 = sbr.rel (%p3463) target = $region40
      $region39: #{_lambda_.2} parent=31 // pred_region
        _
      $region40: #{_lambda_.2} parent=31 // pred_fallthru
        _
    $region32: #{_lambda_.2} parent=5 // pred_fallthru
      _
    %p3466 = scmp.le.s32.totalorder 2, %s11
    // Predicated region
    $region41: #{_lambda_.2} parent=5 // pred_check
      %p3467 = pneg %p3466
    $region42: #{_lambda_.2} parent=5 // pred_check_branch
      %3469 = sbr.rel (%p3467) target = $region44
    $region43: #{_lambda_.2} parent=5 // pred_region
      %s3470 = ssub.s32 %s11, 2
      // Predicated region
      $region45: #{_lambda_.2} parent=43 // pred_check
        %p3471 = pneg %p108
      $region46: #{_lambda_.2} parent=43 // pred_check_branch
        %3473 = sbr.rel (%p3471) target = $region48
      $region47: #{_lambda_.2} parent=43 // pred_region
        %p3474 = scmp.lt.s32.totalorder %s17, 1
        %s3475 = scalar_select %p3474, %s17, 1
        %s3476 = smul.addr %s3475, 16
        %s3477 = smul.addr %s3476, 4
        %s3478 = scalar_lea.vmem %s3, %s3477
      $region48: #{_lambda_.2} parent=43 // pred_fallthru
        _
      // Predicated region
      $region49: #{_lambda_.2} parent=43 // pred_check
        %p3479 = pneg %p134
      $region50: #{_lambda_.2} parent=43 // pred_check_branch
        %3481 = sbr.rel (%p3479) target = $region52
      $region51: #{_lambda_.2} parent=43 // pred_region
        %p3482 = scmp.lt.s32.totalorder %s17, 1
        %s3483 = scalar_select %p3482, %s17, 1
        %s3484 = smul.addr %s3483, 16
        %s3485 = smul.addr %s3484, 4
        %s3486 = scalar_lea.vmem %s4, %s3485
      $region52: #{_lambda_.2} parent=43 // pred_fallthru
        _
    $region44: #{_lambda_.2} parent=5 // pred_fallthru
      _
  $region6: #{_lambda_.2} parent=0 // loop_footer
    %s15 = sadd.s32 1, %s11
  $region7: #{_lambda_.2} parent=0 // loop_footer_branch
    %10 = sbr.rel target = $region3
  $region8: #{_lambda_.2} parent=0 // loop_exit
    _

</llo_original>
